<compile_context>
chip_gen: v7x
topology: tpu7x:2x2x1
jax: 0.10.0
libtpu: 0.0.40
codegen_flags: <defaults>
</compile_context>

<pallas_src>
import functools

import jax
import jax.numpy as jnp
from jax import lax
from jax.experimental import pallas as pl
from jax.experimental.pallas import tpu as pltpu

BN_EPS = 1e-5
_VMEM_LIMIT = 48 * 1024 * 1024  # > 16/32 MiB defaults, < every generation's physical VMEM


def _pick_row_tile(h, w):
    """Rows per conv tile: aim for ~512 rows in the matmul M dim; must divide H."""
    th = max(1, min(h, 512 // max(w, 1)))
    while h % th:
        th -= 1
    return th


# ----------------------------------------------------------------------------
# Conv3x3 (+ optional fused BN+ReLU pre-activation) + BN partial statistics
# ----------------------------------------------------------------------------
def _make_conv3x3_stats_kernel(*, th, h, w, cin, cout, preact):
    """refs: x[, s_pre, t_pre], w9, y, sum, ssq   (preact applies relu(x*s+t) on load)."""

    def kernel(*refs):
        if preact:
            x_ref, s_ref, t_ref, w_ref, y_ref, sum_ref, ssq_ref = refs
        else:
            x_ref, w_ref, y_ref, sum_ref, ssq_ref = refs

        i = pl.program_id(1)
        row0 = pl.multiple_of(i * th, th)
        # Haloed (th+2, w+2, cin) window sliced out of the per-image resident block.
        win = x_ref[0, pl.ds(row0, th + 2), :, :].astype(jnp.float32)

        if preact:
            # Fused BN1 + ReLU of the previous stage's raw conv output.
            act = jnp.maximum(win * s_ref[...] + t_ref[...], 0.0)
            # Re-zero halo / spatial-padding positions so conv2 still sees zero padding.
            g = row0 + lax.broadcasted_iota(jnp.int32, (th + 2, 1, 1), 0)
            rmask = jnp.logical_and(g >= 1, g <= h)
            c = lax.broadcasted_iota(jnp.int32, (1, w + 2, 1), 1)
            cmask = jnp.logical_and(c >= 1, c <= w)
            win = jnp.where(jnp.logical_and(rmask, cmask), act, 0.0)

        # 3x3 conv as 9 shifted matmuls, f32 accumulation on the MXU.
        acc = jnp.zeros((th * w, cout), jnp.float32)
        for ky in range(3):
            for kx in range(3):
                patch = win[ky:ky + th, kx:kx + w, :].reshape(th * w, cin)
                acc = acc + jnp.dot(patch.astype(jnp.bfloat16),
                                    w_ref[ky * 3 + kx],
                                    preferred_element_type=jnp.float32)

        y_ref[...] = acc.reshape(1, th, w, cout).astype(y_ref.dtype)

        @pl.when(i == 0)
        def _():
            sum_ref[...] = jnp.zeros_like(sum_ref)
            ssq_ref[...] = jnp.zeros_like(ssq_ref)

        # Per-image partial BatchNorm statistics (from the f32 accumulator).
        sum_ref[...] += jnp.sum(acc, axis=0, keepdims=True).reshape(1, 1, cout)
        ssq_ref[...] += jnp.sum(acc * acc, axis=0, keepdims=True).reshape(1, 1, cout)

    return kernel


def _conv3x3_bn_stats_pass(xp, w9, s_pre, t_pre, *, h, w, th):
    """xp: (N, H+2, W+2, Cin) bf16 zero-padded input; w9: (9, Cin, Cout) bf16.

    Returns raw conv output (N, H, W, Cout) bf16 and per-image stats (N, 1, Cout) f32.
    """
    n, _, _, cin = xp.shape
    cout = w9.shape[-1]
    n_tiles = h // th
    preact = s_pre is not None

    kernel = _make_conv3x3_stats_kernel(th=th, h=h, w=w, cin=cin, cout=cout,
                                        preact=preact)

    in_specs = [pl.BlockSpec((1, h + 2, w + 2, cin), lambda ni, hi: (ni, 0, 0, 0))]
    args = [xp]
    if preact:
        in_specs += [pl.BlockSpec((1, 1, cin), lambda ni, hi: (0, 0, 0)),
                     pl.BlockSpec((1, 1, cin), lambda ni, hi: (0, 0, 0))]
        args += [s_pre.reshape(1, 1, cin), t_pre.reshape(1, 1, cin)]
    in_specs += [pl.BlockSpec((9, cin, cout), lambda ni, hi: (0, 0, 0))]
    args += [w9]

    flops = 2 * n * h * w * 9 * cin * cout
    bytes_accessed = (n * (h + 2) * (w + 2) * cin * 2 + 9 * cin * cout * 2
                      + n * h * w * cout * 2 + 2 * n * cout * 4)

    y, psum, pssq = pl.pallas_call(
        kernel,
        out_shape=(jax.ShapeDtypeStruct((n, h, w, cout), jnp.bfloat16),
                   jax.ShapeDtypeStruct((n, 1, cout), jnp.float32),
                   jax.ShapeDtypeStruct((n, 1, cout), jnp.float32)),
        grid=(n, n_tiles),
        in_specs=in_specs,
        out_specs=(pl.BlockSpec((1, th, w, cout), lambda ni, hi: (ni, hi, 0, 0)),
                   pl.BlockSpec((1, 1, cout), lambda ni, hi: (ni, 0, 0)),
                   pl.BlockSpec((1, 1, cout), lambda ni, hi: (ni, 0, 0))),
        compiler_params=pltpu.CompilerParams(
            dimension_semantics=("parallel", "arbitrary"),
            vmem_limit_bytes=_VMEM_LIMIT),
        cost_estimate=pl.CostEstimate(flops=flops, transcendentals=0,
                                      bytes_accessed=bytes_accessed),
    )(*args)
    return y, psum, pssq


# ----------------------------------------------------------------------------
# BN fold (tiny, plain JAX) and the final BN + residual + ReLU epilogue
# ----------------------------------------------------------------------------
def _fold_bn(psum, pssq, gamma, beta, m):
    total = jnp.sum(psum, axis=0).reshape(1, -1)       # (1, C) f32
    totsq = jnp.sum(pssq, axis=0).reshape(1, -1)
    mean = total / m
    var = jnp.maximum(totsq / m - mean * mean, 0.0)     # biased batch variance
    s = gamma.reshape(1, -1) * lax.rsqrt(var + BN_EPS)
    t = beta.reshape(1, -1) - mean * s
    return s, t


def _bn_res_relu_kernel(y_ref, s_ref, t_ref, r_ref, o_ref):
    o_ref[...] = jnp.maximum(
        y_ref[...].astype(jnp.float32) * s_ref[...] + t_ref[...]
        + r_ref[...].astype(jnp.float32), 0.0)


def _bn_res_relu_pass(y2, s2, t2, identity):
    n, h, w, c = y2.shape
    return pl.pallas_call(
        _bn_res_relu_kernel,
        out_shape=jax.ShapeDtypeStruct((n, h, w, c), jnp.float32),
        grid=(n,),
        in_specs=[pl.BlockSpec((1, h, w, c), lambda ni: (ni, 0, 0, 0)),
                  pl.BlockSpec((1, 1, 1, c), lambda ni: (0, 0, 0, 0)),
                  pl.BlockSpec((1, 1, 1, c), lambda ni: (0, 0, 0, 0)),
                  pl.BlockSpec((1, h, w, c), lambda ni: (ni, 0, 0, 0))],
        out_specs=pl.BlockSpec((1, h, w, c), lambda ni: (ni, 0, 0, 0)),
        compiler_params=pltpu.CompilerParams(
            dimension_semantics=("parallel",),
            vmem_limit_bytes=_VMEM_LIMIT),
        cost_estimate=pl.CostEstimate(
            flops=4 * n * h * w * c, transcendentals=0,
            bytes_accessed=n * h * w * c * (2 + 4 + 4) + 2 * c * 4),
    )(y2, s2.reshape(1, 1, 1, c), t2.reshape(1, 1, 1, c), identity)


# ----------------------------------------------------------------------------
# BasicBlock forward (train-mode BatchNorm batch statistics, NCHW in/out)
# ----------------------------------------------------------------------------
def basic_block_forward(x_nchw, params, row_tile=None):
    n, cin, h, w = x_nchw.shape
    cout = params["w1"].shape[0]
    assert cout == cin, "stride=1 / downsample=None requires inplanes == planes"
    th = row_tile if row_tile is not None else _pick_row_tile(h, w)
    assert h % th == 0
    m = n * h * w

    x_nhwc = jnp.transpose(x_nchw, (0, 2, 3, 1)).astype(jnp.float32)

    # (Cout, Cin, 3, 3) -> (9, Cin, Cout) bf16, matching the in-kernel tap ordering.
    w1 = jnp.transpose(params["w1"], (2, 3, 1, 0)).reshape(9, cin, cout).astype(jnp.bfloat16)
    w2 = jnp.transpose(params["w2"], (2, 3, 1, 0)).reshape(9, cout, cout).astype(jnp.bfloat16)

    # ---- stage 1: conv1 + BN1 batch statistics --------------------------------
    xp1 = jnp.pad(x_nhwc, ((0, 0), (1, 1), (1, 1), (0, 0))).astype(jnp.bfloat16)
    y1, sum1, ssq1 = _conv3x3_bn_stats_pass(xp1, w1, None, None, h=h, w=w, th=th)
    s1, t1 = _fold_bn(sum1, ssq1, params["g1"], params["b1"], m)

    # ---- stage 2: (BN1+ReLU fused on load) conv2 + BN2 batch statistics --------
    xp2 = jnp.pad(y1, ((0, 0), (1, 1), (1, 1), (0, 0)))           # bf16, zero halo
    y2, sum2, ssq2 = _conv3x3_bn_stats_pass(xp2, w2, s1, t1, h=h, w=w, th=th)
    s2, t2 = _fold_bn(sum2, ssq2, params["g2"], params["b2"], m)

    # ---- epilogue: BN2 + residual + ReLU ---------------------------------------
    out_nhwc = _bn_res_relu_pass(y2, s2, t2, x_nhwc)
    return jnp.transpose(out_nhwc, (0, 3, 1, 2))


# ----------------------------------------------------------------------------
# Pure-JAX f32 reference (same semantics: training-mode BN with batch statistics)
# ----------------------------------------------------------------------------
def reference_forward(x, params):
    def conv(x, w):
        return lax.conv_general_dilated(
            x, w, (1, 1), ((1, 1), (1, 1)),
            dimension_numbers=("NCHW", "OIHW", "NCHW"))

    def bn(x, g, b):
        mean = x.mean(axis=(0, 2, 3), keepdims=True)
        var = jnp.square(x - mean).mean(axis=(0, 2, 3), keepdims=True)
        return ((x - mean) * lax.rsqrt(var + BN_EPS)
                * g.reshape(1, -1, 1, 1) + b.reshape(1, -1, 1, 1))

    out = jax.nn.relu(bn(conv(x, params["w1"]), params["g1"], params["b1"]))
    out = bn(conv(out, params["w2"]), params["g2"], params["b2"]) + x
    return jax.nn.relu(out)


if __name__ == "__main__":
    # batch=2, inplanes=planes=8, spatial=16x16 (stride=1, downsample=None).
    # row_tile=8 gives 2 H-tiles per image so the resident-stat accumulation and the
    # dynamic haloed-window slicing paths are both exercised.
    N, C, H, W = 2, 8, 16, 16
    planes = C

    key = jax.random.PRNGKey(0)
    kx, kw1, kw2, kg1, kb1, kg2, kb2 = jax.random.split(key, 7)

    x = jax.random.normal(kx, (N, C, H, W), jnp.float32)
    params = {
        "w1": jax.random.normal(kw1, (planes, C, 3, 3), jnp.float32) * 0.1,
        "w2": jax.random.normal(kw2, (planes, planes, 3, 3), jnp.float32) * 0.1,
        "g1": 1.0 + 0.1 * jax.random.normal(kg1, (planes,), jnp.float32),
        "b1": 0.1 * jax.random.normal(kb1, (planes,), jnp.float32),
        "g2": 1.0 + 0.1 * jax.random.normal(kg2, (planes,), jnp.float32),
        "b2": 0.1 * jax.random.normal(kb2, (planes,), jnp.float32),
    }

    fwd = jax.jit(lambda xx, pp: basic_block_forward(xx, pp, row_tile=8))
    out = jax.block_until_ready(fwd(x, params))
    ref = jax.block_until_ready(reference_forward(x, params))

    assert out.shape == (N, planes, H, W), out.shape
    # bf16 MXU + bf16 round-tripped intermediates -> relaxed tolerance vs f32 reference.
    err = float(jnp.max(jnp.abs(out - ref)))
    assert jnp.allclose(out, ref, atol=1e-1, rtol=5e-2), err

    print("KERNEL_OK")
</pallas_src>

<mosaic_0001>
module attributes {stable_mosaic.version = 11 : i64} {
  func.func @kernel(%arg0: i32, %arg1: i32, %arg2: memref<1x18x18x8xbf16, #tpu.memory_space<vmem>>, %arg3: memref<9x8x8xbf16, #tpu.memory_space<vmem>>, %arg4: memref<1x8x16x8xbf16, #tpu.memory_space<vmem>>, %arg5: memref<1x1x8xf32, #tpu.memory_space<vmem>>, %arg6: memref<1x1x8xf32, #tpu.memory_space<vmem>>) attributes {dimension_semantics = [#tpu.dimension_semantics<parallel>, #tpu.dimension_semantics<arbitrary>], iteration_bounds = array<i64: 2, 2>, scalar_prefetch = 0 : i64, scratch_operands = 0 : i64, tpu.core_type = #tpu.core_type<tc>, window_params = [{transform_indices = @transform_0, window_bounds = array<i64: 1, 18, 18, 8>}, {pipeline_mode = #tpu.pipeline_mode<synchronous>, transform_indices = @transform_1, window_bounds = array<i64: 9, 8, 8>}, {transform_indices = @transform_2, window_bounds = array<i64: 1, 8, 16, 8>}, {transform_indices = @transform_3, window_bounds = array<i64: 1, 1, 8>}, {transform_indices = @transform_4, window_bounds = array<i64: 1, 1, 8>}]} {
    %c8_i32 = arith.constant 8 : i32
    %0 = arith.muli %arg1, %c8_i32 : i32
    %1 = tpu.assume_multiple %0, 8 : i32
    %c0 = arith.constant 0 : index
    %2 = arith.index_cast %1 : i32 to index
    %c0_0 = arith.constant 0 : index
    %c0_1 = arith.constant 0 : index
    %3 = vector.load %arg2[%c0, %2, %c0_0, %c0_1] : memref<1x18x18x8xbf16, #tpu.memory_space<vmem>>, vector<1x10x18x8xbf16>
    %4 = vector.shape_cast %3 : vector<1x10x18x8xbf16> to vector<10x18x8xbf16>
    %5 = arith.extf %4 : vector<10x18x8xbf16> to vector<10x18x8xf32>
    %cst = arith.constant 0.000000e+00 : f32
    %6 = vector.broadcast %cst : f32 to vector<128x8xf32>
    %7 = vector.extract_strided_slice %5 {offsets = [0, 0, 0], sizes = [8, 16, 8], strides = [1, 1, 1]} : vector<10x18x8xf32> to vector<8x16x8xf32>
    %8 = vector.shape_cast %7 : vector<8x16x8xf32> to vector<128x8xf32>
    %9 = arith.truncf %8 : vector<128x8xf32> to vector<128x8xbf16>
    %c0_2 = arith.constant 0 : index
    %c0_3 = arith.constant 0 : index
    %c0_4 = arith.constant 0 : index
    %10 = vector.load %arg3[%c0_2, %c0_3, %c0_4] : memref<9x8x8xbf16, #tpu.memory_space<vmem>>, vector<1x8x8xbf16>
    %11 = vector.shape_cast %10 : vector<1x8x8xbf16> to vector<8x8xbf16>
    %cst_5 = arith.constant dense<0.000000e+00> : vector<128x8xf32>
    %12 = tpu.matmul %9, %11, %cst_5 {dimension_numbers = #tpu.dot_dimension_numbers<[1], [0], [0], [1], [0, 0, 1, 1], [], []>} : vector<128x8xbf16>, vector<8x8xbf16>, vector<128x8xf32> -> vector<128x8xf32>
    %13 = arith.addf %6, %12 : vector<128x8xf32>
    %14 = vector.extract_strided_slice %5 {offsets = [0, 1, 0], sizes = [8, 16, 8], strides = [1, 1, 1]} : vector<10x18x8xf32> to vector<8x16x8xf32>
    %15 = vector.shape_cast %14 : vector<8x16x8xf32> to vector<128x8xf32>
    %16 = arith.truncf %15 : vector<128x8xf32> to vector<128x8xbf16>
    %c1 = arith.constant 1 : index
    %c0_6 = arith.constant 0 : index
    %c0_7 = arith.constant 0 : index
    %17 = vector.load %arg3[%c1, %c0_6, %c0_7] : memref<9x8x8xbf16, #tpu.memory_space<vmem>>, vector<1x8x8xbf16>
    %18 = vector.shape_cast %17 : vector<1x8x8xbf16> to vector<8x8xbf16>
    %cst_8 = arith.constant dense<0.000000e+00> : vector<128x8xf32>
    %19 = tpu.matmul %16, %18, %cst_8 {dimension_numbers = #tpu.dot_dimension_numbers<[1], [0], [0], [1], [0, 0, 1, 1], [], []>} : vector<128x8xbf16>, vector<8x8xbf16>, vector<128x8xf32> -> vector<128x8xf32>
    %20 = arith.addf %13, %19 : vector<128x8xf32>
    %21 = vector.extract_strided_slice %5 {offsets = [0, 2, 0], sizes = [8, 16, 8], strides = [1, 1, 1]} : vector<10x18x8xf32> to vector<8x16x8xf32>
    %22 = vector.shape_cast %21 : vector<8x16x8xf32> to vector<128x8xf32>
    %23 = arith.truncf %22 : vector<128x8xf32> to vector<128x8xbf16>
    %c2 = arith.constant 2 : index
    %c0_9 = arith.constant 0 : index
    %c0_10 = arith.constant 0 : index
    %24 = vector.load %arg3[%c2, %c0_9, %c0_10] : memref<9x8x8xbf16, #tpu.memory_space<vmem>>, vector<1x8x8xbf16>
    %25 = vector.shape_cast %24 : vector<1x8x8xbf16> to vector<8x8xbf16>
    %cst_11 = arith.constant dense<0.000000e+00> : vector<128x8xf32>
    %26 = tpu.matmul %23, %25, %cst_11 {dimension_numbers = #tpu.dot_dimension_numbers<[1], [0], [0], [1], [0, 0, 1, 1], [], []>} : vector<128x8xbf16>, vector<8x8xbf16>, vector<128x8xf32> -> vector<128x8xf32>
    %27 = arith.addf %20, %26 : vector<128x8xf32>
    %28 = vector.extract_strided_slice %5 {offsets = [1, 0, 0], sizes = [8, 16, 8], strides = [1, 1, 1]} : vector<10x18x8xf32> to vector<8x16x8xf32>
    %29 = vector.shape_cast %28 : vector<8x16x8xf32> to vector<128x8xf32>
    %30 = arith.truncf %29 : vector<128x8xf32> to vector<128x8xbf16>
    %c3 = arith.constant 3 : index
    %c0_12 = arith.constant 0 : index
    %c0_13 = arith.constant 0 : index
    %31 = vector.load %arg3[%c3, %c0_12, %c0_13] : memref<9x8x8xbf16, #tpu.memory_space<vmem>>, vector<1x8x8xbf16>
    %32 = vector.shape_cast %31 : vector<1x8x8xbf16> to vector<8x8xbf16>
    %cst_14 = arith.constant dense<0.000000e+00> : vector<128x8xf32>
    %33 = tpu.matmul %30, %32, %cst_14 {dimension_numbers = #tpu.dot_dimension_numbers<[1], [0], [0], [1], [0, 0, 1, 1], [], []>} : vector<128x8xbf16>, vector<8x8xbf16>, vector<128x8xf32> -> vector<128x8xf32>
    %34 = arith.addf %27, %33 : vector<128x8xf32>
    %35 = vector.extract_strided_slice %5 {offsets = [1, 1, 0], sizes = [8, 16, 8], strides = [1, 1, 1]} : vector<10x18x8xf32> to vector<8x16x8xf32>
    %36 = vector.shape_cast %35 : vector<8x16x8xf32> to vector<128x8xf32>
    %37 = arith.truncf %36 : vector<128x8xf32> to vector<128x8xbf16>
    %c4 = arith.constant 4 : index
    %c0_15 = arith.constant 0 : index
    %c0_16 = arith.constant 0 : index
    %38 = vector.load %arg3[%c4, %c0_15, %c0_16] : memref<9x8x8xbf16, #tpu.memory_space<vmem>>, vector<1x8x8xbf16>
    %39 = vector.shape_cast %38 : vector<1x8x8xbf16> to vector<8x8xbf16>
    %cst_17 = arith.constant dense<0.000000e+00> : vector<128x8xf32>
    %40 = tpu.matmul %37, %39, %cst_17 {dimension_numbers = #tpu.dot_dimension_numbers<[1], [0], [0], [1], [0, 0, 1, 1], [], []>} : vector<128x8xbf16>, vector<8x8xbf16>, vector<128x8xf32> -> vector<128x8xf32>
    %41 = arith.addf %34, %40 : vector<128x8xf32>
    %42 = vector.extract_strided_slice %5 {offsets = [1, 2, 0], sizes = [8, 16, 8], strides = [1, 1, 1]} : vector<10x18x8xf32> to vector<8x16x8xf32>
    %43 = vector.shape_cast %42 : vector<8x16x8xf32> to vector<128x8xf32>
    %44 = arith.truncf %43 : vector<128x8xf32> to vector<128x8xbf16>
    %c5 = arith.constant 5 : index
    %c0_18 = arith.constant 0 : index
    %c0_19 = arith.constant 0 : index
    %45 = vector.load %arg3[%c5, %c0_18, %c0_19] : memref<9x8x8xbf16, #tpu.memory_space<vmem>>, vector<1x8x8xbf16>
    %46 = vector.shape_cast %45 : vector<1x8x8xbf16> to vector<8x8xbf16>
    %cst_20 = arith.constant dense<0.000000e+00> : vector<128x8xf32>
    %47 = tpu.matmul %44, %46, %cst_20 {dimension_numbers = #tpu.dot_dimension_numbers<[1], [0], [0], [1], [0, 0, 1, 1], [], []>} : vector<128x8xbf16>, vector<8x8xbf16>, vector<128x8xf32> -> vector<128x8xf32>
    %48 = arith.addf %41, %47 : vector<128x8xf32>
    %49 = vector.extract_strided_slice %5 {offsets = [2, 0, 0], sizes = [8, 16, 8], strides = [1, 1, 1]} : vector<10x18x8xf32> to vector<8x16x8xf32>
    %50 = vector.shape_cast %49 : vector<8x16x8xf32> to vector<128x8xf32>
    %51 = arith.truncf %50 : vector<128x8xf32> to vector<128x8xbf16>
    %c6 = arith.constant 6 : index
    %c0_21 = arith.constant 0 : index
    %c0_22 = arith.constant 0 : index
    %52 = vector.load %arg3[%c6, %c0_21, %c0_22] : memref<9x8x8xbf16, #tpu.memory_space<vmem>>, vector<1x8x8xbf16>
    %53 = vector.shape_cast %52 : vector<1x8x8xbf16> to vector<8x8xbf16>
    %cst_23 = arith.constant dense<0.000000e+00> : vector<128x8xf32>
    %54 = tpu.matmul %51, %53, %cst_23 {dimension_numbers = #tpu.dot_dimension_numbers<[1], [0], [0], [1], [0, 0, 1, 1], [], []>} : vector<128x8xbf16>, vector<8x8xbf16>, vector<128x8xf32> -> vector<128x8xf32>
    %55 = arith.addf %48, %54 : vector<128x8xf32>
    %56 = vector.extract_strided_slice %5 {offsets = [2, 1, 0], sizes = [8, 16, 8], strides = [1, 1, 1]} : vector<10x18x8xf32> to vector<8x16x8xf32>
    %57 = vector.shape_cast %56 : vector<8x16x8xf32> to vector<128x8xf32>
    %58 = arith.truncf %57 : vector<128x8xf32> to vector<128x8xbf16>
    %c7 = arith.constant 7 : index
    %c0_24 = arith.constant 0 : index
    %c0_25 = arith.constant 0 : index
    %59 = vector.load %arg3[%c7, %c0_24, %c0_25] : memref<9x8x8xbf16, #tpu.memory_space<vmem>>, vector<1x8x8xbf16>
    %60 = vector.shape_cast %59 : vector<1x8x8xbf16> to vector<8x8xbf16>
    %cst_26 = arith.constant dense<0.000000e+00> : vector<128x8xf32>
    %61 = tpu.matmul %58, %60, %cst_26 {dimension_numbers = #tpu.dot_dimension_numbers<[1], [0], [0], [1], [0, 0, 1, 1], [], []>} : vector<128x8xbf16>, vector<8x8xbf16>, vector<128x8xf32> -> vector<128x8xf32>
    %62 = arith.addf %55, %61 : vector<128x8xf32>
    %63 = vector.extract_strided_slice %5 {offsets = [2, 2, 0], sizes = [8, 16, 8], strides = [1, 1, 1]} : vector<10x18x8xf32> to vector<8x16x8xf32>
    %64 = vector.shape_cast %63 : vector<8x16x8xf32> to vector<128x8xf32>
    %65 = arith.truncf %64 : vector<128x8xf32> to vector<128x8xbf16>
    %c8 = arith.constant 8 : index
    %c0_27 = arith.constant 0 : index
    %c0_28 = arith.constant 0 : index
    %66 = vector.load %arg3[%c8, %c0_27, %c0_28] : memref<9x8x8xbf16, #tpu.memory_space<vmem>>, vector<1x8x8xbf16>
    %67 = vector.shape_cast %66 : vector<1x8x8xbf16> to vector<8x8xbf16>
    %cst_29 = arith.constant dense<0.000000e+00> : vector<128x8xf32>
    %68 = tpu.matmul %65, %67, %cst_29 {dimension_numbers = #tpu.dot_dimension_numbers<[1], [0], [0], [1], [0, 0, 1, 1], [], []>} : vector<128x8xbf16>, vector<8x8xbf16>, vector<128x8xf32> -> vector<128x8xf32>
    %69 = arith.addf %62, %68 : vector<128x8xf32>
    %70 = vector.shape_cast %69 : vector<128x8xf32> to vector<1x8x16x8xf32>
    %71 = arith.truncf %70 : vector<1x8x16x8xf32> to vector<1x8x16x8xbf16>
    %c0_30 = arith.constant 0 : index
    %c0_31 = arith.constant 0 : index
    %c0_32 = arith.constant 0 : index
    %c0_33 = arith.constant 0 : index
    %72 = vector.load %arg4[%c0_30, %c0_31, %c0_32, %c0_33] : memref<1x8x16x8xbf16, #tpu.memory_space<vmem>>, vector<1x8x16x8xbf16>
    tpu.vector_store %arg4[%c0_30, %c0_31, %c0_32, %c0_33], %71 {strides = array<i32>} : memref<1x8x16x8xbf16, #tpu.memory_space<vmem>>, vector<1x8x16x8xbf16>,
    %c0_i32 = arith.constant 0 : i32
    %73 = arith.cmpi eq, %arg1, %c0_i32 : i32
    %74 = arith.extui %73 : i1 to i32
    %c0_i32_34 = arith.constant 0 : i32
    %75 = arith.cmpi ne, %74, %c0_i32_34 : i32
    scf.if %75 {
      %cst_49 = arith.constant 0.000000e+00 : f32
      %89 = vector.broadcast %cst_49 : f32 to vector<1x1x8xf32>
      %c0_50 = arith.constant 0 : index
      %c0_51 = arith.constant 0 : index
      %c0_52 = arith.constant 0 : index
      %90 = vector.load %arg5[%c0_50, %c0_51, %c0_52] : memref<1x1x8xf32, #tpu.memory_space<vmem>>, vector<1x1x8xf32>
      tpu.vector_store %arg5[%c0_50, %c0_51, %c0_52], %89 {strides = array<i32>} : memref<1x1x8xf32, #tpu.memory_space<vmem>>, vector<1x1x8xf32>,
      %cst_53 = arith.constant 0.000000e+00 : f32
      %91 = vector.broadcast %cst_53 : f32 to vector<1x1x8xf32>
      %c0_54 = arith.constant 0 : index
      %c0_55 = arith.constant 0 : index
      %c0_56 = arith.constant 0 : index
      %92 = vector.load %arg6[%c0_54, %c0_55, %c0_56] : memref<1x1x8xf32, #tpu.memory_space<vmem>>, vector<1x1x8xf32>
      tpu.vector_store %arg6[%c0_54, %c0_55, %c0_56], %91 {strides = array<i32>} : memref<1x1x8xf32, #tpu.memory_space<vmem>>, vector<1x1x8xf32>,
    } else {
    }
    %c0_35 = arith.constant 0 : index
    %c0_36 = arith.constant 0 : index
    %c0_37 = arith.constant 0 : index
    %76 = vector.load %arg5[%c0_35, %c0_36, %c0_37] : memref<1x1x8xf32, #tpu.memory_space<vmem>>, vector<1x1x8xf32>
    %cst_38 = arith.constant dense<0.000000e+00> : vector<8xf32>
    %77 = vector.multi_reduction <add>, %69, %cst_38 [0] : vector<128x8xf32> to vector<8xf32>
    %78 = vector.shape_cast %77 : vector<8xf32> to vector<1x8xf32>
    %79 = vector.shape_cast %78 : vector<1x8xf32> to vector<1x1x8xf32>
    %80 = arith.addf %76, %79 : vector<1x1x8xf32>
    %c0_39 = arith.constant 0 : index
    %c0_40 = arith.constant 0 : index
    %c0_41 = arith.constant 0 : index
    %81 = vector.load %arg5[%c0_39, %c0_40, %c0_41] : memref<1x1x8xf32, #tpu.memory_space<vmem>>, vector<1x1x8xf32>
    tpu.vector_store %arg5[%c0_39, %c0_40, %c0_41], %80 {strides = array<i32>} : memref<1x1x8xf32, #tpu.memory_space<vmem>>, vector<1x1x8xf32>,
    %c0_42 = arith.constant 0 : index
    %c0_43 = arith.constant 0 : index
    %c0_44 = arith.constant 0 : index
    %82 = vector.load %arg6[%c0_42, %c0_43, %c0_44] : memref<1x1x8xf32, #tpu.memory_space<vmem>>, vector<1x1x8xf32>
    %83 = arith.mulf %69, %69 : vector<128x8xf32>
    %cst_45 = arith.constant dense<0.000000e+00> : vector<8xf32>
    %84 = vector.multi_reduction <add>, %83, %cst_45 [0] : vector<128x8xf32> to vector<8xf32>
    %85 = vector.shape_cast %84 : vector<8xf32> to vector<1x8xf32>
    %86 = vector.shape_cast %85 : vector<1x8xf32> to vector<1x1x8xf32>
    %87 = arith.addf %82, %86 : vector<1x1x8xf32>
    %c0_46 = arith.constant 0 : index
    %c0_47 = arith.constant 0 : index
    %c0_48 = arith.constant 0 : index
    %88 = vector.load %arg6[%c0_46, %c0_47, %c0_48] : memref<1x1x8xf32, #tpu.memory_space<vmem>>, vector<1x1x8xf32>
    tpu.vector_store %arg6[%c0_46, %c0_47, %c0_48], %87 {strides = array<i32>} : memref<1x1x8xf32, #tpu.memory_space<vmem>>, vector<1x1x8xf32>,
    return
  }
  func.func @transform_0(%arg0: i32, %arg1: i32) -> (i32, i32, i32, i32) {
    %c0_i32 = arith.constant 0 : i32
    %c0_i32_0 = arith.constant 0 : i32
    %c0_i32_1 = arith.constant 0 : i32
    %c0_i32_2 = arith.constant 0 : i32
    return %arg0, %c0_i32, %c0_i32_0, %c0_i32_1 : i32, i32, i32, i32
  }
  func.func @transform_1(%arg0: i32, %arg1: i32) -> (i32, i32, i32) {
    %c0_i32 = arith.constant 0 : i32
    %c0_i32_0 = arith.constant 0 : i32
    %c0_i32_1 = arith.constant 0 : i32
    %c0_i32_2 = arith.constant 0 : i32
    return %c0_i32, %c0_i32_0, %c0_i32_1 : i32, i32, i32
  }
  func.func @transform_2(%arg0: i32, %arg1: i32) -> (i32, i32, i32, i32) {
    %c0_i32 = arith.constant 0 : i32
    %c0_i32_0 = arith.constant 0 : i32
    %c0_i32_1 = arith.constant 0 : i32
    return %arg0, %arg1, %c0_i32, %c0_i32_0 : i32, i32, i32, i32
  }
  func.func @transform_3(%arg0: i32, %arg1: i32) -> (i32, i32, i32) {
    %c0_i32 = arith.constant 0 : i32
    %c0_i32_0 = arith.constant 0 : i32
    %c0_i32_1 = arith.constant 0 : i32
    return %arg0, %c0_i32, %c0_i32_0 : i32, i32, i32
  }
  func.func @transform_4(%arg0: i32, %arg1: i32) -> (i32, i32, i32) {
    %c0_i32 = arith.constant 0 : i32
    %c0_i32_0 = arith.constant 0 : i32
    %c0_i32_1 = arith.constant 0 : i32
    return %arg0, %c0_i32, %c0_i32_0 : i32, i32, i32
  }
}

module attributes {stable_mosaic.version = 11 : i64} {
  func.func @_bn_res_relu_kernel(%arg0: i32, %arg1: memref<1x16x16x8xbf16, #tpu.memory_space<vmem>>, %arg2: memref<1x1x1x8xf32, #tpu.memory_space<vmem>>, %arg3: memref<1x1x1x8xf32, #tpu.memory_space<vmem>>, %arg4: memref<1x16x16x8xf32, #tpu.memory_space<vmem>>, %arg5: memref<1x16x16x8xf32, #tpu.memory_space<vmem>>) attributes {dimension_semantics = [#tpu.dimension_semantics<parallel>], iteration_bounds = array<i64: 2>, scalar_prefetch = 0 : i64, scratch_operands = 0 : i64, tpu.core_type = #tpu.core_type<tc>, window_params = [{transform_indices = @transform_0, window_bounds = array<i64: 1, 16, 16, 8>}, {pipeline_mode = #tpu.pipeline_mode<synchronous>, transform_indices = @transform_1, window_bounds = array<i64: 1, 1, 1, 8>}, {pipeline_mode = #tpu.pipeline_mode<synchronous>, transform_indices = @transform_2, window_bounds = array<i64: 1, 1, 1, 8>}, {transform_indices = @transform_3, window_bounds = array<i64: 1, 16, 16, 8>}, {transform_indices = @transform_4, window_bounds = array<i64: 1, 16, 16, 8>}]} {
    %c0 = arith.constant 0 : index
    %c0_0 = arith.constant 0 : index
    %c0_1 = arith.constant 0 : index
    %c0_2 = arith.constant 0 : index
    %0 = vector.load %arg1[%c0, %c0_0, %c0_1, %c0_2] : memref<1x16x16x8xbf16, #tpu.memory_space<vmem>>, vector<1x16x16x8xbf16>
    %1 = arith.extf %0 : vector<1x16x16x8xbf16> to vector<1x16x16x8xf32>
    %c0_3 = arith.constant 0 : index
    %c0_4 = arith.constant 0 : index
    %c0_5 = arith.constant 0 : index
    %c0_6 = arith.constant 0 : index
    %2 = vector.load %arg2[%c0_3, %c0_4, %c0_5, %c0_6] : memref<1x1x1x8xf32, #tpu.memory_space<vmem>>, vector<1x1x1x8xf32>
    %3 = vector.broadcast %2 : vector<1x1x1x8xf32> to vector<1x16x16x8xf32>
    %4 = arith.mulf %1, %3 : vector<1x16x16x8xf32>
    %c0_7 = arith.constant 0 : index
    %c0_8 = arith.constant 0 : index
    %c0_9 = arith.constant 0 : index
    %c0_10 = arith.constant 0 : index
    %5 = vector.load %arg3[%c0_7, %c0_8, %c0_9, %c0_10] : memref<1x1x1x8xf32, #tpu.memory_space<vmem>>, vector<1x1x1x8xf32>
    %6 = vector.broadcast %5 : vector<1x1x1x8xf32> to vector<1x16x16x8xf32>
    %7 = arith.addf %4, %6 : vector<1x16x16x8xf32>
    %c0_11 = arith.constant 0 : index
    %c0_12 = arith.constant 0 : index
    %c0_13 = arith.constant 0 : index
    %c0_14 = arith.constant 0 : index
    %8 = vector.load %arg4[%c0_11, %c0_12, %c0_13, %c0_14] : memref<1x16x16x8xf32, #tpu.memory_space<vmem>>, vector<1x16x16x8xf32>
    %9 = arith.addf %7, %8 : vector<1x16x16x8xf32>
    %cst = arith.constant 0.000000e+00 : f32
    %10 = vector.broadcast %cst : f32 to vector<1x16x16x8xf32>
    %11 = arith.maximumf %9, %10 : vector<1x16x16x8xf32>
    %c0_15 = arith.constant 0 : index
    %c0_16 = arith.constant 0 : index
    %c0_17 = arith.constant 0 : index
    %c0_18 = arith.constant 0 : index
    %12 = vector.load %arg5[%c0_15, %c0_16, %c0_17, %c0_18] : memref<1x16x16x8xf32, #tpu.memory_space<vmem>>, vector<1x16x16x8xf32>
    tpu.vector_store %arg5[%c0_15, %c0_16, %c0_17, %c0_18], %11 {strides = array<i32>} : memref<1x16x16x8xf32, #tpu.memory_space<vmem>>, vector<1x16x16x8xf32>,
    return
  }
  func.func @transform_0(%arg0: i32) -> (i32, i32, i32, i32) {
    %c0_i32 = arith.constant 0 : i32
    %c0_i32_0 = arith.constant 0 : i32
    %c0_i32_1 = arith.constant 0 : i32
    %c0_i32_2 = arith.constant 0 : i32
    return %arg0, %c0_i32, %c0_i32_0, %c0_i32_1 : i32, i32, i32, i32
  }
  func.func @transform_1(%arg0: i32) -> (i32, i32, i32, i32) {
    %c0_i32 = arith.constant 0 : i32
    %c0_i32_0 = arith.constant 0 : i32
    %c0_i32_1 = arith.constant 0 : i32
    %c0_i32_2 = arith.constant 0 : i32
    %c0_i32_3 = arith.constant 0 : i32
    return %c0_i32, %c0_i32_0, %c0_i32_1, %c0_i32_2 : i32, i32, i32, i32
  }
  func.func @transform_2(%arg0: i32) -> (i32, i32, i32, i32) {
    %c0_i32 = arith.constant 0 : i32
    %c0_i32_0 = arith.constant 0 : i32
    %c0_i32_1 = arith.constant 0 : i32
    %c0_i32_2 = arith.constant 0 : i32
    %c0_i32_3 = arith.constant 0 : i32
    return %c0_i32, %c0_i32_0, %c0_i32_1, %c0_i32_2 : i32, i32, i32, i32
  }
  func.func @transform_3(%arg0: i32) -> (i32, i32, i32, i32) {
    %c0_i32 = arith.constant 0 : i32
    %c0_i32_0 = arith.constant 0 : i32
    %c0_i32_1 = arith.constant 0 : i32
    %c0_i32_2 = arith.constant 0 : i32
    return %arg0, %c0_i32, %c0_i32_0, %c0_i32_1 : i32, i32, i32, i32
  }
  func.func @transform_4(%arg0: i32) -> (i32, i32, i32, i32) {
    %c0_i32 = arith.constant 0 : i32
    %c0_i32_0 = arith.constant 0 : i32
    %c0_i32_1 = arith.constant 0 : i32
    %c0_i32_2 = arith.constant 0 : i32
    return %arg0, %c0_i32, %c0_i32_0, %c0_i32_1 : i32, i32, i32, i32
  }
}

module attributes {stable_mosaic.version = 11 : i64} {
  func.func @kernel(%arg0: i32, %arg1: i32, %arg2: memref<1x18x18x8xbf16, #tpu.memory_space<vmem>>, %arg3: memref<1x1x8xf32, #tpu.memory_space<vmem>>, %arg4: memref<1x1x8xf32, #tpu.memory_space<vmem>>, %arg5: memref<9x8x8xbf16, #tpu.memory_space<vmem>>, %arg6: memref<1x8x16x8xbf16, #tpu.memory_space<vmem>>, %arg7: memref<1x1x8xf32, #tpu.memory_space<vmem>>, %arg8: memref<1x1x8xf32, #tpu.memory_space<vmem>>) attributes {dimension_semantics = [#tpu.dimension_semantics<parallel>, #tpu.dimension_semantics<arbitrary>], iteration_bounds = array<i64: 2, 2>, scalar_prefetch = 0 : i64, scratch_operands = 0 : i64, tpu.core_type = #tpu.core_type<tc>, window_params = [{transform_indices = @transform_0, window_bounds = array<i64: 1, 18, 18, 8>}, {pipeline_mode = #tpu.pipeline_mode<synchronous>, transform_indices = @transform_1, window_bounds = array<i64: 1, 1, 8>}, {pipeline_mode = #tpu.pipeline_mode<synchronous>, transform_indices = @transform_2, window_bounds = array<i64: 1, 1, 8>}, {pipeline_mode = #tpu.pipeline_mode<synchronous>, transform_indices = @transform_3, window_bounds = array<i64: 9, 8, 8>}, {transform_indices = @transform_4, window_bounds = array<i64: 1, 8, 16, 8>}, {transform_indices = @transform_5, window_bounds = array<i64: 1, 1, 8>}, {transform_indices = @transform_6, window_bounds = array<i64: 1, 1, 8>}]} {
    %c8_i32 = arith.constant 8 : i32
    %0 = arith.muli %arg1, %c8_i32 : i32
    %1 = tpu.assume_multiple %0, 8 : i32
    %c0 = arith.constant 0 : index
    %2 = arith.index_cast %1 : i32 to index
    %c0_0 = arith.constant 0 : index
    %c0_1 = arith.constant 0 : index
    %3 = vector.load %arg2[%c0, %2, %c0_0, %c0_1] : memref<1x18x18x8xbf16, #tpu.memory_space<vmem>>, vector<1x10x18x8xbf16>
    %4 = vector.shape_cast %3 : vector<1x10x18x8xbf16> to vector<10x18x8xbf16>
    %5 = arith.extf %4 : vector<10x18x8xbf16> to vector<10x18x8xf32>
    %c0_2 = arith.constant 0 : index
    %c0_3 = arith.constant 0 : index
    %c0_4 = arith.constant 0 : index
    %6 = vector.load %arg3[%c0_2, %c0_3, %c0_4] : memref<1x1x8xf32, #tpu.memory_space<vmem>>, vector<1x1x8xf32>
    %7 = vector.broadcast %6 : vector<1x1x8xf32> to vector<10x18x8xf32>
    %8 = arith.mulf %5, %7 : vector<10x18x8xf32>
    %c0_5 = arith.constant 0 : index
    %c0_6 = arith.constant 0 : index
    %c0_7 = arith.constant 0 : index
    %9 = vector.load %arg4[%c0_5, %c0_6, %c0_7] : memref<1x1x8xf32, #tpu.memory_space<vmem>>, vector<1x1x8xf32>
    %10 = vector.broadcast %9 : vector<1x1x8xf32> to vector<10x18x8xf32>
    %11 = arith.addf %8, %10 : vector<10x18x8xf32>
    %cst = arith.constant 0.000000e+00 : f32
    %12 = vector.broadcast %cst : f32 to vector<10x18x8xf32>
    %13 = arith.maximumf %11, %12 : vector<10x18x8xf32>
    %14 = tpu.iota {dimensions = array<i32: 0>} : vector<10x1x1xi32>
    %15 = vector.broadcast %1 : i32 to vector<10x1x1xi32>
    %16 = arith.addi %15, %14 : vector<10x1x1xi32>
    %c1_i32 = arith.constant 1 : i32
    %17 = vector.broadcast %c1_i32 : i32 to vector<10x1x1xi32>
    %18 = arith.cmpi sge, %16, %17 : vector<10x1x1xi32>
    %c16_i32 = arith.constant 16 : i32
    %19 = vector.broadcast %c16_i32 : i32 to vector<10x1x1xi32>
    %20 = arith.cmpi sle, %16, %19 : vector<10x1x1xi32>
    %21 = arith.andi %18, %20 : vector<10x1x1xi1>
    %22 = tpu.iota {dimensions = array<i32: 1>} : vector<1x18x1xi32>
    %c1_i32_8 = arith.constant 1 : i32
    %23 = vector.broadcast %c1_i32_8 : i32 to vector<1x18x1xi32>
    %24 = arith.cmpi sge, %22, %23 : vector<1x18x1xi32>
    %c16_i32_9 = arith.constant 16 : i32
    %25 = vector.broadcast %c16_i32_9 : i32 to vector<1x18x1xi32>
    %26 = arith.cmpi sle, %22, %25 : vector<1x18x1xi32>
    %27 = arith.andi %24, %26 : vector<1x18x1xi1>
    %28 = vector.broadcast %21 : vector<10x1x1xi1> to vector<10x18x1xi1>
    %29 = vector.broadcast %27 : vector<1x18x1xi1> to vector<10x18x1xi1>
    %30 = arith.andi %28, %29 : vector<10x18x1xi1>
    %cst_10 = arith.constant 0.000000e+00 : f32
    %31 = vector.shape_cast %30 : vector<10x18x1xi1> to vector<10x18x1xi1>
    %32 = vector.broadcast %31 : vector<10x18x1xi1> to vector<10x18x8xi1>
    %33 = vector.broadcast %cst_10 : f32 to vector<10x18x8xf32>
    %34 = arith.select %32, %13, %33 : vector<10x18x8xi1>, vector<10x18x8xf32>
    %cst_11 = arith.constant 0.000000e+00 : f32
    %35 = vector.broadcast %cst_11 : f32 to vector<128x8xf32>
    %36 = vector.extract_strided_slice %34 {offsets = [0, 0, 0], sizes = [8, 16, 8], strides = [1, 1, 1]} : vector<10x18x8xf32> to vector<8x16x8xf32>
    %37 = vector.shape_cast %36 : vector<8x16x8xf32> to vector<128x8xf32>
    %38 = arith.truncf %37 : vector<128x8xf32> to vector<128x8xbf16>
    %c0_12 = arith.constant 0 : index
    %c0_13 = arith.constant 0 : index
    %c0_14 = arith.constant 0 : index
    %39 = vector.load %arg5[%c0_12, %c0_13, %c0_14] : memref<9x8x8xbf16, #tpu.memory_space<vmem>>, vector<1x8x8xbf16>
    %40 = vector.shape_cast %39 : vector<1x8x8xbf16> to vector<8x8xbf16>
    %cst_15 = arith.constant dense<0.000000e+00> : vector<128x8xf32>
    %41 = tpu.matmul %38, %40, %cst_15 {dimension_numbers = #tpu.dot_dimension_numbers<[1], [0], [0], [1], [0, 0, 1, 1], [], []>} : vector<128x8xbf16>, vector<8x8xbf16>, vector<128x8xf32> -> vector<128x8xf32>
    %42 = arith.addf %35, %41 : vector<128x8xf32>
    %43 = vector.extract_strided_slice %34 {offsets = [0, 1, 0], sizes = [8, 16, 8], strides = [1, 1, 1]} : vector<10x18x8xf32> to vector<8x16x8xf32>
    %44 = vector.shape_cast %43 : vector<8x16x8xf32> to vector<128x8xf32>
    %45 = arith.truncf %44 : vector<128x8xf32> to vector<128x8xbf16>
    %c1 = arith.constant 1 : index
    %c0_16 = arith.constant 0 : index
    %c0_17 = arith.constant 0 : index
    %46 = vector.load %arg5[%c1, %c0_16, %c0_17] : memref<9x8x8xbf16, #tpu.memory_space<vmem>>, vector<1x8x8xbf16>
    %47 = vector.shape_cast %46 : vector<1x8x8xbf16> to vector<8x8xbf16>
    %cst_18 = arith.constant dense<0.000000e+00> : vector<128x8xf32>
    %48 = tpu.matmul %45, %47, %cst_18 {dimension_numbers = #tpu.dot_dimension_numbers<[1], [0], [0], [1], [0, 0, 1, 1], [], []>} : vector<128x8xbf16>, vector<8x8xbf16>, vector<128x8xf32> -> vector<128x8xf32>
    %49 = arith.addf %42, %48 : vector<128x8xf32>
    %50 = vector.extract_strided_slice %34 {offsets = [0, 2, 0], sizes = [8, 16, 8], strides = [1, 1, 1]} : vector<10x18x8xf32> to vector<8x16x8xf32>
    %51 = vector.shape_cast %50 : vector<8x16x8xf32> to vector<128x8xf32>
    %52 = arith.truncf %51 : vector<128x8xf32> to vector<128x8xbf16>
    %c2 = arith.constant 2 : index
    %c0_19 = arith.constant 0 : index
    %c0_20 = arith.constant 0 : index
    %53 = vector.load %arg5[%c2, %c0_19, %c0_20] : memref<9x8x8xbf16, #tpu.memory_space<vmem>>, vector<1x8x8xbf16>
    %54 = vector.shape_cast %53 : vector<1x8x8xbf16> to vector<8x8xbf16>
    %cst_21 = arith.constant dense<0.000000e+00> : vector<128x8xf32>
    %55 = tpu.matmul %52, %54, %cst_21 {dimension_numbers = #tpu.dot_dimension_numbers<[1], [0], [0], [1], [0, 0, 1, 1], [], []>} : vector<128x8xbf16>, vector<8x8xbf16>, vector<128x8xf32> -> vector<128x8xf32>
    %56 = arith.addf %49, %55 : vector<128x8xf32>
    %57 = vector.extract_strided_slice %34 {offsets = [1, 0, 0], sizes = [8, 16, 8], strides = [1, 1, 1]} : vector<10x18x8xf32> to vector<8x16x8xf32>
    %58 = vector.shape_cast %57 : vector<8x16x8xf32> to vector<128x8xf32>
    %59 = arith.truncf %58 : vector<128x8xf32> to vector<128x8xbf16>
    %c3 = arith.constant 3 : index
    %c0_22 = arith.constant 0 : index
    %c0_23 = arith.constant 0 : index
    %60 = vector.load %arg5[%c3, %c0_22, %c0_23] : memref<9x8x8xbf16, #tpu.memory_space<vmem>>, vector<1x8x8xbf16>
    %61 = vector.shape_cast %60 : vector<1x8x8xbf16> to vector<8x8xbf16>
    %cst_24 = arith.constant dense<0.000000e+00> : vector<128x8xf32>
    %62 = tpu.matmul %59, %61, %cst_24 {dimension_numbers = #tpu.dot_dimension_numbers<[1], [0], [0], [1], [0, 0, 1, 1], [], []>} : vector<128x8xbf16>, vector<8x8xbf16>, vector<128x8xf32> -> vector<128x8xf32>
    %63 = arith.addf %56, %62 : vector<128x8xf32>
    %64 = vector.extract_strided_slice %34 {offsets = [1, 1, 0], sizes = [8, 16, 8], strides = [1, 1, 1]} : vector<10x18x8xf32> to vector<8x16x8xf32>
    %65 = vector.shape_cast %64 : vector<8x16x8xf32> to vector<128x8xf32>
    %66 = arith.truncf %65 : vector<128x8xf32> to vector<128x8xbf16>
    %c4 = arith.constant 4 : index
    %c0_25 = arith.constant 0 : index
    %c0_26 = arith.constant 0 : index
    %67 = vector.load %arg5[%c4, %c0_25, %c0_26] : memref<9x8x8xbf16, #tpu.memory_space<vmem>>, vector<1x8x8xbf16>
    %68 = vector.shape_cast %67 : vector<1x8x8xbf16> to vector<8x8xbf16>
    %cst_27 = arith.constant dense<0.000000e+00> : vector<128x8xf32>
    %69 = tpu.matmul %66, %68, %cst_27 {dimension_numbers = #tpu.dot_dimension_numbers<[1], [0], [0], [1], [0, 0, 1, 1], [], []>} : vector<128x8xbf16>, vector<8x8xbf16>, vector<128x8xf32> -> vector<128x8xf32>
    %70 = arith.addf %63, %69 : vector<128x8xf32>
    %71 = vector.extract_strided_slice %34 {offsets = [1, 2, 0], sizes = [8, 16, 8], strides = [1, 1, 1]} : vector<10x18x8xf32> to vector<8x16x8xf32>
    %72 = vector.shape_cast %71 : vector<8x16x8xf32> to vector<128x8xf32>
    %73 = arith.truncf %72 : vector<128x8xf32> to vector<128x8xbf16>
    %c5 = arith.constant 5 : index
    %c0_28 = arith.constant 0 : index
    %c0_29 = arith.constant 0 : index
    %74 = vector.load %arg5[%c5, %c0_28, %c0_29] : memref<9x8x8xbf16, #tpu.memory_space<vmem>>, vector<1x8x8xbf16>
    %75 = vector.shape_cast %74 : vector<1x8x8xbf16> to vector<8x8xbf16>
    %cst_30 = arith.constant dense<0.000000e+00> : vector<128x8xf32>
    %76 = tpu.matmul %73, %75, %cst_30 {dimension_numbers = #tpu.dot_dimension_numbers<[1], [0], [0], [1], [0, 0, 1, 1], [], []>} : vector<128x8xbf16>, vector<8x8xbf16>, vector<128x8xf32> -> vector<128x8xf32>
    %77 = arith.addf %70, %76 : vector<128x8xf32>
    %78 = vector.extract_strided_slice %34 {offsets = [2, 0, 0], sizes = [8, 16, 8], strides = [1, 1, 1]} : vector<10x18x8xf32> to vector<8x16x8xf32>
    %79 = vector.shape_cast %78 : vector<8x16x8xf32> to vector<128x8xf32>
    %80 = arith.truncf %79 : vector<128x8xf32> to vector<128x8xbf16>
    %c6 = arith.constant 6 : index
    %c0_31 = arith.constant 0 : index
    %c0_32 = arith.constant 0 : index
    %81 = vector.load %arg5[%c6, %c0_31, %c0_32] : memref<9x8x8xbf16, #tpu.memory_space<vmem>>, vector<1x8x8xbf16>
    %82 = vector.shape_cast %81 : vector<1x8x8xbf16> to vector<8x8xbf16>
    %cst_33 = arith.constant dense<0.000000e+00> : vector<128x8xf32>
    %83 = tpu.matmul %80, %82, %cst_33 {dimension_numbers = #tpu.dot_dimension_numbers<[1], [0], [0], [1], [0, 0, 1, 1], [], []>} : vector<128x8xbf16>, vector<8x8xbf16>, vector<128x8xf32> -> vector<128x8xf32>
    %84 = arith.addf %77, %83 : vector<128x8xf32>
    %85 = vector.extract_strided_slice %34 {offsets = [2, 1, 0], sizes = [8, 16, 8], strides = [1, 1, 1]} : vector<10x18x8xf32> to vector<8x16x8xf32>
    %86 = vector.shape_cast %85 : vector<8x16x8xf32> to vector<128x8xf32>
    %87 = arith.truncf %86 : vector<128x8xf32> to vector<128x8xbf16>
    %c7 = arith.constant 7 : index
    %c0_34 = arith.constant 0 : index
    %c0_35 = arith.constant 0 : index
    %88 = vector.load %arg5[%c7, %c0_34, %c0_35] : memref<9x8x8xbf16, #tpu.memory_space<vmem>>, vector<1x8x8xbf16>
    %89 = vector.shape_cast %88 : vector<1x8x8xbf16> to vector<8x8xbf16>
    %cst_36 = arith.constant dense<0.000000e+00> : vector<128x8xf32>
    %90 = tpu.matmul %87, %89, %cst_36 {dimension_numbers = #tpu.dot_dimension_numbers<[1], [0], [0], [1], [0, 0, 1, 1], [], []>} : vector<128x8xbf16>, vector<8x8xbf16>, vector<128x8xf32> -> vector<128x8xf32>
    %91 = arith.addf %84, %90 : vector<128x8xf32>
    %92 = vector.extract_strided_slice %34 {offsets = [2, 2, 0], sizes = [8, 16, 8], strides = [1, 1, 1]} : vector<10x18x8xf32> to vector<8x16x8xf32>
    %93 = vector.shape_cast %92 : vector<8x16x8xf32> to vector<128x8xf32>
    %94 = arith.truncf %93 : vector<128x8xf32> to vector<128x8xbf16>
    %c8 = arith.constant 8 : index
    %c0_37 = arith.constant 0 : index
    %c0_38 = arith.constant 0 : index
    %95 = vector.load %arg5[%c8, %c0_37, %c0_38] : memref<9x8x8xbf16, #tpu.memory_space<vmem>>, vector<1x8x8xbf16>
    %96 = vector.shape_cast %95 : vector<1x8x8xbf16> to vector<8x8xbf16>
    %cst_39 = arith.constant dense<0.000000e+00> : vector<128x8xf32>
    %97 = tpu.matmul %94, %96, %cst_39 {dimension_numbers = #tpu.dot_dimension_numbers<[1], [0], [0], [1], [0, 0, 1, 1], [], []>} : vector<128x8xbf16>, vector<8x8xbf16>, vector<128x8xf32> -> vector<128x8xf32>
    %98 = arith.addf %91, %97 : vector<128x8xf32>
    %99 = vector.shape_cast %98 : vector<128x8xf32> to vector<1x8x16x8xf32>
    %100 = arith.truncf %99 : vector<1x8x16x8xf32> to vector<1x8x16x8xbf16>
    %c0_40 = arith.constant 0 : index
    %c0_41 = arith.constant 0 : index
    %c0_42 = arith.constant 0 : index
    %c0_43 = arith.constant 0 : index
    %101 = vector.load %arg6[%c0_40, %c0_41, %c0_42, %c0_43] : memref<1x8x16x8xbf16, #tpu.memory_space<vmem>>, vector<1x8x16x8xbf16>
    tpu.vector_store %arg6[%c0_40, %c0_41, %c0_42, %c0_43], %100 {strides = array<i32>} : memref<1x8x16x8xbf16, #tpu.memory_space<vmem>>, vector<1x8x16x8xbf16>,
    %c0_i32 = arith.constant 0 : i32
    %102 = arith.cmpi eq, %arg1, %c0_i32 : i32
    %103 = arith.extui %102 : i1 to i32
    %c0_i32_44 = arith.constant 0 : i32
    %104 = arith.cmpi ne, %103, %c0_i32_44 : i32
    scf.if %104 {
      %cst_59 = arith.constant 0.000000e+00 : f32
      %118 = vector.broadcast %cst_59 : f32 to vector<1x1x8xf32>
      %c0_60 = arith.constant 0 : index
      %c0_61 = arith.constant 0 : index
      %c0_62 = arith.constant 0 : index
      %119 = vector.load %arg7[%c0_60, %c0_61, %c0_62] : memref<1x1x8xf32, #tpu.memory_space<vmem>>, vector<1x1x8xf32>
      tpu.vector_store %arg7[%c0_60, %c0_61, %c0_62], %118 {strides = array<i32>} : memref<1x1x8xf32, #tpu.memory_space<vmem>>, vector<1x1x8xf32>,
      %cst_63 = arith.constant 0.000000e+00 : f32
      %120 = vector.broadcast %cst_63 : f32 to vector<1x1x8xf32>
      %c0_64 = arith.constant 0 : index
      %c0_65 = arith.constant 0 : index
      %c0_66 = arith.constant 0 : index
      %121 = vector.load %arg8[%c0_64, %c0_65, %c0_66] : memref<1x1x8xf32, #tpu.memory_space<vmem>>, vector<1x1x8xf32>
      tpu.vector_store %arg8[%c0_64, %c0_65, %c0_66], %120 {strides = array<i32>} : memref<1x1x8xf32, #tpu.memory_space<vmem>>, vector<1x1x8xf32>,
    } else {
    }
    %c0_45 = arith.constant 0 : index
    %c0_46 = arith.constant 0 : index
    %c0_47 = arith.constant 0 : index
    %105 = vector.load %arg7[%c0_45, %c0_46, %c0_47] : memref<1x1x8xf32, #tpu.memory_space<vmem>>, vector<1x1x8xf32>
    %cst_48 = arith.constant dense<0.000000e+00> : vector<8xf32>
    %106 = vector.multi_reduction <add>, %98, %cst_48 [0] : vector<128x8xf32> to vector<8xf32>
    %107 = vector.shape_cast %106 : vector<8xf32> to vector<1x8xf32>
    %108 = vector.shape_cast %107 : vector<1x8xf32> to vector<1x1x8xf32>
    %109 = arith.addf %105, %108 : vector<1x1x8xf32>
    %c0_49 = arith.constant 0 : index
    %c0_50 = arith.constant 0 : index
    %c0_51 = arith.constant 0 : index
    %110 = vector.load %arg7[%c0_49, %c0_50, %c0_51] : memref<1x1x8xf32, #tpu.memory_space<vmem>>, vector<1x1x8xf32>
    tpu.vector_store %arg7[%c0_49, %c0_50, %c0_51], %109 {strides = array<i32>} : memref<1x1x8xf32, #tpu.memory_space<vmem>>, vector<1x1x8xf32>,
    %c0_52 = arith.constant 0 : index
    %c0_53 = arith.constant 0 : index
    %c0_54 = arith.constant 0 : index
    %111 = vector.load %arg8[%c0_52, %c0_53, %c0_54] : memref<1x1x8xf32, #tpu.memory_space<vmem>>, vector<1x1x8xf32>
    %112 = arith.mulf %98, %98 : vector<128x8xf32>
    %cst_55 = arith.constant dense<0.000000e+00> : vector<8xf32>
    %113 = vector.multi_reduction <add>, %112, %cst_55 [0] : vector<128x8xf32> to vector<8xf32>
    %114 = vector.shape_cast %113 : vector<8xf32> to vector<1x8xf32>
    %115 = vector.shape_cast %114 : vector<1x8xf32> to vector<1x1x8xf32>
    %116 = arith.addf %111, %115 : vector<1x1x8xf32>
    %c0_56 = arith.constant 0 : index
    %c0_57 = arith.constant 0 : index
    %c0_58 = arith.constant 0 : index
    %117 = vector.load %arg8[%c0_56, %c0_57, %c0_58] : memref<1x1x8xf32, #tpu.memory_space<vmem>>, vector<1x1x8xf32>
    tpu.vector_store %arg8[%c0_56, %c0_57, %c0_58], %116 {strides = array<i32>} : memref<1x1x8xf32, #tpu.memory_space<vmem>>, vector<1x1x8xf32>,
    return
  }
  func.func @transform_0(%arg0: i32, %arg1: i32) -> (i32, i32, i32, i32) {
    %c0_i32 = arith.constant 0 : i32
    %c0_i32_0 = arith.constant 0 : i32
    %c0_i32_1 = arith.constant 0 : i32
    %c0_i32_2 = arith.constant 0 : i32
    return %arg0, %c0_i32, %c0_i32_0, %c0_i32_1 : i32, i32, i32, i32
  }
  func.func @transform_1(%arg0: i32, %arg1: i32) -> (i32, i32, i32) {
    %c0_i32 = arith.constant 0 : i32
    %c0_i32_0 = arith.constant 0 : i32
    %c0_i32_1 = arith.constant 0 : i32
    %c0_i32_2 = arith.constant 0 : i32
    return %c0_i32, %c0_i32_0, %c0_i32_1 : i32, i32, i32
  }
  func.func @transform_2(%arg0: i32, %arg1: i32) -> (i32, i32, i32) {
    %c0_i32 = arith.constant 0 : i32
    %c0_i32_0 = arith.constant 0 : i32
    %c0_i32_1 = arith.constant 0 : i32
    %c0_i32_2 = arith.constant 0 : i32
    return %c0_i32, %c0_i32_0, %c0_i32_1 : i32, i32, i32
  }
  func.func @transform_3(%arg0: i32, %arg1: i32) -> (i32, i32, i32) {
    %c0_i32 = arith.constant 0 : i32
    %c0_i32_0 = arith.constant 0 : i32
    %c0_i32_1 = arith.constant 0 : i32
    %c0_i32_2 = arith.constant 0 : i32
    return %c0_i32, %c0_i32_0, %c0_i32_1 : i32, i32, i32
  }
  func.func @transform_4(%arg0: i32, %arg1: i32) -> (i32, i32, i32, i32) {
    %c0_i32 = arith.constant 0 : i32
    %c0_i32_0 = arith.constant 0 : i32
    %c0_i32_1 = arith.constant 0 : i32
    return %arg0, %arg1, %c0_i32, %c0_i32_0 : i32, i32, i32, i32
  }
  func.func @transform_5(%arg0: i32, %arg1: i32) -> (i32, i32, i32) {
    %c0_i32 = arith.constant 0 : i32
    %c0_i32_0 = arith.constant 0 : i32
    %c0_i32_1 = arith.constant 0 : i32
    return %arg0, %c0_i32, %c0_i32_0 : i32, i32, i32
  }
  func.func @transform_6(%arg0: i32, %arg1: i32) -> (i32, i32, i32) {
    %c0_i32 = arith.constant 0 : i32
    %c0_i32_0 = arith.constant 0 : i32
    %c0_i32_1 = arith.constant 0 : i32
    return %arg0, %c0_i32, %c0_i32_0 : i32, i32, i32
  }
}

</mosaic_0001>

<llo_original>
// kernel: _lambda_.5
$region0: #{_lambda_.5}
  #allocation0 [shape = 'u32[]', space=smem, size = 0x4, offset = 0x4, fixed_abs, tag = 'smem constant byte address 0x4 - core index']
  #allocation1 [shape = 'u32[144,128]{1,0:T(1,128)}', space=vmem, size = 0x12000, scoped, tag = 'internal scratch']
  %s0 = inlined_call_operand.vmem [shape: bf16[2,16,16,8], index: 0, kind: input, shape index: {}]
  %s1 = inlined_call_operand.vmem [shape: f32[1,1,1,8], index: 1, kind: input, shape index: {}]
  %s2 = inlined_call_operand.vmem [shape: f32[1,1,1,8], index: 2, kind: input, shape index: {}]
  %s3 = inlined_call_operand.vmem [shape: f32[2,16,16,8], index: 3, kind: input, shape index: {}]
  %s4 = inlined_call_operand.vmem [shape: f32[2,16,16,8], index: 4, kind: output, shape index: {}]
  %s5 = sld [smem:[#allocation0]]
  $region49: #{_lambda_.5} parent=0
    _
  %s7 = ssub.s32 1, %s5
  %s8 = scalar_select 0, %s7, %s5
  loop: start=0, step=1, limit=4
  $region2: #{_lambda_.5} parent=0 // loop_pre_header
    _
  $region3: #{_lambda_.5} parent=0 // loop_header
    %s10 = sphi 0, %s14
    %p11 = scmp.ge.s32.totalorder %s10, 4
    %s20 = sphi 0, %s22
    %s23 = sphi 0, %s20
    %s24 = sphi 0, %s23
    %s40 = sphi 0, %s24
    %s44 = sphi 0, %s44
    %s46 = sphi 0, %s44
    %s47 = sphi 0, %s46
    %s61 = sphi 0, %s47
    %s65 = sphi 0, %s65
    %s67 = sphi 0, %s65
    %s68 = sphi 0, %s67
    %s82 = sphi 0, %s68
    %s88 = sphi 0, %s90
    %s91 = sphi 0, %s88
    %s92 = sphi 0, %s91
    %s108 = sphi 0, %s92
    %s114 = sphi 0, %s116
    %s117 = sphi 0, %s114
    %s118 = sphi 0, %s117
    %s134 = sphi 0, %s118
  $region4: #{_lambda_.5} parent=0 // loop_header_branch
    %13 = sbr.rel (%p11) target = $region8
  $region5: #{_lambda_.5} parent=0 // loop_body
    %s15 = ssub.s32 %s10, 1
    %s16 = ssub.s32 %s10, 2
    %s17 = sadd.s32 %s10, 1
    %s18 = ssub.s32 %s10, %s17
    %p19 = scmp.eq.s32.totalorder %s18, 0
    %s21 = sadd.s32 %s20, 1
    %s22 = scalar_select %p19, %s20, %s21
    %p25 = pneg %p19
    %p26 = scmp.eq.s32.totalorder %s10, 1
    %p27 = por %p25, %p26
    %p28 = scmp.ne.s32.totalorder %s20, %s23
    %p29 = scmp.eq.s32.totalorder %s10, 0
    %p30 = por %p28, %p29
    %p31 = scmp.ne.s32.totalorder %s20, %s23
    %p32 = scmp.eq.s32.totalorder %s15, 1
    %p33 = por %p31, %p32
    %p34 = scmp.ne.s32.totalorder %s23, %s24
    %p35 = scmp.eq.s32.totalorder %s15, 0
    %p36 = por %p34, %p35
    %p37 = scmp.ne.s32.totalorder %s23, %s24
    %p38 = scmp.eq.s32.totalorder %s16, 1
    %p39 = por %p37, %p38
    %p41 = scmp.ne.s32.totalorder %s24, %s40
    %p42 = scmp.eq.s32.totalorder %s16, 0
    %p43 = por %p41, %p42
    %s45 = sadd.s32 %s44, 1
    %p48 = scmp.eq.s32.totalorder %s10, 1
    %p49 = scmp.ne.s32.totalorder %s44, %s46
    %p50 = scmp.eq.s32.totalorder %s10, 0
    %p51 = por %p49, %p50
    %p52 = scmp.ne.s32.totalorder %s44, %s46
    %p53 = scmp.eq.s32.totalorder %s15, 1
    %p54 = por %p52, %p53
    %p55 = scmp.ne.s32.totalorder %s46, %s47
    %p56 = scmp.eq.s32.totalorder %s15, 0
    %p57 = por %p55, %p56
    %p58 = scmp.ne.s32.totalorder %s46, %s47
    %p59 = scmp.eq.s32.totalorder %s16, 1
    %p60 = por %p58, %p59
    %p62 = scmp.ne.s32.totalorder %s47, %s61
    %p63 = scmp.eq.s32.totalorder %s16, 0
    %p64 = por %p62, %p63
    %s66 = sadd.s32 %s65, 1
    %p69 = scmp.eq.s32.totalorder %s10, 1
    %p70 = scmp.ne.s32.totalorder %s65, %s67
    %p71 = scmp.eq.s32.totalorder %s10, 0
    %p72 = por %p70, %p71
    %p73 = scmp.ne.s32.totalorder %s65, %s67
    %p74 = scmp.eq.s32.totalorder %s15, 1
    %p75 = por %p73, %p74
    %p76 = scmp.ne.s32.totalorder %s67, %s68
    %p77 = scmp.eq.s32.totalorder %s15, 0
    %p78 = por %p76, %p77
    %p79 = scmp.ne.s32.totalorder %s67, %s68
    %p80 = scmp.eq.s32.totalorder %s16, 1
    %p81 = por %p79, %p80
    %p83 = scmp.ne.s32.totalorder %s68, %s82
    %p84 = scmp.eq.s32.totalorder %s16, 0
    %p85 = por %p83, %p84
    %s86 = ssub.s32 %s10, %s17
    %p87 = scmp.eq.s32.totalorder %s86, 0
    %s89 = sadd.s32 %s88, 1
    %s90 = scalar_select %p87, %s88, %s89
    %p93 = pneg %p87
    %p94 = scmp.eq.s32.totalorder %s10, 1
    %p95 = por %p93, %p94
    %p96 = scmp.ne.s32.totalorder %s88, %s91
    %p97 = scmp.eq.s32.totalorder %s10, 0
    %p98 = por %p96, %p97
    %p99 = scmp.ne.s32.totalorder %s88, %s91
    %p100 = scmp.eq.s32.totalorder %s15, 1
    %p101 = por %p99, %p100
    %p102 = scmp.ne.s32.totalorder %s91, %s92
    %p103 = scmp.eq.s32.totalorder %s15, 0
    %p104 = por %p102, %p103
    %p105 = scmp.ne.s32.totalorder %s91, %s92
    %p106 = scmp.eq.s32.totalorder %s16, 1
    %p107 = por %p105, %p106
    %p109 = scmp.ne.s32.totalorder %s92, %s108
    %p110 = scmp.eq.s32.totalorder %s16, 0
    %p111 = por %p109, %p110
    %s112 = ssub.s32 %s10, %s17
    %p113 = scmp.eq.s32.totalorder %s112, 0
    %s115 = sadd.s32 %s114, 1
    %s116 = scalar_select %p113, %s114, %s115
    %p119 = pneg %p113
    %p120 = scmp.eq.s32.totalorder %s10, 1
    %p121 = por %p119, %p120
    %p122 = scmp.ne.s32.totalorder %s114, %s117
    %p123 = scmp.eq.s32.totalorder %s10, 0
    %p124 = por %p122, %p123
    %p125 = scmp.ne.s32.totalorder %s114, %s117
    %p126 = scmp.eq.s32.totalorder %s15, 1
    %p127 = por %p125, %p126
    %p128 = scmp.ne.s32.totalorder %s117, %s118
    %p129 = scmp.eq.s32.totalorder %s15, 0
    %p130 = por %p128, %p129
    %p131 = scmp.ne.s32.totalorder %s117, %s118
    %p132 = scmp.eq.s32.totalorder %s16, 1
    %p133 = por %p131, %p132
    %p135 = scmp.ne.s32.totalorder %s118, %s134
    %p136 = scmp.eq.s32.totalorder %s16, 0
    %p137 = por %p135, %p136
    %p138 = scmp.le.s32.totalorder 1, %s10
    %p139 = scmp.lt.s32.totalorder %s10, 3
    %p140 = pnand %p138, %p139
    %p141 = pneg %p140
    // Predicated region
    $region9: #{_lambda_.5} parent=5 // pred_check
      _
    $region10: #{_lambda_.5} parent=5 // pred_check_branch
      %143 = sbr.rel (%p140) target = $region12
    $region11: #{_lambda_.5} parent=5 // pred_region
      %s144 = ssub.s32 %s10, 1
      // Predicated region
      $region13: #{_lambda_.5} parent=11 // pred_check
        %p145 = pneg %p57
      $region14: #{_lambda_.5} parent=11 // pred_check_branch
        %147 = sbr.rel (%p145) target = $region16
      $region15: #{_lambda_.5} parent=11 // pred_region
        _
      $region16: #{_lambda_.5} parent=11 // pred_fallthru
        _
      // Predicated region
      $region17: #{_lambda_.5} parent=11 // pred_check
        %p148 = pneg %p78
      $region18: #{_lambda_.5} parent=11 // pred_check_branch
        %150 = sbr.rel (%p148) target = $region20
      $region19: #{_lambda_.5} parent=11 // pred_region
        _
      $region20: #{_lambda_.5} parent=11 // pred_fallthru
        _
    $region12: #{_lambda_.5} parent=5 // pred_fallthru
      _
    %p151 = scmp.lt.s32.totalorder %s10, 2
    // Predicated region
    $region21: #{_lambda_.5} parent=5 // pred_check
      %p152 = pneg %p151
    $region22: #{_lambda_.5} parent=5 // pred_check_branch
      %154 = sbr.rel (%p152) target = $region24
    $region23: #{_lambda_.5} parent=5 // pred_region
      // Predicated region
      $region25: #{_lambda_.5} parent=23 // pred_check
        %p155 = pneg %p30
      $region26: #{_lambda_.5} parent=23 // pred_check_branch
        %157 = sbr.rel (%p155) target = $region28
      $region27: #{_lambda_.5} parent=23 // pred_region
        %p158 = scmp.lt.s32.totalorder %s10, 1
        %s159 = scalar_select %p158, %s10, 1
        %s160 = smul.addr %s159, 32
        %s161 = smul.addr %s160, 4
        %s162 = scalar_lea.vmem %s0, %s161
      $region28: #{_lambda_.5} parent=23 // pred_fallthru
        _
      // Predicated region
      $region29: #{_lambda_.5} parent=23 // pred_check
        %p163 = pneg %p98
      $region30: #{_lambda_.5} parent=23 // pred_check_branch
        %165 = sbr.rel (%p163) target = $region32
      $region31: #{_lambda_.5} parent=23 // pred_region
        %p166 = scmp.lt.s32.totalorder %s10, 1
        %s167 = scalar_select %p166, %s10, 1
        %s168 = smul.addr %s167, 32
        %s169 = smul.addr %s168, 8
        %s170 = scalar_lea.vmem %s3, %s169
      $region32: #{_lambda_.5} parent=23 // pred_fallthru
        _
    $region24: #{_lambda_.5} parent=5 // pred_fallthru
      _
    %p171 = scmp.le.s32.totalorder 1, %s10
    %p172 = scmp.lt.s32.totalorder %s10, 3
    %p173 = pnand %p171, %p172
    %p174 = pneg %p173
    // Predicated region
    $region33: #{_lambda_.5} parent=5 // pred_check
      _
    $region34: #{_lambda_.5} parent=5 // pred_check_branch
      %176 = sbr.rel (%p173) target = $region36
    $region35: #{_lambda_.5} parent=5 // pred_region
      %s177 = ssub.s32 %s10, 1
      %p178 = scmp.lt.s32.totalorder %s15, 1
      %s179 = scalar_select %p178, %s15, 1
      %s180 = smul.addr %s179, 32
      %s181 = smul.addr %s180, 4
      %s182 = scalar_lea.vmem %s0, %s181
      %p183 = pneg %p36
      %p184 = pneg %p33
      %p185 = pneg %p57
      %p186 = pneg %p54
      %p187 = pneg %p78
      %p188 = pneg %p75
      %p189 = scmp.lt.s32.totalorder %s15, 1
      %s190 = scalar_select %p189, %s15, 1
      %s191 = smul.addr %s190, 32
      %s192 = smul.addr %s191, 8
      %s193 = scalar_lea.vmem %s3, %s192
      %p194 = pneg %p104
      %p195 = pneg %p101
      %p196 = pneg %p130
      %p197 = pneg %p127
      %p198 = scmp.lt.s32.totalorder %s15, 1
      %s199 = scalar_select %p198, %s15, 1
      %s200 = smul.addr %s199, 32
      %s201 = smul.addr %s200, 8
      %s202 = scalar_lea.vmem %s4, %s201
      %p203 = scmp.lt.s32.totalorder %s15, 1
      %s204 = scalar_select %p203, %s15, 1
      %s205 = smul.addr %s204, 32
      %s206 = smul.addr %s205, 4
      %s207 = scalar_lea.vmem %s0, %s206
      %p208 = scmp.lt.s32.totalorder %s15, 1
      %s209 = scalar_select %p208, %s15, 1
      %s210 = smul.addr %s209, 32
      %s211 = smul.addr %s210, 8
      %s212 = scalar_lea.vmem %s3, %s211
      %p213 = scmp.lt.s32.totalorder %s15, 1
      %s214 = scalar_select %p213, %s15, 1
      %s215 = smul.addr %s214, 32
      %s216 = smul.addr %s215, 8
      %s217 = scalar_lea.vmem %s4, %s216
      %v218 = vld [vmem:[%s207] sm:$0xf]
      %v219 = vld [vmem:[%s207 + $0x4] sm:$0xf]
      %v220 = vld [vmem:[%s207 + $0x8] sm:$0xf]
      %v221 = vld [vmem:[%s207 + $0xc] sm:$0xf]
      %v222 = vld [vmem:[%s207 + $0x10] sm:$0xf]
      %v223 = vld [vmem:[%s207 + $0x14] sm:$0xf]
      %v224 = vld [vmem:[%s207 + $0x18] sm:$0xf]
      %v225 = vld [vmem:[%s207 + $0x1c] sm:$0xf]
      %v226 = vld [vmem:[%s207 + $0x20] sm:$0xf]
      %v227 = vld [vmem:[%s207 + $0x24] sm:$0xf]
      %v228 = vld [vmem:[%s207 + $0x28] sm:$0xf]
      %v229 = vld [vmem:[%s207 + $0x2c] sm:$0xf]
      %v230 = vld [vmem:[%s207 + $0x30] sm:$0xf]
      %v231 = vld [vmem:[%s207 + $0x34] sm:$0xf]
      %v232 = vld [vmem:[%s207 + $0x38] sm:$0xf]
      %v233 = vld [vmem:[%s207 + $0x3c] sm:$0xf]
      %v234 = vld [vmem:[%s207 + $0x40] sm:$0xf]
      %v235 = vld [vmem:[%s207 + $0x44] sm:$0xf]
      %v236 = vld [vmem:[%s207 + $0x48] sm:$0xf]
      %v237 = vld [vmem:[%s207 + $0x4c] sm:$0xf]
      %v238 = vld [vmem:[%s207 + $0x50] sm:$0xf]
      %v239 = vld [vmem:[%s207 + $0x54] sm:$0xf]
      %v240 = vld [vmem:[%s207 + $0x58] sm:$0xf]
      %v241 = vld [vmem:[%s207 + $0x5c] sm:$0xf]
      %v242 = vld [vmem:[%s207 + $0x60] sm:$0xf]
      %v243 = vld [vmem:[%s207 + $0x64] sm:$0xf]
      %v244 = vld [vmem:[%s207 + $0x68] sm:$0xf]
      %v245 = vld [vmem:[%s207 + $0x6c] sm:$0xf]
      %v246 = vld [vmem:[%s207 + $0x70] sm:$0xf]
      %v247 = vld [vmem:[%s207 + $0x74] sm:$0xf]
      %v248 = vld [vmem:[%s207 + $0x78] sm:$0xf]
      %v249 = vld [vmem:[%s207 + $0x7c] sm:$0xf]
      %v250 = vunpack.c.l.bf16 %v218
      %v251 = vunpack.c.l.bf16 %v219
      %v252 = vunpack.c.l.bf16 %v220
      %v253 = vunpack.c.l.bf16 %v221
      %v254 = vunpack.c.l.bf16 %v222
      %v255 = vunpack.c.l.bf16 %v223
      %v256 = vunpack.c.l.bf16 %v224
      %v257 = vunpack.c.l.bf16 %v225
      %v258 = vunpack.c.l.bf16 %v226
      %v259 = vunpack.c.l.bf16 %v227
      %v260 = vunpack.c.l.bf16 %v228
      %v261 = vunpack.c.l.bf16 %v229
      %v262 = vunpack.c.l.bf16 %v230
      %v263 = vunpack.c.l.bf16 %v231
      %v264 = vunpack.c.l.bf16 %v232
      %v265 = vunpack.c.l.bf16 %v233
      %v266 = vunpack.c.l.bf16 %v234
      %v267 = vunpack.c.l.bf16 %v235
      %v268 = vunpack.c.l.bf16 %v236
      %v269 = vunpack.c.l.bf16 %v237
      %v270 = vunpack.c.l.bf16 %v238
      %v271 = vunpack.c.l.bf16 %v239
      %v272 = vunpack.c.l.bf16 %v240
      %v273 = vunpack.c.l.bf16 %v241
      %v274 = vunpack.c.l.bf16 %v242
      %v275 = vunpack.c.l.bf16 %v243
      %v276 = vunpack.c.l.bf16 %v244
      %v277 = vunpack.c.l.bf16 %v245
      %v278 = vunpack.c.l.bf16 %v246
      %v279 = vunpack.c.l.bf16 %v247
      %v280 = vunpack.c.l.bf16 %v248
      %v281 = vunpack.c.l.bf16 %v249
      %v282 = vld [vmem:[%s1] sm:$0x1]
      %v284 = vlaneseq
      %v285 = vshrl.u32 %v284, 7
      %v286 = vsub.s32 0, %v285
      %v287 = vrot.slane %v282, %v286
      %v289 = vmul.f32 %v250, %v287
      %v290 = vmul.f32 %v251, %v287
      %v291 = vmul.f32 %v252, %v287
      %v292 = vmul.f32 %v253, %v287
      %v293 = vmul.f32 %v254, %v287
      %v294 = vmul.f32 %v255, %v287
      %v295 = vmul.f32 %v256, %v287
      %v296 = vmul.f32 %v257, %v287
      %v297 = vmul.f32 %v258, %v287
      %v298 = vmul.f32 %v259, %v287
      %v299 = vmul.f32 %v260, %v287
      %v300 = vmul.f32 %v261, %v287
      %v301 = vmul.f32 %v262, %v287
      %v302 = vmul.f32 %v263, %v287
      %v303 = vmul.f32 %v264, %v287
      %v304 = vmul.f32 %v265, %v287
      %v305 = vmul.f32 %v266, %v287
      %v306 = vmul.f32 %v267, %v287
      %v307 = vmul.f32 %v268, %v287
      %v308 = vmul.f32 %v269, %v287
      %v309 = vmul.f32 %v270, %v287
      %v310 = vmul.f32 %v271, %v287
      %v311 = vmul.f32 %v272, %v287
      %v312 = vmul.f32 %v273, %v287
      %v313 = vmul.f32 %v274, %v287
      %v314 = vmul.f32 %v275, %v287
      %v315 = vmul.f32 %v276, %v287
      %v316 = vmul.f32 %v277, %v287
      %v317 = vmul.f32 %v278, %v287
      %v318 = vmul.f32 %v279, %v287
      %v319 = vmul.f32 %v280, %v287
      %v320 = vmul.f32 %v281, %v287
      %v321 = vld [vmem:[%s2] sm:$0x1]
      %v323 = vlaneseq
      %v324 = vshrl.u32 %v323, 7
      %v325 = vsub.s32 0, %v324
      %v326 = vrot.slane %v321, %v325
      %v328 = vadd.f32 %v289, %v326
      %v329 = vadd.f32 %v290, %v326
      %v330 = vadd.f32 %v291, %v326
      %v331 = vadd.f32 %v292, %v326
      %v332 = vadd.f32 %v293, %v326
      %v333 = vadd.f32 %v294, %v326
      %v334 = vadd.f32 %v295, %v326
      %v335 = vadd.f32 %v296, %v326
      %v336 = vadd.f32 %v297, %v326
      %v337 = vadd.f32 %v298, %v326
      %v338 = vadd.f32 %v299, %v326
      %v339 = vadd.f32 %v300, %v326
      %v340 = vadd.f32 %v301, %v326
      %v341 = vadd.f32 %v302, %v326
      %v342 = vadd.f32 %v303, %v326
      %v343 = vadd.f32 %v304, %v326
      %v344 = vadd.f32 %v305, %v326
      %v345 = vadd.f32 %v306, %v326
      %v346 = vadd.f32 %v307, %v326
      %v347 = vadd.f32 %v308, %v326
      %v348 = vadd.f32 %v309, %v326
      %v349 = vadd.f32 %v310, %v326
      %v350 = vadd.f32 %v311, %v326
      %v351 = vadd.f32 %v312, %v326
      %v352 = vadd.f32 %v313, %v326
      %v353 = vadd.f32 %v314, %v326
      %v354 = vadd.f32 %v315, %v326
      %v355 = vadd.f32 %v316, %v326
      %v356 = vadd.f32 %v317, %v326
      %v357 = vadd.f32 %v318, %v326
      %v358 = vadd.f32 %v319, %v326
      %v359 = vadd.f32 %v320, %v326
      %v360 = vld [vmem:[%s212] sm:$0xff]
      %v361 = vld [vmem:[%s212 + $0x8] sm:$0xff]
      %v362 = vld [vmem:[%s212 + $0x10] sm:$0xff]
      %v363 = vld [vmem:[%s212 + $0x18] sm:$0xff]
      %v364 = vld [vmem:[%s212 + $0x20] sm:$0xff]
      %v365 = vld [vmem:[%s212 + $0x28] sm:$0xff]
      %v366 = vld [vmem:[%s212 + $0x30] sm:$0xff]
      %v367 = vld [vmem:[%s212 + $0x38] sm:$0xff]
      %v368 = vld [vmem:[%s212 + $0x40] sm:$0xff]
      %v369 = vld [vmem:[%s212 + $0x48] sm:$0xff]
      %v370 = vld [vmem:[%s212 + $0x50] sm:$0xff]
      %v371 = vld [vmem:[%s212 + $0x58] sm:$0xff]
      %v372 = vld [vmem:[%s212 + $0x60] sm:$0xff]
      %v373 = vld [vmem:[%s212 + $0x68] sm:$0xff]
      %v374 = vld [vmem:[%s212 + $0x70] sm:$0xff]
      %v375 = vld [vmem:[%s212 + $0x78] sm:$0xff]
      %v376 = vld [vmem:[%s212 + $0x80] sm:$0xff]
      %v377 = vld [vmem:[%s212 + $0x88] sm:$0xff]
      %v378 = vld [vmem:[%s212 + $0x90] sm:$0xff]
      %v379 = vld [vmem:[%s212 + $0x98] sm:$0xff]
      %v380 = vld [vmem:[%s212 + $0xa0] sm:$0xff]
      %v381 = vld [vmem:[%s212 + $0xa8] sm:$0xff]
      %v382 = vld [vmem:[%s212 + $0xb0] sm:$0xff]
      %v383 = vld [vmem:[%s212 + $0xb8] sm:$0xff]
      %v384 = vld [vmem:[%s212 + $0xc0] sm:$0xff]
      %v385 = vld [vmem:[%s212 + $0xc8] sm:$0xff]
      %v386 = vld [vmem:[%s212 + $0xd0] sm:$0xff]
      %v387 = vld [vmem:[%s212 + $0xd8] sm:$0xff]
      %v388 = vld [vmem:[%s212 + $0xe0] sm:$0xff]
      %v389 = vld [vmem:[%s212 + $0xe8] sm:$0xff]
      %v390 = vld [vmem:[%s212 + $0xf0] sm:$0xff]
      %v391 = vld [vmem:[%s212 + $0xf8] sm:$0xff]
      %v392 = vadd.f32 %v328, %v360
      %v393 = vadd.f32 %v329, %v361
      %v394 = vadd.f32 %v330, %v362
      %v395 = vadd.f32 %v331, %v363
      %v396 = vadd.f32 %v332, %v364
      %v397 = vadd.f32 %v333, %v365
      %v398 = vadd.f32 %v334, %v366
      %v399 = vadd.f32 %v335, %v367
      %v400 = vadd.f32 %v336, %v368
      %v401 = vadd.f32 %v337, %v369
      %v402 = vadd.f32 %v338, %v370
      %v403 = vadd.f32 %v339, %v371
      %v404 = vadd.f32 %v340, %v372
      %v405 = vadd.f32 %v341, %v373
      %v406 = vadd.f32 %v342, %v374
      %v407 = vadd.f32 %v343, %v375
      %v408 = vadd.f32 %v344, %v376
      %v409 = vadd.f32 %v345, %v377
      %v410 = vadd.f32 %v346, %v378
      %v411 = vadd.f32 %v347, %v379
      %v412 = vadd.f32 %v348, %v380
      %v413 = vadd.f32 %v349, %v381
      %v414 = vadd.f32 %v350, %v382
      %v415 = vadd.f32 %v351, %v383
      %v416 = vadd.f32 %v352, %v384
      %v417 = vadd.f32 %v353, %v385
      %v418 = vadd.f32 %v354, %v386
      %v419 = vadd.f32 %v355, %v387
      %v420 = vadd.f32 %v356, %v388
      %v421 = vadd.f32 %v357, %v389
      %v422 = vadd.f32 %v358, %v390
      %v423 = vadd.f32 %v359, %v391
      %v424 = vmax.f32 %v392, 0.0
      %v425 = vmax.f32 %v393, 0.0
      %v426 = vmax.f32 %v394, 0.0
      %v427 = vmax.f32 %v395, 0.0
      %v428 = vmax.f32 %v396, 0.0
      %v429 = vmax.f32 %v397, 0.0
      %v430 = vmax.f32 %v398, 0.0
      %v431 = vmax.f32 %v399, 0.0
      %v432 = vmax.f32 %v400, 0.0
      %v433 = vmax.f32 %v401, 0.0
      %v434 = vmax.f32 %v402, 0.0
      %v435 = vmax.f32 %v403, 0.0
      %v436 = vmax.f32 %v404, 0.0
      %v437 = vmax.f32 %v405, 0.0
      %v438 = vmax.f32 %v406, 0.0
      %v439 = vmax.f32 %v407, 0.0
      %v440 = vmax.f32 %v408, 0.0
      %v441 = vmax.f32 %v409, 0.0
      %v442 = vmax.f32 %v410, 0.0
      %v443 = vmax.f32 %v411, 0.0
      %v444 = vmax.f32 %v412, 0.0
      %v445 = vmax.f32 %v413, 0.0
      %v446 = vmax.f32 %v414, 0.0
      %v447 = vmax.f32 %v415, 0.0
      %v448 = vmax.f32 %v416, 0.0
      %v449 = vmax.f32 %v417, 0.0
      %v450 = vmax.f32 %v418, 0.0
      %v451 = vmax.f32 %v419, 0.0
      %v452 = vmax.f32 %v420, 0.0
      %v453 = vmax.f32 %v421, 0.0
      %v454 = vmax.f32 %v422, 0.0
      %v455 = vmax.f32 %v423, 0.0
      %vm456 = vcmask 64512
      %457 = vst.msk [vmem:[%s217] sm:$0xff] %vm456, %v424
      %458 = vst.msk [vmem:[%s217 + $0x8] sm:$0xff] %vm456, %v425
      %459 = vst.msk [vmem:[%s217 + $0x10] sm:$0xff] %vm456, %v426
      %460 = vst.msk [vmem:[%s217 + $0x18] sm:$0xff] %vm456, %v427
      %461 = vst.msk [vmem:[%s217 + $0x20] sm:$0xff] %vm456, %v428
      %462 = vst.msk [vmem:[%s217 + $0x28] sm:$0xff] %vm456, %v429
      %463 = vst.msk [vmem:[%s217 + $0x30] sm:$0xff] %vm456, %v430
      %464 = vst.msk [vmem:[%s217 + $0x38] sm:$0xff] %vm456, %v431
      %465 = vst.msk [vmem:[%s217 + $0x40] sm:$0xff] %vm456, %v432
      %466 = vst.msk [vmem:[%s217 + $0x48] sm:$0xff] %vm456, %v433
      %467 = vst.msk [vmem:[%s217 + $0x50] sm:$0xff] %vm456, %v434
      %468 = vst.msk [vmem:[%s217 + $0x58] sm:$0xff] %vm456, %v435
      %469 = vst.msk [vmem:[%s217 + $0x60] sm:$0xff] %vm456, %v436
      %470 = vst.msk [vmem:[%s217 + $0x68] sm:$0xff] %vm456, %v437
      %471 = vst.msk [vmem:[%s217 + $0x70] sm:$0xff] %vm456, %v438
      %472 = vst.msk [vmem:[%s217 + $0x78] sm:$0xff] %vm456, %v439
      %473 = vst.msk [vmem:[%s217 + $0x80] sm:$0xff] %vm456, %v440
      %474 = vst.msk [vmem:[%s217 + $0x88] sm:$0xff] %vm456, %v441
      %475 = vst.msk [vmem:[%s217 + $0x90] sm:$0xff] %vm456, %v442
      %476 = vst.msk [vmem:[%s217 + $0x98] sm:$0xff] %vm456, %v443
      %477 = vst.msk [vmem:[%s217 + $0xa0] sm:$0xff] %vm456, %v444
      %478 = vst.msk [vmem:[%s217 + $0xa8] sm:$0xff] %vm456, %v445
      %479 = vst.msk [vmem:[%s217 + $0xb0] sm:$0xff] %vm456, %v446
      %480 = vst.msk [vmem:[%s217 + $0xb8] sm:$0xff] %vm456, %v447
      %481 = vst.msk [vmem:[%s217 + $0xc0] sm:$0xff] %vm456, %v448
      %482 = vst.msk [vmem:[%s217 + $0xc8] sm:$0xff] %vm456, %v449
      %483 = vst.msk [vmem:[%s217 + $0xd0] sm:$0xff] %vm456, %v450
      %484 = vst.msk [vmem:[%s217 + $0xd8] sm:$0xff] %vm456, %v451
      %485 = vst.msk [vmem:[%s217 + $0xe0] sm:$0xff] %vm456, %v452
      %486 = vst.msk [vmem:[%s217 + $0xe8] sm:$0xff] %vm456, %v453
      %487 = vst.msk [vmem:[%s217 + $0xf0] sm:$0xff] %vm456, %v454
      %488 = vst.msk [vmem:[%s217 + $0xf8] sm:$0xff] %vm456, %v455
      %p489 = scmp.lt.s32.totalorder %s15, 1
      %s490 = scalar_select %p489, %s15, 1
      %s491 = smul.addr %s490, 32
      %s492 = smul.addr %s491, 8
      %s493 = scalar_lea.vmem %s4, %s492
      // Predicated region
      $region37: #{_lambda_.5} parent=35 // pred_check
        %p494 = pneg %p127
      $region38: #{_lambda_.5} parent=35 // pred_check_branch
        %496 = sbr.rel (%p494) target = $region40
      $region39: #{_lambda_.5} parent=35 // pred_region
        _
      $region40: #{_lambda_.5} parent=35 // pred_fallthru
        _
    $region36: #{_lambda_.5} parent=5 // pred_fallthru
      _
    %p497 = scmp.le.s32.totalorder 2, %s10
    // Predicated region
    $region41: #{_lambda_.5} parent=5 // pred_check
      %p498 = pneg %p497
    $region42: #{_lambda_.5} parent=5 // pred_check_branch
      %500 = sbr.rel (%p498) target = $region44
    $region43: #{_lambda_.5} parent=5 // pred_region
      %s501 = ssub.s32 %s10, 2
      // Predicated region
      $region45: #{_lambda_.5} parent=43 // pred_check
        %p502 = pneg %p133
      $region46: #{_lambda_.5} parent=43 // pred_check_branch
        %504 = sbr.rel (%p502) target = $region48
      $region47: #{_lambda_.5} parent=43 // pred_region
        %p505 = scmp.lt.s32.totalorder %s16, 1
        %s506 = scalar_select %p505, %s16, 1
        %s507 = smul.addr %s506, 32
        %s508 = smul.addr %s507, 8
        %s509 = scalar_lea.vmem %s4, %s508
      $region48: #{_lambda_.5} parent=43 // pred_fallthru
        _
    $region44: #{_lambda_.5} parent=5 // pred_fallthru
      _
  $region6: #{_lambda_.5} parent=0 // loop_footer
    %s14 = sadd.s32 1, %s10
  $region7: #{_lambda_.5} parent=0 // loop_footer_branch
    %9 = sbr.rel target = $region3
  $region8: #{_lambda_.5} parent=0 // loop_exit
    _

// kernel: _lambda_.3
$region0: #{_lambda_.3}
  #allocation0 [shape = 'u32[]', space=smem, size = 0x4, offset = 0x4, fixed_abs, tag = 'smem constant byte address 0x4 - core index']
  #allocation1 [shape = 'u32[144,128]{1,0:T(1,128)}', space=vmem, size = 0x12000, scoped, tag = 'internal scratch']
  %s0 = inlined_call_operand.vmem [shape: bf16[2,18,18,8], index: 0, kind: input, shape index: {}]
  %s1 = inlined_call_operand.vmem [shape: bf16[9,8,8], index: 1, kind: input, shape index: {}]
  %s2 = inlined_call_operand.vmem [shape: bf16[2,16,16,8], index: 2, kind: output, shape index: {0}]
  %s3 = inlined_call_operand.vmem [shape: f32[2,1,8], index: 3, kind: output, shape index: {1}]
  %s4 = inlined_call_operand.vmem [shape: f32[2,1,8], index: 4, kind: output, shape index: {2}]
  %5 = xla_tuple %s2, %s3, %s4
  %s6 = sld [smem:[#allocation0]]
  $region61: #{_lambda_.3} parent=0
    _
  %s8 = ssub.s32 1, %s6
  %s9 = scalar_select 0, %s8, %s6
  loop: start=0, step=1, limit=6
  $region2: #{_lambda_.3} parent=0 // loop_pre_header
    _
  $region3: #{_lambda_.3} parent=0 // loop_header
    %s11 = sphi 0, %s15
    %p12 = scmp.ge.s32.totalorder %s11, 6
    %s18 = sphi 0, %s30
    %s19 = sphi 0, %s26
    %s20 = sphi 0, %s18
    %s21 = sphi 0, %s19
    %s22 = sphi 0, %s20
    %s23 = sphi 0, %s21
    %s33 = sphi 0, %s35
    %s36 = sphi 0, %s33
    %s37 = sphi 0, %s36
    %s53 = sphi 0, %s37
    %s57 = sphi 0, %s57
    %s59 = sphi 0, %s57
    %s60 = sphi 0, %s59
    %s74 = sphi 0, %s60
    %s82 = sphi 0, %s84
    %s85 = sphi 0, %s82
    %s86 = sphi 0, %s85
    %s102 = sphi 0, %s86
    %s108 = sphi 0, %s110
    %s111 = sphi 0, %s108
    %s112 = sphi 0, %s111
    %s128 = sphi 0, %s112
    %s134 = sphi 0, %s136
    %s137 = sphi 0, %s134
    %s138 = sphi 0, %s137
    %s154 = sphi 0, %s138
  $region4: #{_lambda_.3} parent=0 // loop_header_branch
    %14 = sbr.rel (%p12) target = $region8
  $region5: #{_lambda_.3} parent=0 // loop_body
    %s16 = ssub.s32 %s11, 1
    %s17 = ssub.s32 %s11, 2
    %s24 = sadd.s32 1, %s19
    %p25 = scmp.ge.s32.totalorder %s24, 2
    %s26 = scalar_select %p25, 0, %s24
    %s27 = sadd.s32 1, %s18
    %s28 = scalar_select %p25, %s27, %s18
    %p29 = scmp.ge.s32.totalorder %s28, 2
    %s30 = scalar_select %p29, 0, %s28
    %s31 = ssub.s32 %s18, %s30
    %p32 = scmp.eq.s32.totalorder %s31, 0
    %s34 = sadd.s32 %s33, 1
    %s35 = scalar_select %p32, %s33, %s34
    %p38 = pneg %p32
    %p39 = scmp.eq.s32.totalorder %s11, 3
    %p40 = por %p38, %p39
    %p41 = scmp.ne.s32.totalorder %s33, %s36
    %p42 = scmp.eq.s32.totalorder %s11, 0
    %p43 = por %p41, %p42
    %p44 = scmp.ne.s32.totalorder %s33, %s36
    %p45 = scmp.eq.s32.totalorder %s16, 3
    %p46 = por %p44, %p45
    %p47 = scmp.ne.s32.totalorder %s36, %s37
    %p48 = scmp.eq.s32.totalorder %s16, 0
    %p49 = por %p47, %p48
    %p50 = scmp.ne.s32.totalorder %s36, %s37
    %p51 = scmp.eq.s32.totalorder %s17, 3
    %p52 = por %p50, %p51
    %p54 = scmp.ne.s32.totalorder %s37, %s53
    %p55 = scmp.eq.s32.totalorder %s17, 0
    %p56 = por %p54, %p55
    %s58 = sadd.s32 %s57, 1
    %p61 = scmp.eq.s32.totalorder %s11, 3
    %p62 = scmp.ne.s32.totalorder %s57, %s59
    %p63 = scmp.eq.s32.totalorder %s11, 0
    %p64 = por %p62, %p63
    %p65 = scmp.ne.s32.totalorder %s57, %s59
    %p66 = scmp.eq.s32.totalorder %s16, 3
    %p67 = por %p65, %p66
    %p68 = scmp.ne.s32.totalorder %s59, %s60
    %p69 = scmp.eq.s32.totalorder %s16, 0
    %p70 = por %p68, %p69
    %p71 = scmp.ne.s32.totalorder %s59, %s60
    %p72 = scmp.eq.s32.totalorder %s17, 3
    %p73 = por %p71, %p72
    %p75 = scmp.ne.s32.totalorder %s60, %s74
    %p76 = scmp.eq.s32.totalorder %s17, 0
    %p77 = por %p75, %p76
    %s78 = ssub.s32 %s18, %s30
    %s79 = ssub.s32 %s19, %s26
    %s80 = sor.u32 %s78, %s79
    %p81 = scmp.eq.s32.totalorder %s80, 0
    %s83 = sadd.s32 %s82, 1
    %s84 = scalar_select %p81, %s82, %s83
    %p87 = pneg %p81
    %p88 = scmp.eq.s32.totalorder %s11, 3
    %p89 = por %p87, %p88
    %p90 = scmp.ne.s32.totalorder %s82, %s85
    %p91 = scmp.eq.s32.totalorder %s11, 0
    %p92 = por %p90, %p91
    %p93 = scmp.ne.s32.totalorder %s82, %s85
    %p94 = scmp.eq.s32.totalorder %s16, 3
    %p95 = por %p93, %p94
    %p96 = scmp.ne.s32.totalorder %s85, %s86
    %p97 = scmp.eq.s32.totalorder %s16, 0
    %p98 = por %p96, %p97
    %p99 = scmp.ne.s32.totalorder %s85, %s86
    %p100 = scmp.eq.s32.totalorder %s17, 3
    %p101 = por %p99, %p100
    %p103 = scmp.ne.s32.totalorder %s86, %s102
    %p104 = scmp.eq.s32.totalorder %s17, 0
    %p105 = por %p103, %p104
    %s106 = ssub.s32 %s18, %s30
    %p107 = scmp.eq.s32.totalorder %s106, 0
    %s109 = sadd.s32 %s108, 1
    %s110 = scalar_select %p107, %s108, %s109
    %p113 = pneg %p107
    %p114 = scmp.eq.s32.totalorder %s11, 3
    %p115 = por %p113, %p114
    %p116 = scmp.ne.s32.totalorder %s108, %s111
    %p117 = scmp.eq.s32.totalorder %s11, 0
    %p118 = por %p116, %p117
    %p119 = scmp.ne.s32.totalorder %s108, %s111
    %p120 = scmp.eq.s32.totalorder %s16, 3
    %p121 = por %p119, %p120
    %p122 = scmp.ne.s32.totalorder %s111, %s112
    %p123 = scmp.eq.s32.totalorder %s16, 0
    %p124 = por %p122, %p123
    %p125 = scmp.ne.s32.totalorder %s111, %s112
    %p126 = scmp.eq.s32.totalorder %s17, 3
    %p127 = por %p125, %p126
    %p129 = scmp.ne.s32.totalorder %s112, %s128
    %p130 = scmp.eq.s32.totalorder %s17, 0
    %p131 = por %p129, %p130
    %s132 = ssub.s32 %s18, %s30
    %p133 = scmp.eq.s32.totalorder %s132, 0
    %s135 = sadd.s32 %s134, 1
    %s136 = scalar_select %p133, %s134, %s135
    %p139 = pneg %p133
    %p140 = scmp.eq.s32.totalorder %s11, 3
    %p141 = por %p139, %p140
    %p142 = scmp.ne.s32.totalorder %s134, %s137
    %p143 = scmp.eq.s32.totalorder %s11, 0
    %p144 = por %p142, %p143
    %p145 = scmp.ne.s32.totalorder %s134, %s137
    %p146 = scmp.eq.s32.totalorder %s16, 3
    %p147 = por %p145, %p146
    %p148 = scmp.ne.s32.totalorder %s137, %s138
    %p149 = scmp.eq.s32.totalorder %s16, 0
    %p150 = por %p148, %p149
    %p151 = scmp.ne.s32.totalorder %s137, %s138
    %p152 = scmp.eq.s32.totalorder %s17, 3
    %p153 = por %p151, %p152
    %p155 = scmp.ne.s32.totalorder %s138, %s154
    %p156 = scmp.eq.s32.totalorder %s17, 0
    %p157 = por %p155, %p156
    %p158 = scmp.le.s32.totalorder 1, %s11
    %p159 = scmp.lt.s32.totalorder %s11, 5
    %p160 = pnand %p158, %p159
    %p161 = pneg %p160
    // Predicated region
    $region9: #{_lambda_.3} parent=5 // pred_check
      _
    $region10: #{_lambda_.3} parent=5 // pred_check_branch
      %163 = sbr.rel (%p160) target = $region12
    $region11: #{_lambda_.3} parent=5 // pred_region
      %s164 = ssub.s32 %s11, 1
      // Predicated region
      $region13: #{_lambda_.3} parent=11 // pred_check
        %p165 = pneg %p70
      $region14: #{_lambda_.3} parent=11 // pred_check_branch
        %167 = sbr.rel (%p165) target = $region16
      $region15: #{_lambda_.3} parent=11 // pred_region
        _
      $region16: #{_lambda_.3} parent=11 // pred_fallthru
        _
    $region12: #{_lambda_.3} parent=5 // pred_fallthru
      _
    %p168 = scmp.lt.s32.totalorder %s11, 4
    // Predicated region
    $region17: #{_lambda_.3} parent=5 // pred_check
      %p169 = pneg %p168
    $region18: #{_lambda_.3} parent=5 // pred_check_branch
      %171 = sbr.rel (%p169) target = $region20
    $region19: #{_lambda_.3} parent=5 // pred_region
      // Predicated region
      $region21: #{_lambda_.3} parent=19 // pred_check
        %p172 = pneg %p43
      $region22: #{_lambda_.3} parent=19 // pred_check_branch
        %174 = sbr.rel (%p172) target = $region24
      $region23: #{_lambda_.3} parent=19 // pred_region
        %p175 = scmp.lt.s32.totalorder %s18, 1
        %s176 = scalar_select %p175, %s18, 1
        %s177 = smul.addr %s176, 54
        %s178 = smul.addr %s177, 4
        %s179 = scalar_lea.vmem %s0, %s178
      $region24: #{_lambda_.3} parent=19 // pred_fallthru
        _
    $region20: #{_lambda_.3} parent=5 // pred_fallthru
      _
    %p180 = scmp.le.s32.totalorder 1, %s11
    %p181 = scmp.lt.s32.totalorder %s11, 5
    %p182 = pnand %p180, %p181
    %p183 = pneg %p182
    // Predicated region
    $region25: #{_lambda_.3} parent=5 // pred_check
      _
    $region26: #{_lambda_.3} parent=5 // pred_check_branch
      %185 = sbr.rel (%p182) target = $region28
    $region27: #{_lambda_.3} parent=5 // pred_region
      %s186 = ssub.s32 %s11, 1
      %p187 = scmp.lt.s32.totalorder %s20, 1
      %s188 = scalar_select %p187, %s20, 1
      %s189 = smul.addr %s188, 54
      %s190 = smul.addr %s189, 4
      %s191 = scalar_lea.vmem %s0, %s190
      %p192 = pneg %p49
      %p193 = pneg %p46
      %p194 = pneg %p70
      %p195 = pneg %p67
      %p196 = pneg %p98
      %p197 = pneg %p95
      %s198 = smul.u32 8, %s21
      %p199 = scmp.lt.s32.totalorder %s20, 1
      %s200 = scalar_select %p199, %s20, 1
      %p201 = scmp.lt.s32.totalorder %s198, 15
      %s202 = scalar_select %p201, %s198, 15
      %s203 = smul.addr %s202, 2
      %s204 = smul.addr %s200, 32
      %s205 = sadd.s32 %s203, %s204
      %s206 = smul.addr %s205, 4
      %s207 = scalar_lea.vmem %s2, %s206
      %p208 = pneg %p124
      %p209 = pneg %p121
      %p210 = scmp.lt.s32.totalorder %s20, 1
      %s211 = scalar_select %p210, %s20, 1
      %s212 = scalar_lea.vmem %s3, %s211
      %p213 = pneg %p150
      %p214 = pneg %p147
      %p215 = scmp.lt.s32.totalorder %s20, 1
      %s216 = scalar_select %p215, %s20, 1
      %s217 = scalar_lea.vmem %s4, %s216
      %p218 = scmp.lt.s32.totalorder %s20, 1
      %s219 = scalar_select %p218, %s20, 1
      %s220 = smul.addr %s219, 54
      %s221 = smul.addr %s220, 4
      %s222 = scalar_lea.vmem %s0, %s221
      %s223 = smul.u32 8, %s21
      %p224 = scmp.lt.s32.totalorder %s20, 1
      %s225 = scalar_select %p224, %s20, 1
      %p226 = scmp.lt.s32.totalorder %s223, 15
      %s227 = scalar_select %p226, %s223, 15
      %s228 = smul.addr %s227, 2
      %s229 = smul.addr %s225, 32
      %s230 = sadd.s32 %s228, %s229
      %s231 = smul.addr %s230, 4
      %s232 = scalar_lea.vmem %s2, %s231
      %s233 = smul.u32 8, %s21
      %p234 = scmp.lt.s32.totalorder %s20, 1
      %s235 = scalar_select %p234, %s20, 1
      %s236 = scalar_lea.vmem %s3, %s235
      %p237 = scmp.lt.s32.totalorder %s20, 1
      %s238 = scalar_select %p237, %s20, 1
      %s239 = scalar_lea.vmem %s4, %s238
      %s241 = smul.u32 %s21, 8
      %s242 = smul.u32 %s241, 3
      %s243 = smul.addr %s242, 4
      %s244 = scalar_lea.vmem %s222, %s243
      %v245 = vld [vmem:[%s244] sm:$0xf]
      %v246 = vld [vmem:[%s244 + $0x4] sm:$0xf]
      %v247 = vld [vmem:[%s244 + $0x8] sm:$0x1]
      %v248 = vld [vmem:[%s244 + $0xc] sm:$0xf]
      %v249 = vld [vmem:[%s244 + $0x10] sm:$0xf]
      %v250 = vld [vmem:[%s244 + $0x14] sm:$0x1]
      %v251 = vld [vmem:[%s244 + $0x18] sm:$0xf]
      %v252 = vld [vmem:[%s244 + $0x1c] sm:$0xf]
      %v253 = vld [vmem:[%s244 + $0x20] sm:$0x1]
      %v254 = vld [vmem:[%s244 + $0x24] sm:$0xf]
      %v255 = vld [vmem:[%s244 + $0x28] sm:$0xf]
      %v256 = vld [vmem:[%s244 + $0x2c] sm:$0x1]
      %v257 = vld [vmem:[%s244 + $0x30] sm:$0xf]
      %v258 = vld [vmem:[%s244 + $0x34] sm:$0xf]
      %v259 = vld [vmem:[%s244 + $0x38] sm:$0x1]
      %v260 = vld [vmem:[%s244 + $0x3c] sm:$0xf]
      %v261 = vld [vmem:[%s244 + $0x40] sm:$0xf]
      %v262 = vld [vmem:[%s244 + $0x44] sm:$0x1]
      %v263 = vld [vmem:[%s244 + $0x48] sm:$0xf]
      %v264 = vld [vmem:[%s244 + $0x4c] sm:$0xf]
      %v265 = vld [vmem:[%s244 + $0x50] sm:$0x1]
      %v266 = vld [vmem:[%s244 + $0x54] sm:$0xf]
      %v267 = vld [vmem:[%s244 + $0x58] sm:$0xf]
      %v268 = vld [vmem:[%s244 + $0x5c] sm:$0x1]
      %v269 = vld [vmem:[%s244 + $0x60] sm:$0xf]
      %v270 = vld [vmem:[%s244 + $0x64] sm:$0xf]
      %v271 = vld [vmem:[%s244 + $0x68] sm:$0x1]
      %v272 = vld [vmem:[%s244 + $0x6c] sm:$0xf]
      %v273 = vld [vmem:[%s244 + $0x70] sm:$0xf]
      %v274 = vld [vmem:[%s244 + $0x74] sm:$0x1]
      %v275 = vunpack.c.l.bf16 %v245
      %v276 = vunpack.c.l.bf16 %v246
      %v277 = vunpack.c.l.bf16 %v247
      %v278 = vunpack.c.l.bf16 %v248
      %v279 = vunpack.c.l.bf16 %v249
      %v280 = vunpack.c.l.bf16 %v250
      %v281 = vunpack.c.l.bf16 %v251
      %v282 = vunpack.c.l.bf16 %v252
      %v283 = vunpack.c.l.bf16 %v253
      %v284 = vunpack.c.l.bf16 %v254
      %v285 = vunpack.c.l.bf16 %v255
      %v286 = vunpack.c.l.bf16 %v256
      %v287 = vunpack.c.l.bf16 %v257
      %v288 = vunpack.c.l.bf16 %v258
      %v289 = vunpack.c.l.bf16 %v259
      %v290 = vunpack.c.l.bf16 %v260
      %v291 = vunpack.c.l.bf16 %v261
      %v292 = vunpack.c.l.bf16 %v262
      %v293 = vunpack.c.l.bf16 %v263
      %v294 = vunpack.c.l.bf16 %v264
      %v295 = vunpack.c.l.bf16 %v265
      %v296 = vunpack.c.l.bf16 %v266
      %v297 = vunpack.c.l.bf16 %v267
      %v298 = vunpack.c.l.bf16 %v268
      %v299 = vunpack.c.l.bf16 %v269
      %v300 = vunpack.c.l.bf16 %v270
      %v301 = vunpack.c.l.bf16 %v271
      %v302 = vunpack.c.l.bf16 %v272
      %v303 = vunpack.c.l.bf16 %v273
      %v304 = vunpack.c.l.bf16 %v274
      %v305 = vpack.c.bf16 %v276, %v275
      %v306 = vpack.c.bf16 %v279, %v278
      %v307 = vpack.c.bf16 %v282, %v281
      %v308 = vpack.c.bf16 %v285, %v284
      %v309 = vpack.c.bf16 %v288, %v287
      %v310 = vpack.c.bf16 %v291, %v290
      %v311 = vpack.c.bf16 %v294, %v293
      %v312 = vpack.c.bf16 %v297, %v296
      %v313 = vld [vmem:[%s1] sm:$0xf]
      %vm338 = vcmask 1046528
      %v339 = vrot.slane %v275, 1
      %v340 = vrot.slane %v276, 1
      %v341 = vsel %vm338, %v339, %v340
      %v342 = vrot.slane %v277, 1
      %v343 = vsel %vm338, %v340, %v342
      %v344 = vrot.slane %v278, 1
      %v345 = vrot.slane %v279, 1
      %v346 = vsel %vm338, %v344, %v345
      %v347 = vrot.slane %v280, 1
      %v348 = vsel %vm338, %v345, %v347
      %v349 = vrot.slane %v281, 1
      %v350 = vrot.slane %v282, 1
      %v351 = vsel %vm338, %v349, %v350
      %v352 = vrot.slane %v283, 1
      %v353 = vsel %vm338, %v350, %v352
      %v354 = vrot.slane %v284, 1
      %v355 = vrot.slane %v285, 1
      %v356 = vsel %vm338, %v354, %v355
      %v357 = vrot.slane %v286, 1
      %v358 = vsel %vm338, %v355, %v357
      %v359 = vrot.slane %v287, 1
      %v360 = vrot.slane %v288, 1
      %v361 = vsel %vm338, %v359, %v360
      %v362 = vrot.slane %v289, 1
      %v363 = vsel %vm338, %v360, %v362
      %v364 = vrot.slane %v290, 1
      %v365 = vrot.slane %v291, 1
      %v366 = vsel %vm338, %v364, %v365
      %v367 = vrot.slane %v292, 1
      %v368 = vsel %vm338, %v365, %v367
      %v369 = vrot.slane %v293, 1
      %v370 = vrot.slane %v294, 1
      %v371 = vsel %vm338, %v369, %v370
      %v372 = vrot.slane %v295, 1
      %v373 = vsel %vm338, %v370, %v372
      %v374 = vrot.slane %v296, 1
      %v375 = vrot.slane %v297, 1
      %v376 = vsel %vm338, %v374, %v375
      %v377 = vrot.slane %v298, 1
      %v378 = vsel %vm338, %v375, %v377
      %v395 = vpack.c.bf16 %v343, %v341
      %v396 = vpack.c.bf16 %v348, %v346
      %v397 = vpack.c.bf16 %v353, %v351
      %v398 = vpack.c.bf16 %v358, %v356
      %v399 = vpack.c.bf16 %v363, %v361
      %v400 = vpack.c.bf16 %v368, %v366
      %v401 = vpack.c.bf16 %v373, %v371
      %v402 = vpack.c.bf16 %v378, %v376
      %s403 = scalar_lea.vmem %s1, 4
      %v404 = vld [vmem:[%s403] sm:$0xf]
      %vm405 = vcmask 64512
      %v407 = vsel %vm405, %v395, 0
      %v410 = vsel %vm405, %v396, 0
      %v413 = vsel %vm405, %v397, 0
      %v416 = vsel %vm405, %v398, 0
      %v419 = vsel %vm405, %v399, 0
      %v422 = vsel %vm405, %v400, 0
      %v425 = vsel %vm405, %v401, 0
      %v428 = vsel %vm405, %v402, 0
      %vm430 = vcmask 1043456
      %v432 = vsel %vm430, %v404, 0
      %434 = vmatprep.subr.bf16.mxu0 0
      %435 = vmatpush1.bf16.msra.mxu0 %v432
      %436 = vmatprep.subr.bf16.mxu0 0
      %437 = vmatpush1.bf16.msra.mxu0 0
      %438 = vmatprep.subr.bf16.mxu0 0
      %439 = vmatpush1.bf16.msra.mxu0 0
      %440 = vmatprep.subr.bf16.mxu0 0
      %441 = vmatpush1.bf16.msra.mxu0 0
      %442 = vmatprep.subr.bf16.mxu0 0
      %443 = vmatpush1.bf16.msra.mxu0 0
      %444 = vmatprep.subr.bf16.mxu0 0
      %445 = vmatpush1.bf16.msra.mxu0 0
      %446 = vmatprep.subr.bf16.mxu0 0
      %447 = vmatpush1.bf16.msra.mxu0 0
      %448 = vmatprep.subr.bf16.mxu0 0
      %449 = vmatpush1.bf16.msra.mxu0 0
      %450 = vmatprep.subr.bf16.mxu0 0
      %451 = vmatpush1.bf16.msra.mxu0 0
      %452 = vmatprep.subr.bf16.mxu0 0
      %453 = vmatpush1.bf16.msra.mxu0 0
      %454 = vmatprep.subr.bf16.mxu0 0
      %455 = vmatpush1.bf16.msra.mxu0 0
      %456 = vmatprep.subr.bf16.mxu0 0
      %457 = vmatpush1.bf16.msra.mxu0 0
      %458 = vmatprep.subr.bf16.mxu0 0
      %459 = vmatpush1.bf16.msra.mxu0 0
      %460 = vmatprep.subr.bf16.mxu0 0
      %461 = vmatpush1.bf16.msra.mxu0 0
      %462 = vmatprep.subr.bf16.mxu0 0
      %463 = vmatpush1.bf16.msra.mxu0 0
      %464 = vmatprep.subr.bf16.mxu0 0
      %465 = vmatpush1.bf16.msra.mxu0 0
      %466 = vmatprep.mubr.bf16.mxu0 0
      %467 = vmatmul.mubr.bf16.gmra.mrb[0].mxu0 %v407
      %v468 = vpop.f32.mrb[0].mxu0
      %v469 = vadd.f32 0.0, %v468
      %v470 = vpop.f32.mrb[0].mxu0
      %v471 = vpop.f32.mrb[0].mxu0
      %v472 = vadd.f32 0.0, %v471
      %v473 = vpop.f32.mrb[0].mxu0
      %474 = vmatprep.mubr.bf16.mxu0 0
      %475 = vmatmul.mubr.bf16.gmra.mrb[0].mxu0 %v410
      %v476 = vpop.f32.mrb[0].mxu0
      %v477 = vadd.f32 0.0, %v476
      %v478 = vpop.f32.mrb[0].mxu0
      %v479 = vpop.f32.mrb[0].mxu0
      %v480 = vadd.f32 0.0, %v479
      %v481 = vpop.f32.mrb[0].mxu0
      %482 = vmatprep.mubr.bf16.mxu0 0
      %483 = vmatmul.mubr.bf16.gmra.mrb[0].mxu0 %v413
      %v484 = vpop.f32.mrb[0].mxu0
      %v485 = vadd.f32 0.0, %v484
      %v486 = vpop.f32.mrb[0].mxu0
      %v487 = vpop.f32.mrb[0].mxu0
      %v488 = vadd.f32 0.0, %v487
      %v489 = vpop.f32.mrb[0].mxu0
      %490 = vmatprep.mubr.bf16.mxu0 0
      %491 = vmatmul.mubr.bf16.gmra.mrb[0].mxu0 %v416
      %v492 = vpop.f32.mrb[0].mxu0
      %v493 = vadd.f32 0.0, %v492
      %v494 = vpop.f32.mrb[0].mxu0
      %v495 = vpop.f32.mrb[0].mxu0
      %v496 = vadd.f32 0.0, %v495
      %v497 = vpop.f32.mrb[0].mxu0
      %498 = vmatprep.mubr.bf16.mxu0 0
      %499 = vmatmul.mubr.bf16.gmra.mrb[0].mxu0 %v419
      %v500 = vpop.f32.mrb[0].mxu0
      %v501 = vadd.f32 0.0, %v500
      %v502 = vpop.f32.mrb[0].mxu0
      %v503 = vpop.f32.mrb[0].mxu0
      %v504 = vadd.f32 0.0, %v503
      %v505 = vpop.f32.mrb[0].mxu0
      %506 = vmatprep.mubr.bf16.mxu0 0
      %507 = vmatmul.mubr.bf16.gmra.mrb[0].mxu0 %v422
      %v508 = vpop.f32.mrb[0].mxu0
      %v509 = vadd.f32 0.0, %v508
      %v510 = vpop.f32.mrb[0].mxu0
      %v511 = vpop.f32.mrb[0].mxu0
      %v512 = vadd.f32 0.0, %v511
      %v513 = vpop.f32.mrb[0].mxu0
      %514 = vmatprep.mubr.bf16.mxu0 0
      %515 = vmatmul.mubr.bf16.gmra.mrb[0].mxu0 %v425
      %v516 = vpop.f32.mrb[0].mxu0
      %v517 = vadd.f32 0.0, %v516
      %v518 = vpop.f32.mrb[0].mxu0
      %v519 = vpop.f32.mrb[0].mxu0
      %v520 = vadd.f32 0.0, %v519
      %v521 = vpop.f32.mrb[0].mxu0
      %522 = vmatprep.mubr.bf16.mxu0 0
      %523 = vmatmul.mubr.bf16.gmra.mrb[0].mxu0 %v428
      %v524 = vpop.f32.mrb[0].mxu0
      %v525 = vadd.f32 0.0, %v524
      %v526 = vpop.f32.mrb[0].mxu0
      %v527 = vpop.f32.mrb[0].mxu0
      %v528 = vadd.f32 0.0, %v527
      %v529 = vpop.f32.mrb[0].mxu0
      %530 = vdwg.mxu0
      %v532 = vsel %vm405, %v305, 0
      %v535 = vsel %vm405, %v306, 0
      %v538 = vsel %vm405, %v307, 0
      %v541 = vsel %vm405, %v308, 0
      %v544 = vsel %vm405, %v309, 0
      %v547 = vsel %vm405, %v310, 0
      %v550 = vsel %vm405, %v311, 0
      %v553 = vsel %vm405, %v312, 0
      %v556 = vsel %vm430, %v313, 0
      %558 = vmatprep.subr.bf16.mxu0 0
      %559 = vmatpush1.bf16.msra.mxu0 %v556
      %560 = vmatprep.subr.bf16.mxu0 0
      %561 = vmatpush1.bf16.msra.mxu0 0
      %562 = vmatprep.subr.bf16.mxu0 0
      %563 = vmatpush1.bf16.msra.mxu0 0
      %564 = vmatprep.subr.bf16.mxu0 0
      %565 = vmatpush1.bf16.msra.mxu0 0
      %566 = vmatprep.subr.bf16.mxu0 0
      %567 = vmatpush1.bf16.msra.mxu0 0
      %568 = vmatprep.subr.bf16.mxu0 0
      %569 = vmatpush1.bf16.msra.mxu0 0
      %570 = vmatprep.subr.bf16.mxu0 0
      %571 = vmatpush1.bf16.msra.mxu0 0
      %572 = vmatprep.subr.bf16.mxu0 0
      %573 = vmatpush1.bf16.msra.mxu0 0
      %574 = vmatprep.subr.bf16.mxu0 0
      %575 = vmatpush1.bf16.msra.mxu0 0
      %576 = vmatprep.subr.bf16.mxu0 0
      %577 = vmatpush1.bf16.msra.mxu0 0
      %578 = vmatprep.subr.bf16.mxu0 0
      %579 = vmatpush1.bf16.msra.mxu0 0
      %580 = vmatprep.subr.bf16.mxu0 0
      %581 = vmatpush1.bf16.msra.mxu0 0
      %582 = vmatprep.subr.bf16.mxu0 0
      %583 = vmatpush1.bf16.msra.mxu0 0
      %584 = vmatprep.subr.bf16.mxu0 0
      %585 = vmatpush1.bf16.msra.mxu0 0
      %586 = vmatprep.subr.bf16.mxu0 0
      %587 = vmatpush1.bf16.msra.mxu0 0
      %588 = vmatprep.subr.bf16.mxu0 0
      %589 = vmatpush1.bf16.msra.mxu0 0
      %590 = vmatprep.mubr.bf16.mxu0 0
      %591 = vmatmul.mubr.bf16.gmra.mrb[0].mxu0 %v532
      %v592 = vpop.f32.mrb[0].mxu0
      %v593 = vadd.f32 %v469, %v592
      %v594 = vpop.f32.mrb[0].mxu0
      %v595 = vpop.f32.mrb[0].mxu0
      %v596 = vadd.f32 %v472, %v595
      %v597 = vpop.f32.mrb[0].mxu0
      %598 = vmatprep.mubr.bf16.mxu0 0
      %599 = vmatmul.mubr.bf16.gmra.mrb[0].mxu0 %v535
      %v600 = vpop.f32.mrb[0].mxu0
      %v601 = vadd.f32 %v477, %v600
      %v602 = vpop.f32.mrb[0].mxu0
      %v603 = vpop.f32.mrb[0].mxu0
      %v604 = vadd.f32 %v480, %v603
      %v605 = vpop.f32.mrb[0].mxu0
      %606 = vmatprep.mubr.bf16.mxu0 0
      %607 = vmatmul.mubr.bf16.gmra.mrb[0].mxu0 %v538
      %v608 = vpop.f32.mrb[0].mxu0
      %v609 = vadd.f32 %v485, %v608
      %v610 = vpop.f32.mrb[0].mxu0
      %v611 = vpop.f32.mrb[0].mxu0
      %v612 = vadd.f32 %v488, %v611
      %v613 = vpop.f32.mrb[0].mxu0
      %614 = vmatprep.mubr.bf16.mxu0 0
      %615 = vmatmul.mubr.bf16.gmra.mrb[0].mxu0 %v541
      %v616 = vpop.f32.mrb[0].mxu0
      %v617 = vadd.f32 %v493, %v616
      %v618 = vpop.f32.mrb[0].mxu0
      %v619 = vpop.f32.mrb[0].mxu0
      %v620 = vadd.f32 %v496, %v619
      %v621 = vpop.f32.mrb[0].mxu0
      %622 = vmatprep.mubr.bf16.mxu0 0
      %623 = vmatmul.mubr.bf16.gmra.mrb[0].mxu0 %v544
      %v624 = vpop.f32.mrb[0].mxu0
      %v625 = vadd.f32 %v501, %v624
      %v626 = vpop.f32.mrb[0].mxu0
      %v627 = vpop.f32.mrb[0].mxu0
      %v628 = vadd.f32 %v504, %v627
      %v629 = vpop.f32.mrb[0].mxu0
      %630 = vmatprep.mubr.bf16.mxu0 0
      %631 = vmatmul.mubr.bf16.gmra.mrb[0].mxu0 %v547
      %v632 = vpop.f32.mrb[0].mxu0
      %v633 = vadd.f32 %v509, %v632
      %v634 = vpop.f32.mrb[0].mxu0
      %v635 = vpop.f32.mrb[0].mxu0
      %v636 = vadd.f32 %v512, %v635
      %v637 = vpop.f32.mrb[0].mxu0
      %638 = vmatprep.mubr.bf16.mxu0 0
      %639 = vmatmul.mubr.bf16.gmra.mrb[0].mxu0 %v550
      %v640 = vpop.f32.mrb[0].mxu0
      %v641 = vadd.f32 %v517, %v640
      %v642 = vpop.f32.mrb[0].mxu0
      %v643 = vpop.f32.mrb[0].mxu0
      %v644 = vadd.f32 %v520, %v643
      %v645 = vpop.f32.mrb[0].mxu0
      %646 = vmatprep.mubr.bf16.mxu0 0
      %647 = vmatmul.mubr.bf16.gmra.mrb[0].mxu0 %v553
      %v648 = vpop.f32.mrb[0].mxu0
      %v649 = vadd.f32 %v525, %v648
      %v650 = vpop.f32.mrb[0].mxu0
      %v651 = vpop.f32.mrb[0].mxu0
      %v652 = vadd.f32 %v528, %v651
      %v653 = vpop.f32.mrb[0].mxu0
      %654 = vdwg.mxu0
      %vm655 = vcmask 1045504
      %v656 = vrot.slane %v275, 2
      %v657 = vrot.slane %v276, 2
      %v658 = vsel %vm655, %v656, %v657
      %v659 = vrot.slane %v277, 2
      %v660 = vsel %vm655, %v657, %v659
      %v661 = vrot.slane %v278, 2
      %v662 = vrot.slane %v279, 2
      %v663 = vsel %vm655, %v661, %v662
      %v664 = vrot.slane %v280, 2
      %v665 = vsel %vm655, %v662, %v664
      %v666 = vrot.slane %v281, 2
      %v667 = vrot.slane %v282, 2
      %v668 = vsel %vm655, %v666, %v667
      %v669 = vrot.slane %v283, 2
      %v670 = vsel %vm655, %v667, %v669
      %v671 = vrot.slane %v284, 2
      %v672 = vrot.slane %v285, 2
      %v673 = vsel %vm655, %v671, %v672
      %v674 = vrot.slane %v286, 2
      %v675 = vsel %vm655, %v672, %v674
      %v676 = vrot.slane %v287, 2
      %v677 = vrot.slane %v288, 2
      %v678 = vsel %vm655, %v676, %v677
      %v679 = vrot.slane %v289, 2
      %v680 = vsel %vm655, %v677, %v679
      %v681 = vrot.slane %v290, 2
      %v682 = vrot.slane %v291, 2
      %v683 = vsel %vm655, %v681, %v682
      %v684 = vrot.slane %v292, 2
      %v685 = vsel %vm655, %v682, %v684
      %v686 = vrot.slane %v293, 2
      %v687 = vrot.slane %v294, 2
      %v688 = vsel %vm655, %v686, %v687
      %v689 = vrot.slane %v295, 2
      %v690 = vsel %vm655, %v687, %v689
      %v691 = vrot.slane %v296, 2
      %v692 = vrot.slane %v297, 2
      %v693 = vsel %vm655, %v691, %v692
      %v694 = vrot.slane %v298, 2
      %v695 = vsel %vm655, %v692, %v694
      %v712 = vpack.c.bf16 %v660, %v658
      %v713 = vpack.c.bf16 %v665, %v663
      %v714 = vpack.c.bf16 %v670, %v668
      %v715 = vpack.c.bf16 %v675, %v673
      %v716 = vpack.c.bf16 %v680, %v678
      %v717 = vpack.c.bf16 %v685, %v683
      %v718 = vpack.c.bf16 %v690, %v688
      %v719 = vpack.c.bf16 %v695, %v693
      %s720 = scalar_lea.vmem %s1, 8
      %v721 = vld [vmem:[%s720] sm:$0xf]
      %v723 = vsel %vm405, %v712, 0
      %v726 = vsel %vm405, %v713, 0
      %v729 = vsel %vm405, %v714, 0
      %v732 = vsel %vm405, %v715, 0
      %v735 = vsel %vm405, %v716, 0
      %v738 = vsel %vm405, %v717, 0
      %v741 = vsel %vm405, %v718, 0
      %v744 = vsel %vm405, %v719, 0
      %v747 = vsel %vm430, %v721, 0
      %749 = vmatprep.subr.bf16.mxu0 0
      %750 = vmatpush1.bf16.msra.mxu0 %v747
      %751 = vmatprep.subr.bf16.mxu0 0
      %752 = vmatpush1.bf16.msra.mxu0 0
      %753 = vmatprep.subr.bf16.mxu0 0
      %754 = vmatpush1.bf16.msra.mxu0 0
      %755 = vmatprep.subr.bf16.mxu0 0
      %756 = vmatpush1.bf16.msra.mxu0 0
      %757 = vmatprep.subr.bf16.mxu0 0
      %758 = vmatpush1.bf16.msra.mxu0 0
      %759 = vmatprep.subr.bf16.mxu0 0
      %760 = vmatpush1.bf16.msra.mxu0 0
      %761 = vmatprep.subr.bf16.mxu0 0
      %762 = vmatpush1.bf16.msra.mxu0 0
      %763 = vmatprep.subr.bf16.mxu0 0
      %764 = vmatpush1.bf16.msra.mxu0 0
      %765 = vmatprep.subr.bf16.mxu0 0
      %766 = vmatpush1.bf16.msra.mxu0 0
      %767 = vmatprep.subr.bf16.mxu0 0
      %768 = vmatpush1.bf16.msra.mxu0 0
      %769 = vmatprep.subr.bf16.mxu0 0
      %770 = vmatpush1.bf16.msra.mxu0 0
      %771 = vmatprep.subr.bf16.mxu0 0
      %772 = vmatpush1.bf16.msra.mxu0 0
      %773 = vmatprep.subr.bf16.mxu0 0
      %774 = vmatpush1.bf16.msra.mxu0 0
      %775 = vmatprep.subr.bf16.mxu0 0
      %776 = vmatpush1.bf16.msra.mxu0 0
      %777 = vmatprep.subr.bf16.mxu0 0
      %778 = vmatpush1.bf16.msra.mxu0 0
      %779 = vmatprep.subr.bf16.mxu0 0
      %780 = vmatpush1.bf16.msra.mxu0 0
      %781 = vmatprep.mubr.bf16.mxu0 0
      %782 = vmatmul.mubr.bf16.gmra.mrb[0].mxu0 %v723
      %v783 = vpop.f32.mrb[0].mxu0
      %v784 = vadd.f32 0.0, %v783
      %v785 = vpop.f32.mrb[0].mxu0
      %v786 = vpop.f32.mrb[0].mxu0
      %v787 = vadd.f32 0.0, %v786
      %v788 = vpop.f32.mrb[0].mxu0
      %789 = vmatprep.mubr.bf16.mxu0 0
      %790 = vmatmul.mubr.bf16.gmra.mrb[0].mxu0 %v726
      %v791 = vpop.f32.mrb[0].mxu0
      %v792 = vadd.f32 0.0, %v791
      %v793 = vpop.f32.mrb[0].mxu0
      %v794 = vpop.f32.mrb[0].mxu0
      %v795 = vadd.f32 0.0, %v794
      %v796 = vpop.f32.mrb[0].mxu0
      %797 = vmatprep.mubr.bf16.mxu0 0
      %798 = vmatmul.mubr.bf16.gmra.mrb[0].mxu0 %v729
      %v799 = vpop.f32.mrb[0].mxu0
      %v800 = vadd.f32 0.0, %v799
      %v801 = vpop.f32.mrb[0].mxu0
      %v802 = vpop.f32.mrb[0].mxu0
      %v803 = vadd.f32 0.0, %v802
      %v804 = vpop.f32.mrb[0].mxu0
      %805 = vmatprep.mubr.bf16.mxu0 0
      %806 = vmatmul.mubr.bf16.gmra.mrb[0].mxu0 %v732
      %v807 = vpop.f32.mrb[0].mxu0
      %v808 = vadd.f32 0.0, %v807
      %v809 = vpop.f32.mrb[0].mxu0
      %v810 = vpop.f32.mrb[0].mxu0
      %v811 = vadd.f32 0.0, %v810
      %v812 = vpop.f32.mrb[0].mxu0
      %813 = vmatprep.mubr.bf16.mxu0 0
      %814 = vmatmul.mubr.bf16.gmra.mrb[0].mxu0 %v735
      %v815 = vpop.f32.mrb[0].mxu0
      %v816 = vadd.f32 0.0, %v815
      %v817 = vpop.f32.mrb[0].mxu0
      %v818 = vpop.f32.mrb[0].mxu0
      %v819 = vadd.f32 0.0, %v818
      %v820 = vpop.f32.mrb[0].mxu0
      %821 = vmatprep.mubr.bf16.mxu0 0
      %822 = vmatmul.mubr.bf16.gmra.mrb[0].mxu0 %v738
      %v823 = vpop.f32.mrb[0].mxu0
      %v824 = vadd.f32 0.0, %v823
      %v825 = vpop.f32.mrb[0].mxu0
      %v826 = vpop.f32.mrb[0].mxu0
      %v827 = vadd.f32 0.0, %v826
      %v828 = vpop.f32.mrb[0].mxu0
      %829 = vmatprep.mubr.bf16.mxu0 0
      %830 = vmatmul.mubr.bf16.gmra.mrb[0].mxu0 %v741
      %v831 = vpop.f32.mrb[0].mxu0
      %v832 = vadd.f32 0.0, %v831
      %v833 = vpop.f32.mrb[0].mxu0
      %v834 = vpop.f32.mrb[0].mxu0
      %v835 = vadd.f32 0.0, %v834
      %v836 = vpop.f32.mrb[0].mxu0
      %837 = vmatprep.mubr.bf16.mxu0 0
      %838 = vmatmul.mubr.bf16.gmra.mrb[0].mxu0 %v744
      %v839 = vpop.f32.mrb[0].mxu0
      %v840 = vadd.f32 0.0, %v839
      %v841 = vpop.f32.mrb[0].mxu0
      %v842 = vpop.f32.mrb[0].mxu0
      %v843 = vadd.f32 0.0, %v842
      %v844 = vpop.f32.mrb[0].mxu0
      %845 = vdwg.mxu0
      %v846 = vadd.f32 %v593, %v784
      %v847 = vadd.f32 %v596, %v787
      %v848 = vadd.f32 %v601, %v792
      %v849 = vadd.f32 %v604, %v795
      %v850 = vadd.f32 %v609, %v800
      %v851 = vadd.f32 %v612, %v803
      %v852 = vadd.f32 %v617, %v808
      %v853 = vadd.f32 %v620, %v811
      %v854 = vadd.f32 %v625, %v816
      %v855 = vadd.f32 %v628, %v819
      %v856 = vadd.f32 %v633, %v824
      %v857 = vadd.f32 %v636, %v827
      %v858 = vadd.f32 %v641, %v832
      %v859 = vadd.f32 %v644, %v835
      %v860 = vadd.f32 %v649, %v840
      %v861 = vadd.f32 %v652, %v843
      %v862 = vpack.c.bf16 %v300, %v299
      %s863 = scalar_lea.vmem %s1, 12
      %v864 = vld [vmem:[%s863] sm:$0xf]
      %v866 = vsel %vm405, %v862, 0
      %v869 = vsel %vm430, %v864, 0
      %871 = vmatprep.subr.bf16.mxu0 0
      %872 = vmatpush1.bf16.msra.mxu0 %v869
      %873 = vmatprep.subr.bf16.mxu0 0
      %874 = vmatpush1.bf16.msra.mxu0 0
      %875 = vmatprep.subr.bf16.mxu0 0
      %876 = vmatpush1.bf16.msra.mxu0 0
      %877 = vmatprep.subr.bf16.mxu0 0
      %878 = vmatpush1.bf16.msra.mxu0 0
      %879 = vmatprep.subr.bf16.mxu0 0
      %880 = vmatpush1.bf16.msra.mxu0 0
      %881 = vmatprep.subr.bf16.mxu0 0
      %882 = vmatpush1.bf16.msra.mxu0 0
      %883 = vmatprep.subr.bf16.mxu0 0
      %884 = vmatpush1.bf16.msra.mxu0 0
      %885 = vmatprep.subr.bf16.mxu0 0
      %886 = vmatpush1.bf16.msra.mxu0 0
      %887 = vmatprep.subr.bf16.mxu0 0
      %888 = vmatpush1.bf16.msra.mxu0 0
      %889 = vmatprep.subr.bf16.mxu0 0
      %890 = vmatpush1.bf16.msra.mxu0 0
      %891 = vmatprep.subr.bf16.mxu0 0
      %892 = vmatpush1.bf16.msra.mxu0 0
      %893 = vmatprep.subr.bf16.mxu0 0
      %894 = vmatpush1.bf16.msra.mxu0 0
      %895 = vmatprep.subr.bf16.mxu0 0
      %896 = vmatpush1.bf16.msra.mxu0 0
      %897 = vmatprep.subr.bf16.mxu0 0
      %898 = vmatpush1.bf16.msra.mxu0 0
      %899 = vmatprep.subr.bf16.mxu0 0
      %900 = vmatpush1.bf16.msra.mxu0 0
      %901 = vmatprep.subr.bf16.mxu0 0
      %902 = vmatpush1.bf16.msra.mxu0 0
      %903 = vmatprep.mubr.bf16.mxu0 0
      %904 = vmatmul.mubr.bf16.gmra.mrb[0].mxu0 %v535
      %v905 = vpop.f32.mrb[0].mxu0
      %v906 = vadd.f32 0.0, %v905
      %v907 = vpop.f32.mrb[0].mxu0
      %v908 = vpop.f32.mrb[0].mxu0
      %v909 = vadd.f32 0.0, %v908
      %v910 = vpop.f32.mrb[0].mxu0
      %911 = vmatprep.mubr.bf16.mxu0 0
      %912 = vmatmul.mubr.bf16.gmra.mrb[0].mxu0 %v538
      %v913 = vpop.f32.mrb[0].mxu0
      %v914 = vadd.f32 0.0, %v913
      %v915 = vpop.f32.mrb[0].mxu0
      %v916 = vpop.f32.mrb[0].mxu0
      %v917 = vadd.f32 0.0, %v916
      %v918 = vpop.f32.mrb[0].mxu0
      %919 = vmatprep.mubr.bf16.mxu0 0
      %920 = vmatmul.mubr.bf16.gmra.mrb[0].mxu0 %v541
      %v921 = vpop.f32.mrb[0].mxu0
      %v922 = vadd.f32 0.0, %v921
      %v923 = vpop.f32.mrb[0].mxu0
      %v924 = vpop.f32.mrb[0].mxu0
      %v925 = vadd.f32 0.0, %v924
      %v926 = vpop.f32.mrb[0].mxu0
      %927 = vmatprep.mubr.bf16.mxu0 0
      %928 = vmatmul.mubr.bf16.gmra.mrb[0].mxu0 %v544
      %v929 = vpop.f32.mrb[0].mxu0
      %v930 = vadd.f32 0.0, %v929
      %v931 = vpop.f32.mrb[0].mxu0
      %v932 = vpop.f32.mrb[0].mxu0
      %v933 = vadd.f32 0.0, %v932
      %v934 = vpop.f32.mrb[0].mxu0
      %935 = vmatprep.mubr.bf16.mxu0 0
      %936 = vmatmul.mubr.bf16.gmra.mrb[0].mxu0 %v547
      %v937 = vpop.f32.mrb[0].mxu0
      %v938 = vadd.f32 0.0, %v937
      %v939 = vpop.f32.mrb[0].mxu0
      %v940 = vpop.f32.mrb[0].mxu0
      %v941 = vadd.f32 0.0, %v940
      %v942 = vpop.f32.mrb[0].mxu0
      %943 = vmatprep.mubr.bf16.mxu0 0
      %944 = vmatmul.mubr.bf16.gmra.mrb[0].mxu0 %v550
      %v945 = vpop.f32.mrb[0].mxu0
      %v946 = vadd.f32 0.0, %v945
      %v947 = vpop.f32.mrb[0].mxu0
      %v948 = vpop.f32.mrb[0].mxu0
      %v949 = vadd.f32 0.0, %v948
      %v950 = vpop.f32.mrb[0].mxu0
      %951 = vmatprep.mubr.bf16.mxu0 0
      %952 = vmatmul.mubr.bf16.gmra.mrb[0].mxu0 %v553
      %v953 = vpop.f32.mrb[0].mxu0
      %v954 = vadd.f32 0.0, %v953
      %v955 = vpop.f32.mrb[0].mxu0
      %v956 = vpop.f32.mrb[0].mxu0
      %v957 = vadd.f32 0.0, %v956
      %v958 = vpop.f32.mrb[0].mxu0
      %959 = vmatprep.mubr.bf16.mxu0 0
      %960 = vmatmul.mubr.bf16.gmra.mrb[0].mxu0 %v866
      %v961 = vpop.f32.mrb[0].mxu0
      %v962 = vadd.f32 0.0, %v961
      %v963 = vpop.f32.mrb[0].mxu0
      %v964 = vpop.f32.mrb[0].mxu0
      %v965 = vadd.f32 0.0, %v964
      %v966 = vpop.f32.mrb[0].mxu0
      %967 = vdwg.mxu0
      %v968 = vadd.f32 %v846, %v906
      %v969 = vadd.f32 %v847, %v909
      %v970 = vadd.f32 %v848, %v914
      %v971 = vadd.f32 %v849, %v917
      %v972 = vadd.f32 %v850, %v922
      %v973 = vadd.f32 %v851, %v925
      %v974 = vadd.f32 %v852, %v930
      %v975 = vadd.f32 %v853, %v933
      %v976 = vadd.f32 %v854, %v938
      %v977 = vadd.f32 %v855, %v941
      %v978 = vadd.f32 %v856, %v946
      %v979 = vadd.f32 %v857, %v949
      %v980 = vadd.f32 %v858, %v954
      %v981 = vadd.f32 %v859, %v957
      %v982 = vadd.f32 %v860, %v962
      %v983 = vadd.f32 %v861, %v965
      %v987 = vrot.slane %v299, 1
      %v988 = vrot.slane %v300, 1
      %v989 = vsel %vm338, %v987, %v988
      %v990 = vrot.slane %v301, 1
      %v991 = vsel %vm338, %v988, %v990
      %v994 = vpack.c.bf16 %v991, %v989
      %s995 = scalar_lea.vmem %s1, 16
      %v996 = vld [vmem:[%s995] sm:$0xf]
      %v998 = vsel %vm405, %v994, 0
      %v1001 = vsel %vm430, %v996, 0
      %1003 = vmatprep.subr.bf16.mxu0 0
      %1004 = vmatpush1.bf16.msra.mxu0 %v1001
      %1005 = vmatprep.subr.bf16.mxu0 0
      %1006 = vmatpush1.bf16.msra.mxu0 0
      %1007 = vmatprep.subr.bf16.mxu0 0
      %1008 = vmatpush1.bf16.msra.mxu0 0
      %1009 = vmatprep.subr.bf16.mxu0 0
      %1010 = vmatpush1.bf16.msra.mxu0 0
      %1011 = vmatprep.subr.bf16.mxu0 0
      %1012 = vmatpush1.bf16.msra.mxu0 0
      %1013 = vmatprep.subr.bf16.mxu0 0
      %1014 = vmatpush1.bf16.msra.mxu0 0
      %1015 = vmatprep.subr.bf16.mxu0 0
      %1016 = vmatpush1.bf16.msra.mxu0 0
      %1017 = vmatprep.subr.bf16.mxu0 0
      %1018 = vmatpush1.bf16.msra.mxu0 0
      %1019 = vmatprep.subr.bf16.mxu0 0
      %1020 = vmatpush1.bf16.msra.mxu0 0
      %1021 = vmatprep.subr.bf16.mxu0 0
      %1022 = vmatpush1.bf16.msra.mxu0 0
      %1023 = vmatprep.subr.bf16.mxu0 0
      %1024 = vmatpush1.bf16.msra.mxu0 0
      %1025 = vmatprep.subr.bf16.mxu0 0
      %1026 = vmatpush1.bf16.msra.mxu0 0
      %1027 = vmatprep.subr.bf16.mxu0 0
      %1028 = vmatpush1.bf16.msra.mxu0 0
      %1029 = vmatprep.subr.bf16.mxu0 0
      %1030 = vmatpush1.bf16.msra.mxu0 0
      %1031 = vmatprep.subr.bf16.mxu0 0
      %1032 = vmatpush1.bf16.msra.mxu0 0
      %1033 = vmatprep.subr.bf16.mxu0 0
      %1034 = vmatpush1.bf16.msra.mxu0 0
      %1035 = vmatprep.mubr.bf16.mxu0 0
      %1036 = vmatmul.mubr.bf16.gmra.mrb[0].mxu0 %v410
      %v1037 = vpop.f32.mrb[0].mxu0
      %v1038 = vadd.f32 0.0, %v1037
      %v1039 = vpop.f32.mrb[0].mxu0
      %v1040 = vpop.f32.mrb[0].mxu0
      %v1041 = vadd.f32 0.0, %v1040
      %v1042 = vpop.f32.mrb[0].mxu0
      %1043 = vmatprep.mubr.bf16.mxu0 0
      %1044 = vmatmul.mubr.bf16.gmra.mrb[0].mxu0 %v413
      %v1045 = vpop.f32.mrb[0].mxu0
      %v1046 = vadd.f32 0.0, %v1045
      %v1047 = vpop.f32.mrb[0].mxu0
      %v1048 = vpop.f32.mrb[0].mxu0
      %v1049 = vadd.f32 0.0, %v1048
      %v1050 = vpop.f32.mrb[0].mxu0
      %1051 = vmatprep.mubr.bf16.mxu0 0
      %1052 = vmatmul.mubr.bf16.gmra.mrb[0].mxu0 %v416
      %v1053 = vpop.f32.mrb[0].mxu0
      %v1054 = vadd.f32 0.0, %v1053
      %v1055 = vpop.f32.mrb[0].mxu0
      %v1056 = vpop.f32.mrb[0].mxu0
      %v1057 = vadd.f32 0.0, %v1056
      %v1058 = vpop.f32.mrb[0].mxu0
      %1059 = vmatprep.mubr.bf16.mxu0 0
      %1060 = vmatmul.mubr.bf16.gmra.mrb[0].mxu0 %v419
      %v1061 = vpop.f32.mrb[0].mxu0
      %v1062 = vadd.f32 0.0, %v1061
      %v1063 = vpop.f32.mrb[0].mxu0
      %v1064 = vpop.f32.mrb[0].mxu0
      %v1065 = vadd.f32 0.0, %v1064
      %v1066 = vpop.f32.mrb[0].mxu0
      %1067 = vmatprep.mubr.bf16.mxu0 0
      %1068 = vmatmul.mubr.bf16.gmra.mrb[0].mxu0 %v422
      %v1069 = vpop.f32.mrb[0].mxu0
      %v1070 = vadd.f32 0.0, %v1069
      %v1071 = vpop.f32.mrb[0].mxu0
      %v1072 = vpop.f32.mrb[0].mxu0
      %v1073 = vadd.f32 0.0, %v1072
      %v1074 = vpop.f32.mrb[0].mxu0
      %1075 = vmatprep.mubr.bf16.mxu0 0
      %1076 = vmatmul.mubr.bf16.gmra.mrb[0].mxu0 %v425
      %v1077 = vpop.f32.mrb[0].mxu0
      %v1078 = vadd.f32 0.0, %v1077
      %v1079 = vpop.f32.mrb[0].mxu0
      %v1080 = vpop.f32.mrb[0].mxu0
      %v1081 = vadd.f32 0.0, %v1080
      %v1082 = vpop.f32.mrb[0].mxu0
      %1083 = vmatprep.mubr.bf16.mxu0 0
      %1084 = vmatmul.mubr.bf16.gmra.mrb[0].mxu0 %v428
      %v1085 = vpop.f32.mrb[0].mxu0
      %v1086 = vadd.f32 0.0, %v1085
      %v1087 = vpop.f32.mrb[0].mxu0
      %v1088 = vpop.f32.mrb[0].mxu0
      %v1089 = vadd.f32 0.0, %v1088
      %v1090 = vpop.f32.mrb[0].mxu0
      %1091 = vmatprep.mubr.bf16.mxu0 0
      %1092 = vmatmul.mubr.bf16.gmra.mrb[0].mxu0 %v998
      %v1093 = vpop.f32.mrb[0].mxu0
      %v1094 = vadd.f32 0.0, %v1093
      %v1095 = vpop.f32.mrb[0].mxu0
      %v1096 = vpop.f32.mrb[0].mxu0
      %v1097 = vadd.f32 0.0, %v1096
      %v1098 = vpop.f32.mrb[0].mxu0
      %1099 = vdwg.mxu0
      %v1100 = vadd.f32 %v968, %v1038
      %v1101 = vadd.f32 %v969, %v1041
      %v1102 = vadd.f32 %v970, %v1046
      %v1103 = vadd.f32 %v971, %v1049
      %v1104 = vadd.f32 %v972, %v1054
      %v1105 = vadd.f32 %v973, %v1057
      %v1106 = vadd.f32 %v974, %v1062
      %v1107 = vadd.f32 %v975, %v1065
      %v1108 = vadd.f32 %v976, %v1070
      %v1109 = vadd.f32 %v977, %v1073
      %v1110 = vadd.f32 %v978, %v1078
      %v1111 = vadd.f32 %v979, %v1081
      %v1112 = vadd.f32 %v980, %v1086
      %v1113 = vadd.f32 %v981, %v1089
      %v1114 = vadd.f32 %v982, %v1094
      %v1115 = vadd.f32 %v983, %v1097
      %v1116 = vrot.slane %v299, 2
      %v1117 = vrot.slane %v300, 2
      %v1118 = vsel %vm655, %v1116, %v1117
      %v1119 = vrot.slane %v301, 2
      %v1120 = vsel %vm655, %v1117, %v1119
      %v1123 = vpack.c.bf16 %v1120, %v1118
      %s1124 = scalar_lea.vmem %s1, 20
      %v1125 = vld [vmem:[%s1124] sm:$0xf]
      %v1127 = vsel %vm405, %v1123, 0
      %v1130 = vsel %vm430, %v1125, 0
      %1132 = vmatprep.subr.bf16.mxu0 0
      %1133 = vmatpush1.bf16.msra.mxu0 %v1130
      %1134 = vmatprep.subr.bf16.mxu0 0
      %1135 = vmatpush1.bf16.msra.mxu0 0
      %1136 = vmatprep.subr.bf16.mxu0 0
      %1137 = vmatpush1.bf16.msra.mxu0 0
      %1138 = vmatprep.subr.bf16.mxu0 0
      %1139 = vmatpush1.bf16.msra.mxu0 0
      %1140 = vmatprep.subr.bf16.mxu0 0
      %1141 = vmatpush1.bf16.msra.mxu0 0
      %1142 = vmatprep.subr.bf16.mxu0 0
      %1143 = vmatpush1.bf16.msra.mxu0 0
      %1144 = vmatprep.subr.bf16.mxu0 0
      %1145 = vmatpush1.bf16.msra.mxu0 0
      %1146 = vmatprep.subr.bf16.mxu0 0
      %1147 = vmatpush1.bf16.msra.mxu0 0
      %1148 = vmatprep.subr.bf16.mxu0 0
      %1149 = vmatpush1.bf16.msra.mxu0 0
      %1150 = vmatprep.subr.bf16.mxu0 0
      %1151 = vmatpush1.bf16.msra.mxu0 0
      %1152 = vmatprep.subr.bf16.mxu0 0
      %1153 = vmatpush1.bf16.msra.mxu0 0
      %1154 = vmatprep.subr.bf16.mxu0 0
      %1155 = vmatpush1.bf16.msra.mxu0 0
      %1156 = vmatprep.subr.bf16.mxu0 0
      %1157 = vmatpush1.bf16.msra.mxu0 0
      %1158 = vmatprep.subr.bf16.mxu0 0
      %1159 = vmatpush1.bf16.msra.mxu0 0
      %1160 = vmatprep.subr.bf16.mxu0 0
      %1161 = vmatpush1.bf16.msra.mxu0 0
      %1162 = vmatprep.subr.bf16.mxu0 0
      %1163 = vmatpush1.bf16.msra.mxu0 0
      %1164 = vmatprep.mubr.bf16.mxu0 0
      %1165 = vmatmul.mubr.bf16.gmra.mrb[0].mxu0 %v726
      %v1166 = vpop.f32.mrb[0].mxu0
      %v1167 = vadd.f32 0.0, %v1166
      %v1168 = vpop.f32.mrb[0].mxu0
      %v1169 = vpop.f32.mrb[0].mxu0
      %v1170 = vadd.f32 0.0, %v1169
      %v1171 = vpop.f32.mrb[0].mxu0
      %1172 = vmatprep.mubr.bf16.mxu0 0
      %1173 = vmatmul.mubr.bf16.gmra.mrb[0].mxu0 %v729
      %v1174 = vpop.f32.mrb[0].mxu0
      %v1175 = vadd.f32 0.0, %v1174
      %v1176 = vpop.f32.mrb[0].mxu0
      %v1177 = vpop.f32.mrb[0].mxu0
      %v1178 = vadd.f32 0.0, %v1177
      %v1179 = vpop.f32.mrb[0].mxu0
      %1180 = vmatprep.mubr.bf16.mxu0 0
      %1181 = vmatmul.mubr.bf16.gmra.mrb[0].mxu0 %v732
      %v1182 = vpop.f32.mrb[0].mxu0
      %v1183 = vadd.f32 0.0, %v1182
      %v1184 = vpop.f32.mrb[0].mxu0
      %v1185 = vpop.f32.mrb[0].mxu0
      %v1186 = vadd.f32 0.0, %v1185
      %v1187 = vpop.f32.mrb[0].mxu0
      %1188 = vmatprep.mubr.bf16.mxu0 0
      %1189 = vmatmul.mubr.bf16.gmra.mrb[0].mxu0 %v735
      %v1190 = vpop.f32.mrb[0].mxu0
      %v1191 = vadd.f32 0.0, %v1190
      %v1192 = vpop.f32.mrb[0].mxu0
      %v1193 = vpop.f32.mrb[0].mxu0
      %v1194 = vadd.f32 0.0, %v1193
      %v1195 = vpop.f32.mrb[0].mxu0
      %1196 = vmatprep.mubr.bf16.mxu0 0
      %1197 = vmatmul.mubr.bf16.gmra.mrb[0].mxu0 %v738
      %v1198 = vpop.f32.mrb[0].mxu0
      %v1199 = vadd.f32 0.0, %v1198
      %v1200 = vpop.f32.mrb[0].mxu0
      %v1201 = vpop.f32.mrb[0].mxu0
      %v1202 = vadd.f32 0.0, %v1201
      %v1203 = vpop.f32.mrb[0].mxu0
      %1204 = vmatprep.mubr.bf16.mxu0 0
      %1205 = vmatmul.mubr.bf16.gmra.mrb[0].mxu0 %v741
      %v1206 = vpop.f32.mrb[0].mxu0
      %v1207 = vadd.f32 0.0, %v1206
      %v1208 = vpop.f32.mrb[0].mxu0
      %v1209 = vpop.f32.mrb[0].mxu0
      %v1210 = vadd.f32 0.0, %v1209
      %v1211 = vpop.f32.mrb[0].mxu0
      %1212 = vmatprep.mubr.bf16.mxu0 0
      %1213 = vmatmul.mubr.bf16.gmra.mrb[0].mxu0 %v744
      %v1214 = vpop.f32.mrb[0].mxu0
      %v1215 = vadd.f32 0.0, %v1214
      %v1216 = vpop.f32.mrb[0].mxu0
      %v1217 = vpop.f32.mrb[0].mxu0
      %v1218 = vadd.f32 0.0, %v1217
      %v1219 = vpop.f32.mrb[0].mxu0
      %1220 = vmatprep.mubr.bf16.mxu0 0
      %1221 = vmatmul.mubr.bf16.gmra.mrb[0].mxu0 %v1127
      %v1222 = vpop.f32.mrb[0].mxu0
      %v1223 = vadd.f32 0.0, %v1222
      %v1224 = vpop.f32.mrb[0].mxu0
      %v1225 = vpop.f32.mrb[0].mxu0
      %v1226 = vadd.f32 0.0, %v1225
      %v1227 = vpop.f32.mrb[0].mxu0
      %1228 = vdwg.mxu0
      %v1229 = vadd.f32 %v1100, %v1167
      %v1230 = vadd.f32 %v1101, %v1170
      %v1231 = vadd.f32 %v1102, %v1175
      %v1232 = vadd.f32 %v1103, %v1178
      %v1233 = vadd.f32 %v1104, %v1183
      %v1234 = vadd.f32 %v1105, %v1186
      %v1235 = vadd.f32 %v1106, %v1191
      %v1236 = vadd.f32 %v1107, %v1194
      %v1237 = vadd.f32 %v1108, %v1199
      %v1238 = vadd.f32 %v1109, %v1202
      %v1239 = vadd.f32 %v1110, %v1207
      %v1240 = vadd.f32 %v1111, %v1210
      %v1241 = vadd.f32 %v1112, %v1215
      %v1242 = vadd.f32 %v1113, %v1218
      %v1243 = vadd.f32 %v1114, %v1223
      %v1244 = vadd.f32 %v1115, %v1226
      %v1245 = vpack.c.bf16 %v303, %v302
      %s1246 = scalar_lea.vmem %s1, 24
      %v1247 = vld [vmem:[%s1246] sm:$0xf]
      %v1249 = vsel %vm405, %v1245, 0
      %v1252 = vsel %vm430, %v1247, 0
      %1254 = vmatprep.subr.bf16.mxu0 0
      %1255 = vmatpush1.bf16.msra.mxu0 %v1252
      %1256 = vmatprep.subr.bf16.mxu0 0
      %1257 = vmatpush1.bf16.msra.mxu0 0
      %1258 = vmatprep.subr.bf16.mxu0 0
      %1259 = vmatpush1.bf16.msra.mxu0 0
      %1260 = vmatprep.subr.bf16.mxu0 0
      %1261 = vmatpush1.bf16.msra.mxu0 0
      %1262 = vmatprep.subr.bf16.mxu0 0
      %1263 = vmatpush1.bf16.msra.mxu0 0
      %1264 = vmatprep.subr.bf16.mxu0 0
      %1265 = vmatpush1.bf16.msra.mxu0 0
      %1266 = vmatprep.subr.bf16.mxu0 0
      %1267 = vmatpush1.bf16.msra.mxu0 0
      %1268 = vmatprep.subr.bf16.mxu0 0
      %1269 = vmatpush1.bf16.msra.mxu0 0
      %1270 = vmatprep.subr.bf16.mxu0 0
      %1271 = vmatpush1.bf16.msra.mxu0 0
      %1272 = vmatprep.subr.bf16.mxu0 0
      %1273 = vmatpush1.bf16.msra.mxu0 0
      %1274 = vmatprep.subr.bf16.mxu0 0
      %1275 = vmatpush1.bf16.msra.mxu0 0
      %1276 = vmatprep.subr.bf16.mxu0 0
      %1277 = vmatpush1.bf16.msra.mxu0 0
      %1278 = vmatprep.subr.bf16.mxu0 0
      %1279 = vmatpush1.bf16.msra.mxu0 0
      %1280 = vmatprep.subr.bf16.mxu0 0
      %1281 = vmatpush1.bf16.msra.mxu0 0
      %1282 = vmatprep.subr.bf16.mxu0 0
      %1283 = vmatpush1.bf16.msra.mxu0 0
      %1284 = vmatprep.subr.bf16.mxu0 0
      %1285 = vmatpush1.bf16.msra.mxu0 0
      %1286 = vmatprep.mubr.bf16.mxu0 0
      %1287 = vmatmul.mubr.bf16.gmra.mrb[0].mxu0 %v538
      %v1288 = vpop.f32.mrb[0].mxu0
      %v1289 = vadd.f32 0.0, %v1288
      %v1290 = vpop.f32.mrb[0].mxu0
      %v1291 = vpop.f32.mrb[0].mxu0
      %v1292 = vadd.f32 0.0, %v1291
      %v1293 = vpop.f32.mrb[0].mxu0
      %1294 = vmatprep.mubr.bf16.mxu0 0
      %1295 = vmatmul.mubr.bf16.gmra.mrb[0].mxu0 %v541
      %v1296 = vpop.f32.mrb[0].mxu0
      %v1297 = vadd.f32 0.0, %v1296
      %v1298 = vpop.f32.mrb[0].mxu0
      %v1299 = vpop.f32.mrb[0].mxu0
      %v1300 = vadd.f32 0.0, %v1299
      %v1301 = vpop.f32.mrb[0].mxu0
      %1302 = vmatprep.mubr.bf16.mxu0 0
      %1303 = vmatmul.mubr.bf16.gmra.mrb[0].mxu0 %v544
      %v1304 = vpop.f32.mrb[0].mxu0
      %v1305 = vadd.f32 0.0, %v1304
      %v1306 = vpop.f32.mrb[0].mxu0
      %v1307 = vpop.f32.mrb[0].mxu0
      %v1308 = vadd.f32 0.0, %v1307
      %v1309 = vpop.f32.mrb[0].mxu0
      %1310 = vmatprep.mubr.bf16.mxu0 0
      %1311 = vmatmul.mubr.bf16.gmra.mrb[0].mxu0 %v547
      %v1312 = vpop.f32.mrb[0].mxu0
      %v1313 = vadd.f32 0.0, %v1312
      %v1314 = vpop.f32.mrb[0].mxu0
      %v1315 = vpop.f32.mrb[0].mxu0
      %v1316 = vadd.f32 0.0, %v1315
      %v1317 = vpop.f32.mrb[0].mxu0
      %1318 = vmatprep.mubr.bf16.mxu0 0
      %1319 = vmatmul.mubr.bf16.gmra.mrb[0].mxu0 %v550
      %v1320 = vpop.f32.mrb[0].mxu0
      %v1321 = vadd.f32 0.0, %v1320
      %v1322 = vpop.f32.mrb[0].mxu0
      %v1323 = vpop.f32.mrb[0].mxu0
      %v1324 = vadd.f32 0.0, %v1323
      %v1325 = vpop.f32.mrb[0].mxu0
      %1326 = vmatprep.mubr.bf16.mxu0 0
      %1327 = vmatmul.mubr.bf16.gmra.mrb[0].mxu0 %v553
      %v1328 = vpop.f32.mrb[0].mxu0
      %v1329 = vadd.f32 0.0, %v1328
      %v1330 = vpop.f32.mrb[0].mxu0
      %v1331 = vpop.f32.mrb[0].mxu0
      %v1332 = vadd.f32 0.0, %v1331
      %v1333 = vpop.f32.mrb[0].mxu0
      %1334 = vmatprep.mubr.bf16.mxu0 0
      %1335 = vmatmul.mubr.bf16.gmra.mrb[0].mxu0 %v866
      %v1336 = vpop.f32.mrb[0].mxu0
      %v1337 = vadd.f32 0.0, %v1336
      %v1338 = vpop.f32.mrb[0].mxu0
      %v1339 = vpop.f32.mrb[0].mxu0
      %v1340 = vadd.f32 0.0, %v1339
      %v1341 = vpop.f32.mrb[0].mxu0
      %1342 = vmatprep.mubr.bf16.mxu0 0
      %1343 = vmatmul.mubr.bf16.gmra.mrb[0].mxu0 %v1249
      %v1344 = vpop.f32.mrb[0].mxu0
      %v1345 = vadd.f32 0.0, %v1344
      %v1346 = vpop.f32.mrb[0].mxu0
      %v1347 = vpop.f32.mrb[0].mxu0
      %v1348 = vadd.f32 0.0, %v1347
      %v1349 = vpop.f32.mrb[0].mxu0
      %1350 = vdwg.mxu0
      %v1351 = vadd.f32 %v1229, %v1289
      %v1352 = vadd.f32 %v1230, %v1292
      %v1353 = vadd.f32 %v1231, %v1297
      %v1354 = vadd.f32 %v1232, %v1300
      %v1355 = vadd.f32 %v1233, %v1305
      %v1356 = vadd.f32 %v1234, %v1308
      %v1357 = vadd.f32 %v1235, %v1313
      %v1358 = vadd.f32 %v1236, %v1316
      %v1359 = vadd.f32 %v1237, %v1321
      %v1360 = vadd.f32 %v1238, %v1324
      %v1361 = vadd.f32 %v1239, %v1329
      %v1362 = vadd.f32 %v1240, %v1332
      %v1363 = vadd.f32 %v1241, %v1337
      %v1364 = vadd.f32 %v1242, %v1340
      %v1365 = vadd.f32 %v1243, %v1345
      %v1366 = vadd.f32 %v1244, %v1348
      %v1370 = vrot.slane %v302, 1
      %v1371 = vrot.slane %v303, 1
      %v1372 = vsel %vm338, %v1370, %v1371
      %v1373 = vrot.slane %v304, 1
      %v1374 = vsel %vm338, %v1371, %v1373
      %v1377 = vpack.c.bf16 %v1374, %v1372
      %s1378 = scalar_lea.vmem %s1, 28
      %v1379 = vld [vmem:[%s1378] sm:$0xf]
      %v1381 = vsel %vm405, %v1377, 0
      %v1384 = vsel %vm430, %v1379, 0
      %1386 = vmatprep.subr.bf16.mxu0 0
      %1387 = vmatpush1.bf16.msra.mxu0 %v1384
      %1388 = vmatprep.subr.bf16.mxu0 0
      %1389 = vmatpush1.bf16.msra.mxu0 0
      %1390 = vmatprep.subr.bf16.mxu0 0
      %1391 = vmatpush1.bf16.msra.mxu0 0
      %1392 = vmatprep.subr.bf16.mxu0 0
      %1393 = vmatpush1.bf16.msra.mxu0 0
      %1394 = vmatprep.subr.bf16.mxu0 0
      %1395 = vmatpush1.bf16.msra.mxu0 0
      %1396 = vmatprep.subr.bf16.mxu0 0
      %1397 = vmatpush1.bf16.msra.mxu0 0
      %1398 = vmatprep.subr.bf16.mxu0 0
      %1399 = vmatpush1.bf16.msra.mxu0 0
      %1400 = vmatprep.subr.bf16.mxu0 0
      %1401 = vmatpush1.bf16.msra.mxu0 0
      %1402 = vmatprep.subr.bf16.mxu0 0
      %1403 = vmatpush1.bf16.msra.mxu0 0
      %1404 = vmatprep.subr.bf16.mxu0 0
      %1405 = vmatpush1.bf16.msra.mxu0 0
      %1406 = vmatprep.subr.bf16.mxu0 0
      %1407 = vmatpush1.bf16.msra.mxu0 0
      %1408 = vmatprep.subr.bf16.mxu0 0
      %1409 = vmatpush1.bf16.msra.mxu0 0
      %1410 = vmatprep.subr.bf16.mxu0 0
      %1411 = vmatpush1.bf16.msra.mxu0 0
      %1412 = vmatprep.subr.bf16.mxu0 0
      %1413 = vmatpush1.bf16.msra.mxu0 0
      %1414 = vmatprep.subr.bf16.mxu0 0
      %1415 = vmatpush1.bf16.msra.mxu0 0
      %1416 = vmatprep.subr.bf16.mxu0 0
      %1417 = vmatpush1.bf16.msra.mxu0 0
      %1418 = vmatprep.mubr.bf16.mxu0 0
      %1419 = vmatmul.mubr.bf16.gmra.mrb[0].mxu0 %v413
      %v1420 = vpop.f32.mrb[0].mxu0
      %v1421 = vadd.f32 0.0, %v1420
      %v1422 = vpop.f32.mrb[0].mxu0
      %v1423 = vpop.f32.mrb[0].mxu0
      %v1424 = vadd.f32 0.0, %v1423
      %v1425 = vpop.f32.mrb[0].mxu0
      %1426 = vmatprep.mubr.bf16.mxu0 0
      %1427 = vmatmul.mubr.bf16.gmra.mrb[0].mxu0 %v416
      %v1428 = vpop.f32.mrb[0].mxu0
      %v1429 = vadd.f32 0.0, %v1428
      %v1430 = vpop.f32.mrb[0].mxu0
      %v1431 = vpop.f32.mrb[0].mxu0
      %v1432 = vadd.f32 0.0, %v1431
      %v1433 = vpop.f32.mrb[0].mxu0
      %1434 = vmatprep.mubr.bf16.mxu0 0
      %1435 = vmatmul.mubr.bf16.gmra.mrb[0].mxu0 %v419
      %v1436 = vpop.f32.mrb[0].mxu0
      %v1437 = vadd.f32 0.0, %v1436
      %v1438 = vpop.f32.mrb[0].mxu0
      %v1439 = vpop.f32.mrb[0].mxu0
      %v1440 = vadd.f32 0.0, %v1439
      %v1441 = vpop.f32.mrb[0].mxu0
      %1442 = vmatprep.mubr.bf16.mxu0 0
      %1443 = vmatmul.mubr.bf16.gmra.mrb[0].mxu0 %v422
      %v1444 = vpop.f32.mrb[0].mxu0
      %v1445 = vadd.f32 0.0, %v1444
      %v1446 = vpop.f32.mrb[0].mxu0
      %v1447 = vpop.f32.mrb[0].mxu0
      %v1448 = vadd.f32 0.0, %v1447
      %v1449 = vpop.f32.mrb[0].mxu0
      %1450 = vmatprep.mubr.bf16.mxu0 0
      %1451 = vmatmul.mubr.bf16.gmra.mrb[0].mxu0 %v425
      %v1452 = vpop.f32.mrb[0].mxu0
      %v1453 = vadd.f32 0.0, %v1452
      %v1454 = vpop.f32.mrb[0].mxu0
      %v1455 = vpop.f32.mrb[0].mxu0
      %v1456 = vadd.f32 0.0, %v1455
      %v1457 = vpop.f32.mrb[0].mxu0
      %1458 = vmatprep.mubr.bf16.mxu0 0
      %1459 = vmatmul.mubr.bf16.gmra.mrb[0].mxu0 %v428
      %v1460 = vpop.f32.mrb[0].mxu0
      %v1461 = vadd.f32 0.0, %v1460
      %v1462 = vpop.f32.mrb[0].mxu0
      %v1463 = vpop.f32.mrb[0].mxu0
      %v1464 = vadd.f32 0.0, %v1463
      %v1465 = vpop.f32.mrb[0].mxu0
      %1466 = vmatprep.mubr.bf16.mxu0 0
      %1467 = vmatmul.mubr.bf16.gmra.mrb[0].mxu0 %v998
      %v1468 = vpop.f32.mrb[0].mxu0
      %v1469 = vadd.f32 0.0, %v1468
      %v1470 = vpop.f32.mrb[0].mxu0
      %v1471 = vpop.f32.mrb[0].mxu0
      %v1472 = vadd.f32 0.0, %v1471
      %v1473 = vpop.f32.mrb[0].mxu0
      %1474 = vmatprep.mubr.bf16.mxu0 0
      %1475 = vmatmul.mubr.bf16.gmra.mrb[0].mxu0 %v1381
      %v1476 = vpop.f32.mrb[0].mxu0
      %v1477 = vadd.f32 0.0, %v1476
      %v1478 = vpop.f32.mrb[0].mxu0
      %v1479 = vpop.f32.mrb[0].mxu0
      %v1480 = vadd.f32 0.0, %v1479
      %v1481 = vpop.f32.mrb[0].mxu0
      %1482 = vdwg.mxu0
      %v1483 = vadd.f32 %v1351, %v1421
      %v1484 = vadd.f32 %v1352, %v1424
      %v1485 = vadd.f32 %v1353, %v1429
      %v1486 = vadd.f32 %v1354, %v1432
      %v1487 = vadd.f32 %v1355, %v1437
      %v1488 = vadd.f32 %v1356, %v1440
      %v1489 = vadd.f32 %v1357, %v1445
      %v1490 = vadd.f32 %v1358, %v1448
      %v1491 = vadd.f32 %v1359, %v1453
      %v1492 = vadd.f32 %v1360, %v1456
      %v1493 = vadd.f32 %v1361, %v1461
      %v1494 = vadd.f32 %v1362, %v1464
      %v1495 = vadd.f32 %v1363, %v1469
      %v1496 = vadd.f32 %v1364, %v1472
      %v1497 = vadd.f32 %v1365, %v1477
      %v1498 = vadd.f32 %v1366, %v1480
      %v1499 = vrot.slane %v302, 2
      %v1500 = vrot.slane %v303, 2
      %v1501 = vsel %vm655, %v1499, %v1500
      %v1502 = vrot.slane %v304, 2
      %v1503 = vsel %vm655, %v1500, %v1502
      %v1506 = vpack.c.bf16 %v1503, %v1501
      %s1507 = scalar_lea.vmem %s1, 32
      %v1508 = vld [vmem:[%s1507] sm:$0xf]
      %v1510 = vsel %vm405, %v1506, 0
      %v1513 = vsel %vm430, %v1508, 0
      %1515 = vmatprep.subr.bf16.mxu0 0
      %1516 = vmatpush1.bf16.msra.mxu0 %v1513
      %1517 = vmatprep.subr.bf16.mxu0 0
      %1518 = vmatpush1.bf16.msra.mxu0 0
      %1519 = vmatprep.subr.bf16.mxu0 0
      %1520 = vmatpush1.bf16.msra.mxu0 0
      %1521 = vmatprep.subr.bf16.mxu0 0
      %1522 = vmatpush1.bf16.msra.mxu0 0
      %1523 = vmatprep.subr.bf16.mxu0 0
      %1524 = vmatpush1.bf16.msra.mxu0 0
      %1525 = vmatprep.subr.bf16.mxu0 0
      %1526 = vmatpush1.bf16.msra.mxu0 0
      %1527 = vmatprep.subr.bf16.mxu0 0
      %1528 = vmatpush1.bf16.msra.mxu0 0
      %1529 = vmatprep.subr.bf16.mxu0 0
      %1530 = vmatpush1.bf16.msra.mxu0 0
      %1531 = vmatprep.subr.bf16.mxu0 0
      %1532 = vmatpush1.bf16.msra.mxu0 0
      %1533 = vmatprep.subr.bf16.mxu0 0
      %1534 = vmatpush1.bf16.msra.mxu0 0
      %1535 = vmatprep.subr.bf16.mxu0 0
      %1536 = vmatpush1.bf16.msra.mxu0 0
      %1537 = vmatprep.subr.bf16.mxu0 0
      %1538 = vmatpush1.bf16.msra.mxu0 0
      %1539 = vmatprep.subr.bf16.mxu0 0
      %1540 = vmatpush1.bf16.msra.mxu0 0
      %1541 = vmatprep.subr.bf16.mxu0 0
      %1542 = vmatpush1.bf16.msra.mxu0 0
      %1543 = vmatprep.subr.bf16.mxu0 0
      %1544 = vmatpush1.bf16.msra.mxu0 0
      %1545 = vmatprep.subr.bf16.mxu0 0
      %1546 = vmatpush1.bf16.msra.mxu0 0
      %1547 = vmatprep.mubr.bf16.mxu0 0
      %1548 = vmatmul.mubr.bf16.gmra.mrb[0].mxu0 %v729
      %v1549 = vpop.f32.mrb[0].mxu0
      %v1550 = vadd.f32 0.0, %v1549
      %v1551 = vpop.f32.mrb[0].mxu0
      %v1552 = vpop.f32.mrb[0].mxu0
      %v1553 = vadd.f32 0.0, %v1552
      %v1554 = vpop.f32.mrb[0].mxu0
      %1555 = vmatprep.mubr.bf16.mxu0 0
      %1556 = vmatmul.mubr.bf16.gmra.mrb[0].mxu0 %v732
      %v1557 = vpop.f32.mrb[0].mxu0
      %v1558 = vadd.f32 0.0, %v1557
      %v1559 = vpop.f32.mrb[0].mxu0
      %v1560 = vpop.f32.mrb[0].mxu0
      %v1561 = vadd.f32 0.0, %v1560
      %v1562 = vpop.f32.mrb[0].mxu0
      %1563 = vmatprep.mubr.bf16.mxu0 0
      %1564 = vmatmul.mubr.bf16.gmra.mrb[0].mxu0 %v735
      %v1565 = vpop.f32.mrb[0].mxu0
      %v1566 = vadd.f32 0.0, %v1565
      %v1567 = vpop.f32.mrb[0].mxu0
      %v1568 = vpop.f32.mrb[0].mxu0
      %v1569 = vadd.f32 0.0, %v1568
      %v1570 = vpop.f32.mrb[0].mxu0
      %1571 = vmatprep.mubr.bf16.mxu0 0
      %1572 = vmatmul.mubr.bf16.gmra.mrb[0].mxu0 %v738
      %v1573 = vpop.f32.mrb[0].mxu0
      %v1574 = vadd.f32 0.0, %v1573
      %v1575 = vpop.f32.mrb[0].mxu0
      %v1576 = vpop.f32.mrb[0].mxu0
      %v1577 = vadd.f32 0.0, %v1576
      %v1578 = vpop.f32.mrb[0].mxu0
      %1579 = vmatprep.mubr.bf16.mxu0 0
      %1580 = vmatmul.mubr.bf16.gmra.mrb[0].mxu0 %v741
      %v1581 = vpop.f32.mrb[0].mxu0
      %v1582 = vadd.f32 0.0, %v1581
      %v1583 = vpop.f32.mrb[0].mxu0
      %v1584 = vpop.f32.mrb[0].mxu0
      %v1585 = vadd.f32 0.0, %v1584
      %v1586 = vpop.f32.mrb[0].mxu0
      %1587 = vmatprep.mubr.bf16.mxu0 0
      %1588 = vmatmul.mubr.bf16.gmra.mrb[0].mxu0 %v744
      %v1589 = vpop.f32.mrb[0].mxu0
      %v1590 = vadd.f32 0.0, %v1589
      %v1591 = vpop.f32.mrb[0].mxu0
      %v1592 = vpop.f32.mrb[0].mxu0
      %v1593 = vadd.f32 0.0, %v1592
      %v1594 = vpop.f32.mrb[0].mxu0
      %1595 = vmatprep.mubr.bf16.mxu0 0
      %1596 = vmatmul.mubr.bf16.gmra.mrb[0].mxu0 %v1127
      %v1597 = vpop.f32.mrb[0].mxu0
      %v1598 = vadd.f32 0.0, %v1597
      %v1599 = vpop.f32.mrb[0].mxu0
      %v1600 = vpop.f32.mrb[0].mxu0
      %v1601 = vadd.f32 0.0, %v1600
      %v1602 = vpop.f32.mrb[0].mxu0
      %1603 = vmatprep.mubr.bf16.mxu0 0
      %1604 = vmatmul.mubr.bf16.gmra.mrb[0].mxu0 %v1510
      %v1605 = vpop.f32.mrb[0].mxu0
      %v1606 = vadd.f32 0.0, %v1605
      %v1607 = vpop.f32.mrb[0].mxu0
      %v1608 = vpop.f32.mrb[0].mxu0
      %v1609 = vadd.f32 0.0, %v1608
      %v1610 = vpop.f32.mrb[0].mxu0
      %1611 = vdwg.mxu0
      %v1612 = vadd.f32 %v1483, %v1550
      %v1613 = vadd.f32 %v1484, %v1553
      %v1614 = vadd.f32 %v1485, %v1558
      %v1615 = vadd.f32 %v1486, %v1561
      %v1616 = vadd.f32 %v1487, %v1566
      %v1617 = vadd.f32 %v1488, %v1569
      %v1618 = vadd.f32 %v1489, %v1574
      %v1619 = vadd.f32 %v1490, %v1577
      %v1620 = vadd.f32 %v1491, %v1582
      %v1621 = vadd.f32 %v1492, %v1585
      %v1622 = vadd.f32 %v1493, %v1590
      %v1623 = vadd.f32 %v1494, %v1593
      %v1624 = vadd.f32 %v1495, %v1598
      %v1625 = vadd.f32 %v1496, %v1601
      %v1626 = vadd.f32 %v1497, %v1606
      %v1627 = vadd.f32 %v1498, %v1609
      %v1628 = vpack.c.bf16 %v1613, %v1612
      %v1629 = vpack.c.bf16 %v1615, %v1614
      %v1630 = vpack.c.bf16 %v1617, %v1616
      %v1631 = vpack.c.bf16 %v1619, %v1618
      %v1632 = vpack.c.bf16 %v1621, %v1620
      %v1633 = vpack.c.bf16 %v1623, %v1622
      %v1634 = vpack.c.bf16 %v1625, %v1624
      %v1635 = vpack.c.bf16 %v1627, %v1626
      %v1644 = vunpack.c.l.b16 %v1628
      %v1645 = vunpack.c.h.b16 %v1628
      %v1646 = vunpack.c.l.b16 %v1629
      %v1647 = vunpack.c.h.b16 %v1629
      %v1648 = vunpack.c.l.b16 %v1630
      %v1649 = vunpack.c.h.b16 %v1630
      %v1650 = vunpack.c.l.b16 %v1631
      %v1651 = vunpack.c.h.b16 %v1631
      %v1652 = vunpack.c.l.b16 %v1632
      %v1653 = vunpack.c.h.b16 %v1632
      %v1654 = vunpack.c.l.b16 %v1633
      %v1655 = vunpack.c.h.b16 %v1633
      %v1656 = vunpack.c.l.b16 %v1634
      %v1657 = vunpack.c.h.b16 %v1634
      %v1658 = vunpack.c.l.b16 %v1635
      %v1659 = vunpack.c.h.b16 %v1635
      %v1660 = vpack.c.b16 %v1644, %v1644
      %v1661 = vpack.c.b16 %v1645, %v1645
      %v1662 = vpack.c.b16 %v1646, %v1646
      %v1663 = vpack.c.b16 %v1647, %v1647
      %v1664 = vpack.c.b16 %v1648, %v1648
      %v1665 = vpack.c.b16 %v1649, %v1649
      %v1666 = vpack.c.b16 %v1650, %v1650
      %v1667 = vpack.c.b16 %v1651, %v1651
      %v1668 = vpack.c.b16 %v1652, %v1652
      %v1669 = vpack.c.b16 %v1653, %v1653
      %v1670 = vpack.c.b16 %v1654, %v1654
      %v1671 = vpack.c.b16 %v1655, %v1655
      %v1672 = vpack.c.b16 %v1656, %v1656
      %v1673 = vpack.c.b16 %v1657, %v1657
      %v1674 = vpack.c.b16 %v1658, %v1658
      %v1675 = vpack.c.b16 %v1659, %v1659
      %vm1692 = vcmask 60416
      %1693 = vst.msk [vmem:[%s232] sm:$0xf] %vm1692, %v1660
      %1694 = vst.msk [vmem:[%s232 + $0x4] sm:$0xf] %vm1692, %v1661
      %1695 = vst.msk [vmem:[%s232 + $0x8] sm:$0xf] %vm1692, %v1662
      %1696 = vst.msk [vmem:[%s232 + $0xc] sm:$0xf] %vm1692, %v1663
      %1697 = vst.msk [vmem:[%s232 + $0x10] sm:$0xf] %vm1692, %v1664
      %1698 = vst.msk [vmem:[%s232 + $0x14] sm:$0xf] %vm1692, %v1665
      %1699 = vst.msk [vmem:[%s232 + $0x18] sm:$0xf] %vm1692, %v1666
      %1700 = vst.msk [vmem:[%s232 + $0x1c] sm:$0xf] %vm1692, %v1667
      %1701 = vst.msk [vmem:[%s232 + $0x20] sm:$0xf] %vm1692, %v1668
      %1702 = vst.msk [vmem:[%s232 + $0x24] sm:$0xf] %vm1692, %v1669
      %1703 = vst.msk [vmem:[%s232 + $0x28] sm:$0xf] %vm1692, %v1670
      %1704 = vst.msk [vmem:[%s232 + $0x2c] sm:$0xf] %vm1692, %v1671
      %1705 = vst.msk [vmem:[%s232 + $0x30] sm:$0xf] %vm1692, %v1672
      %1706 = vst.msk [vmem:[%s232 + $0x34] sm:$0xf] %vm1692, %v1673
      %1707 = vst.msk [vmem:[%s232 + $0x38] sm:$0xf] %vm1692, %v1674
      %1708 = vst.msk [vmem:[%s232 + $0x3c] sm:$0xf] %vm1692, %v1675
      %p1709 = scmp.eq.s32.totalorder %s21, 0
      // Predicated region
      $region29: #{_lambda_.3} parent=27 // pred_check
        %p1710 = pneg %p1709
      $region30: #{_lambda_.3} parent=27 // pred_check_branch
        %1712 = sbr.rel (%p1710) target = $region32
      $region31: #{_lambda_.3} parent=27 // pred_region
        %vm1713 = vcmask 57344
        %1714 = vst.msk [vmem:[%s236] sm:$0x1] %vm1713, 0.0
        %1715 = vst.msk [vmem:[%s239] sm:$0x1] %vm1713, 0.0
      $region32: #{_lambda_.3} parent=27 // pred_fallthru
        _
      %v1716 = vld [vmem:[%s236] sm:$0x1]
      %v1717 = vsel %vm405, %v1612, 0.0
      %v1718 = vsel %vm405, %v1613, 0.0
      %v1719 = vadd.f32 %v1717, %v1718
      %v1720 = vsel %vm405, %v1614, 0.0
      %v1721 = vadd.f32 %v1719, %v1720
      %v1722 = vsel %vm405, %v1615, 0.0
      %v1723 = vadd.f32 %v1721, %v1722
      %v1724 = vsel %vm405, %v1616, 0.0
      %v1725 = vadd.f32 %v1723, %v1724
      %v1726 = vsel %vm405, %v1617, 0.0
      %v1727 = vadd.f32 %v1725, %v1726
      %v1728 = vsel %vm405, %v1618, 0.0
      %v1729 = vadd.f32 %v1727, %v1728
      %v1730 = vsel %vm405, %v1619, 0.0
      %v1731 = vadd.f32 %v1729, %v1730
      %v1732 = vsel %vm405, %v1620, 0.0
      %v1733 = vadd.f32 %v1731, %v1732
      %v1734 = vsel %vm405, %v1621, 0.0
      %v1735 = vadd.f32 %v1733, %v1734
      %v1736 = vsel %vm405, %v1622, 0.0
      %v1737 = vadd.f32 %v1735, %v1736
      %v1738 = vsel %vm405, %v1623, 0.0
      %v1739 = vadd.f32 %v1737, %v1738
      %v1740 = vsel %vm405, %v1624, 0.0
      %v1741 = vadd.f32 %v1739, %v1740
      %v1742 = vsel %vm405, %v1625, 0.0
      %v1743 = vadd.f32 %v1741, %v1742
      %v1744 = vsel %vm405, %v1626, 0.0
      %v1745 = vadd.f32 %v1743, %v1744
      %v1746 = vsel %vm405, %v1627, 0.0
      %v1747 = vadd.f32 %v1745, %v1746
      %v1748 = vrot.slane %v1747, 4
      %v1749 = vadd.f32 %v1747, %v1748
      %v1750 = vrot.slane %v1749, 2
      %v1751 = vadd.f32 %v1749, %v1750
      %v1752 = vrot.slane %v1751, 1
      %v1753 = vadd.f32 %v1751, %v1752
      %v1754 = vadd.f32 %v1716, %v1753
      %vm1755 = vcmask 57344
      %1756 = vst.msk [vmem:[%s236] sm:$0x1] %vm1755, %v1754
      %v1757 = vld [vmem:[%s239] sm:$0x1]
      %v1758 = vmul.f32 %v1612, %v1612
      %v1759 = vmul.f32 %v1613, %v1613
      %v1760 = vmul.f32 %v1614, %v1614
      %v1761 = vmul.f32 %v1615, %v1615
      %v1762 = vmul.f32 %v1616, %v1616
      %v1763 = vmul.f32 %v1617, %v1617
      %v1764 = vmul.f32 %v1618, %v1618
      %v1765 = vmul.f32 %v1619, %v1619
      %v1766 = vmul.f32 %v1620, %v1620
      %v1767 = vmul.f32 %v1621, %v1621
      %v1768 = vmul.f32 %v1622, %v1622
      %v1769 = vmul.f32 %v1623, %v1623
      %v1770 = vmul.f32 %v1624, %v1624
      %v1771 = vmul.f32 %v1625, %v1625
      %v1772 = vmul.f32 %v1626, %v1626
      %v1773 = vmul.f32 %v1627, %v1627
      %v1774 = vsel %vm405, %v1758, 0.0
      %v1775 = vsel %vm405, %v1759, 0.0
      %v1776 = vadd.f32 %v1774, %v1775
      %v1777 = vsel %vm405, %v1760, 0.0
      %v1778 = vadd.f32 %v1776, %v1777
      %v1779 = vsel %vm405, %v1761, 0.0
      %v1780 = vadd.f32 %v1778, %v1779
      %v1781 = vsel %vm405, %v1762, 0.0
      %v1782 = vadd.f32 %v1780, %v1781
      %v1783 = vsel %vm405, %v1763, 0.0
      %v1784 = vadd.f32 %v1782, %v1783
      %v1785 = vsel %vm405, %v1764, 0.0
      %v1786 = vadd.f32 %v1784, %v1785
      %v1787 = vsel %vm405, %v1765, 0.0
      %v1788 = vadd.f32 %v1786, %v1787
      %v1789 = vsel %vm405, %v1766, 0.0
      %v1790 = vadd.f32 %v1788, %v1789
      %v1791 = vsel %vm405, %v1767, 0.0
      %v1792 = vadd.f32 %v1790, %v1791
      %v1793 = vsel %vm405, %v1768, 0.0
      %v1794 = vadd.f32 %v1792, %v1793
      %v1795 = vsel %vm405, %v1769, 0.0
      %v1796 = vadd.f32 %v1794, %v1795
      %v1797 = vsel %vm405, %v1770, 0.0
      %v1798 = vadd.f32 %v1796, %v1797
      %v1799 = vsel %vm405, %v1771, 0.0
      %v1800 = vadd.f32 %v1798, %v1799
      %v1801 = vsel %vm405, %v1772, 0.0
      %v1802 = vadd.f32 %v1800, %v1801
      %v1803 = vsel %vm405, %v1773, 0.0
      %v1804 = vadd.f32 %v1802, %v1803
      %v1805 = vrot.slane %v1804, 4
      %v1806 = vadd.f32 %v1804, %v1805
      %v1807 = vrot.slane %v1806, 2
      %v1808 = vadd.f32 %v1806, %v1807
      %v1809 = vrot.slane %v1808, 1
      %v1810 = vadd.f32 %v1808, %v1809
      %v1811 = vadd.f32 %v1757, %v1810
      %1812 = vst.msk [vmem:[%s239] sm:$0x1] %vm1755, %v1811
      %s1813 = smul.u32 8, %s21
      %p1814 = scmp.lt.s32.totalorder %s20, 1
      %s1815 = scalar_select %p1814, %s20, 1
      %p1816 = scmp.lt.s32.totalorder %s1813, 15
      %s1817 = scalar_select %p1816, %s1813, 15
      %s1818 = smul.addr %s1817, 2
      %s1819 = smul.addr %s1815, 32
      %s1820 = sadd.s32 %s1818, %s1819
      %s1821 = smul.addr %s1820, 4
      %s1822 = scalar_lea.vmem %s2, %s1821
      %p1823 = scmp.lt.s32.totalorder %s20, 1
      %s1824 = scalar_select %p1823, %s20, 1
      %s1825 = scalar_lea.vmem %s3, %s1824
      %p1826 = scmp.lt.s32.totalorder %s20, 1
      %s1827 = scalar_select %p1826, %s20, 1
      %s1828 = scalar_lea.vmem %s4, %s1827
      // Predicated region
      $region33: #{_lambda_.3} parent=27 // pred_check
        %p1829 = pneg %p95
      $region34: #{_lambda_.3} parent=27 // pred_check_branch
        %1831 = sbr.rel (%p1829) target = $region36
      $region35: #{_lambda_.3} parent=27 // pred_region
        %s1832 = smul.u32 8, %s21
      $region36: #{_lambda_.3} parent=27 // pred_fallthru
        _
      // Predicated region
      $region37: #{_lambda_.3} parent=27 // pred_check
        %p1833 = pneg %p121
      $region38: #{_lambda_.3} parent=27 // pred_check_branch
        %1835 = sbr.rel (%p1833) target = $region40
      $region39: #{_lambda_.3} parent=27 // pred_region
        _
      $region40: #{_lambda_.3} parent=27 // pred_fallthru
        _
      // Predicated region
      $region41: #{_lambda_.3} parent=27 // pred_check
        %p1836 = pneg %p147
      $region42: #{_lambda_.3} parent=27 // pred_check_branch
        %1838 = sbr.rel (%p1836) target = $region44
      $region43: #{_lambda_.3} parent=27 // pred_region
        _
      $region44: #{_lambda_.3} parent=27 // pred_fallthru
        _
    $region28: #{_lambda_.3} parent=5 // pred_fallthru
      _
    %p1839 = scmp.le.s32.totalorder 2, %s11
    // Predicated region
    $region45: #{_lambda_.3} parent=5 // pred_check
      %p1840 = pneg %p1839
    $region46: #{_lambda_.3} parent=5 // pred_check_branch
      %1842 = sbr.rel (%p1840) target = $region48
    $region47: #{_lambda_.3} parent=5 // pred_region
      %s1843 = ssub.s32 %s11, 2
      // Predicated region
      $region49: #{_lambda_.3} parent=47 // pred_check
        %p1844 = pneg %p101
      $region50: #{_lambda_.3} parent=47 // pred_check_branch
        %1846 = sbr.rel (%p1844) target = $region52
      $region51: #{_lambda_.3} parent=47 // pred_region
        %s1847 = smul.u32 8, %s23
        %p1848 = scmp.lt.s32.totalorder %s22, 1
        %s1849 = scalar_select %p1848, %s22, 1
        %p1850 = scmp.lt.s32.totalorder %s1847, 15
        %s1851 = scalar_select %p1850, %s1847, 15
        %s1852 = smul.addr %s1851, 2
        %s1853 = smul.addr %s1849, 32
        %s1854 = sadd.s32 %s1852, %s1853
        %s1855 = smul.addr %s1854, 4
        %s1856 = scalar_lea.vmem %s2, %s1855
      $region52: #{_lambda_.3} parent=47 // pred_fallthru
        _
      // Predicated region
      $region53: #{_lambda_.3} parent=47 // pred_check
        %p1857 = pneg %p127
      $region54: #{_lambda_.3} parent=47 // pred_check_branch
        %1859 = sbr.rel (%p1857) target = $region56
      $region55: #{_lambda_.3} parent=47 // pred_region
        %p1860 = scmp.lt.s32.totalorder %s22, 1
        %s1861 = scalar_select %p1860, %s22, 1
        %s1862 = scalar_lea.vmem %s3, %s1861
      $region56: #{_lambda_.3} parent=47 // pred_fallthru
        _
      // Predicated region
      $region57: #{_lambda_.3} parent=47 // pred_check
        %p1863 = pneg %p153
      $region58: #{_lambda_.3} parent=47 // pred_check_branch
        %1865 = sbr.rel (%p1863) target = $region60
      $region59: #{_lambda_.3} parent=47 // pred_region
        %p1866 = scmp.lt.s32.totalorder %s22, 1
        %s1867 = scalar_select %p1866, %s22, 1
        %s1868 = scalar_lea.vmem %s4, %s1867
      $region60: #{_lambda_.3} parent=47 // pred_fallthru
        _
    $region48: #{_lambda_.3} parent=5 // pred_fallthru
      _
  $region6: #{_lambda_.3} parent=0 // loop_footer
    %s15 = sadd.s32 1, %s11
  $region7: #{_lambda_.3} parent=0 // loop_footer_branch
    %10 = sbr.rel target = $region3
  $region8: #{_lambda_.3} parent=0 // loop_exit
    _

// kernel: _lambda_.4
$region0: #{_lambda_.4}
  #allocation0 [shape = 'u32[]', space=smem, size = 0x4, offset = 0x4, fixed_abs, tag = 'smem constant byte address 0x4 - core index']
  #allocation1 [shape = 'u32[144,128]{1,0:T(1,128)}', space=vmem, size = 0x12000, scoped, tag = 'internal scratch']
  %s0 = inlined_call_operand.vmem [shape: bf16[2,18,18,8], index: 0, kind: input, shape index: {}]
  %s1 = inlined_call_operand.vmem [shape: f32[1,1,8], index: 1, kind: input, shape index: {}]
  %s2 = inlined_call_operand.vmem [shape: f32[1,1,8], index: 2, kind: input, shape index: {}]
  %s3 = inlined_call_operand.vmem [shape: bf16[9,8,8], index: 3, kind: input, shape index: {}]
  %s4 = inlined_call_operand.vmem [shape: bf16[2,16,16,8], index: 4, kind: output, shape index: {0}]
  %s5 = inlined_call_operand.vmem [shape: f32[2,1,8], index: 5, kind: output, shape index: {1}]
  %s6 = inlined_call_operand.vmem [shape: f32[2,1,8], index: 6, kind: output, shape index: {2}]
  %7 = xla_tuple %s4, %s5, %s6
  %s8 = sld [smem:[#allocation0]]
  $region69: #{_lambda_.4} parent=0
    _
  %s10 = ssub.s32 1, %s8
  %s11 = scalar_select 0, %s10, %s8
  loop: start=0, step=1, limit=6
  $region2: #{_lambda_.4} parent=0 // loop_pre_header
    _
  $region3: #{_lambda_.4} parent=0 // loop_header
    %s13 = sphi 0, %s17
    %p14 = scmp.ge.s32.totalorder %s13, 6
    %s20 = sphi 0, %s32
    %s21 = sphi 0, %s28
    %s22 = sphi 0, %s20
    %s23 = sphi 0, %s21
    %s24 = sphi 0, %s22
    %s25 = sphi 0, %s23
    %s35 = sphi 0, %s37
    %s38 = sphi 0, %s35
    %s39 = sphi 0, %s38
    %s55 = sphi 0, %s39
    %s59 = sphi 0, %s59
    %s61 = sphi 0, %s59
    %s62 = sphi 0, %s61
    %s76 = sphi 0, %s62
    %s80 = sphi 0, %s80
    %s82 = sphi 0, %s80
    %s83 = sphi 0, %s82
    %s97 = sphi 0, %s83
    %s101 = sphi 0, %s101
    %s103 = sphi 0, %s101
    %s104 = sphi 0, %s103
    %s118 = sphi 0, %s104
    %s126 = sphi 0, %s128
    %s129 = sphi 0, %s126
    %s130 = sphi 0, %s129
    %s146 = sphi 0, %s130
    %s152 = sphi 0, %s154
    %s155 = sphi 0, %s152
    %s156 = sphi 0, %s155
    %s172 = sphi 0, %s156
    %s178 = sphi 0, %s180
    %s181 = sphi 0, %s178
    %s182 = sphi 0, %s181
    %s198 = sphi 0, %s182
  $region4: #{_lambda_.4} parent=0 // loop_header_branch
    %16 = sbr.rel (%p14) target = $region8
  $region5: #{_lambda_.4} parent=0 // loop_body
    %s18 = ssub.s32 %s13, 1
    %s19 = ssub.s32 %s13, 2
    %s26 = sadd.s32 1, %s21
    %p27 = scmp.ge.s32.totalorder %s26, 2
    %s28 = scalar_select %p27, 0, %s26
    %s29 = sadd.s32 1, %s20
    %s30 = scalar_select %p27, %s29, %s20
    %p31 = scmp.ge.s32.totalorder %s30, 2
    %s32 = scalar_select %p31, 0, %s30
    %s33 = ssub.s32 %s20, %s32
    %p34 = scmp.eq.s32.totalorder %s33, 0
    %s36 = sadd.s32 %s35, 1
    %s37 = scalar_select %p34, %s35, %s36
    %p40 = pneg %p34
    %p41 = scmp.eq.s32.totalorder %s13, 3
    %p42 = por %p40, %p41
    %p43 = scmp.ne.s32.totalorder %s35, %s38
    %p44 = scmp.eq.s32.totalorder %s13, 0
    %p45 = por %p43, %p44
    %p46 = scmp.ne.s32.totalorder %s35, %s38
    %p47 = scmp.eq.s32.totalorder %s18, 3
    %p48 = por %p46, %p47
    %p49 = scmp.ne.s32.totalorder %s38, %s39
    %p50 = scmp.eq.s32.totalorder %s18, 0
    %p51 = por %p49, %p50
    %p52 = scmp.ne.s32.totalorder %s38, %s39
    %p53 = scmp.eq.s32.totalorder %s19, 3
    %p54 = por %p52, %p53
    %p56 = scmp.ne.s32.totalorder %s39, %s55
    %p57 = scmp.eq.s32.totalorder %s19, 0
    %p58 = por %p56, %p57
    %s60 = sadd.s32 %s59, 1
    %p63 = scmp.eq.s32.totalorder %s13, 3
    %p64 = scmp.ne.s32.totalorder %s59, %s61
    %p65 = scmp.eq.s32.totalorder %s13, 0
    %p66 = por %p64, %p65
    %p67 = scmp.ne.s32.totalorder %s59, %s61
    %p68 = scmp.eq.s32.totalorder %s18, 3
    %p69 = por %p67, %p68
    %p70 = scmp.ne.s32.totalorder %s61, %s62
    %p71 = scmp.eq.s32.totalorder %s18, 0
    %p72 = por %p70, %p71
    %p73 = scmp.ne.s32.totalorder %s61, %s62
    %p74 = scmp.eq.s32.totalorder %s19, 3
    %p75 = por %p73, %p74
    %p77 = scmp.ne.s32.totalorder %s62, %s76
    %p78 = scmp.eq.s32.totalorder %s19, 0
    %p79 = por %p77, %p78
    %s81 = sadd.s32 %s80, 1
    %p84 = scmp.eq.s32.totalorder %s13, 3
    %p85 = scmp.ne.s32.totalorder %s80, %s82
    %p86 = scmp.eq.s32.totalorder %s13, 0
    %p87 = por %p85, %p86
    %p88 = scmp.ne.s32.totalorder %s80, %s82
    %p89 = scmp.eq.s32.totalorder %s18, 3
    %p90 = por %p88, %p89
    %p91 = scmp.ne.s32.totalorder %s82, %s83
    %p92 = scmp.eq.s32.totalorder %s18, 0
    %p93 = por %p91, %p92
    %p94 = scmp.ne.s32.totalorder %s82, %s83
    %p95 = scmp.eq.s32.totalorder %s19, 3
    %p96 = por %p94, %p95
    %p98 = scmp.ne.s32.totalorder %s83, %s97
    %p99 = scmp.eq.s32.totalorder %s19, 0
    %p100 = por %p98, %p99
    %s102 = sadd.s32 %s101, 1
    %p105 = scmp.eq.s32.totalorder %s13, 3
    %p106 = scmp.ne.s32.totalorder %s101, %s103
    %p107 = scmp.eq.s32.totalorder %s13, 0
    %p108 = por %p106, %p107
    %p109 = scmp.ne.s32.totalorder %s101, %s103
    %p110 = scmp.eq.s32.totalorder %s18, 3
    %p111 = por %p109, %p110
    %p112 = scmp.ne.s32.totalorder %s103, %s104
    %p113 = scmp.eq.s32.totalorder %s18, 0
    %p114 = por %p112, %p113
    %p115 = scmp.ne.s32.totalorder %s103, %s104
    %p116 = scmp.eq.s32.totalorder %s19, 3
    %p117 = por %p115, %p116
    %p119 = scmp.ne.s32.totalorder %s104, %s118
    %p120 = scmp.eq.s32.totalorder %s19, 0
    %p121 = por %p119, %p120
    %s122 = ssub.s32 %s20, %s32
    %s123 = ssub.s32 %s21, %s28
    %s124 = sor.u32 %s122, %s123
    %p125 = scmp.eq.s32.totalorder %s124, 0
    %s127 = sadd.s32 %s126, 1
    %s128 = scalar_select %p125, %s126, %s127
    %p131 = pneg %p125
    %p132 = scmp.eq.s32.totalorder %s13, 3
    %p133 = por %p131, %p132
    %p134 = scmp.ne.s32.totalorder %s126, %s129
    %p135 = scmp.eq.s32.totalorder %s13, 0
    %p136 = por %p134, %p135
    %p137 = scmp.ne.s32.totalorder %s126, %s129
    %p138 = scmp.eq.s32.totalorder %s18, 3
    %p139 = por %p137, %p138
    %p140 = scmp.ne.s32.totalorder %s129, %s130
    %p141 = scmp.eq.s32.totalorder %s18, 0
    %p142 = por %p140, %p141
    %p143 = scmp.ne.s32.totalorder %s129, %s130
    %p144 = scmp.eq.s32.totalorder %s19, 3
    %p145 = por %p143, %p144
    %p147 = scmp.ne.s32.totalorder %s130, %s146
    %p148 = scmp.eq.s32.totalorder %s19, 0
    %p149 = por %p147, %p148
    %s150 = ssub.s32 %s20, %s32
    %p151 = scmp.eq.s32.totalorder %s150, 0
    %s153 = sadd.s32 %s152, 1
    %s154 = scalar_select %p151, %s152, %s153
    %p157 = pneg %p151
    %p158 = scmp.eq.s32.totalorder %s13, 3
    %p159 = por %p157, %p158
    %p160 = scmp.ne.s32.totalorder %s152, %s155
    %p161 = scmp.eq.s32.totalorder %s13, 0
    %p162 = por %p160, %p161
    %p163 = scmp.ne.s32.totalorder %s152, %s155
    %p164 = scmp.eq.s32.totalorder %s18, 3
    %p165 = por %p163, %p164
    %p166 = scmp.ne.s32.totalorder %s155, %s156
    %p167 = scmp.eq.s32.totalorder %s18, 0
    %p168 = por %p166, %p167
    %p169 = scmp.ne.s32.totalorder %s155, %s156
    %p170 = scmp.eq.s32.totalorder %s19, 3
    %p171 = por %p169, %p170
    %p173 = scmp.ne.s32.totalorder %s156, %s172
    %p174 = scmp.eq.s32.totalorder %s19, 0
    %p175 = por %p173, %p174
    %s176 = ssub.s32 %s20, %s32
    %p177 = scmp.eq.s32.totalorder %s176, 0
    %s179 = sadd.s32 %s178, 1
    %s180 = scalar_select %p177, %s178, %s179
    %p183 = pneg %p177
    %p184 = scmp.eq.s32.totalorder %s13, 3
    %p185 = por %p183, %p184
    %p186 = scmp.ne.s32.totalorder %s178, %s181
    %p187 = scmp.eq.s32.totalorder %s13, 0
    %p188 = por %p186, %p187
    %p189 = scmp.ne.s32.totalorder %s178, %s181
    %p190 = scmp.eq.s32.totalorder %s18, 3
    %p191 = por %p189, %p190
    %p192 = scmp.ne.s32.totalorder %s181, %s182
    %p193 = scmp.eq.s32.totalorder %s18, 0
    %p194 = por %p192, %p193
    %p195 = scmp.ne.s32.totalorder %s181, %s182
    %p196 = scmp.eq.s32.totalorder %s19, 3
    %p197 = por %p195, %p196
    %p199 = scmp.ne.s32.totalorder %s182, %s198
    %p200 = scmp.eq.s32.totalorder %s19, 0
    %p201 = por %p199, %p200
    %p202 = scmp.le.s32.totalorder 1, %s13
    %p203 = scmp.lt.s32.totalorder %s13, 5
    %p204 = pnand %p202, %p203
    %p205 = pneg %p204
    // Predicated region
    $region9: #{_lambda_.4} parent=5 // pred_check
      _
    $region10: #{_lambda_.4} parent=5 // pred_check_branch
      %207 = sbr.rel (%p204) target = $region12
    $region11: #{_lambda_.4} parent=5 // pred_region
      %s208 = ssub.s32 %s13, 1
      // Predicated region
      $region13: #{_lambda_.4} parent=11 // pred_check
        %p209 = pneg %p72
      $region14: #{_lambda_.4} parent=11 // pred_check_branch
        %211 = sbr.rel (%p209) target = $region16
      $region15: #{_lambda_.4} parent=11 // pred_region
        _
      $region16: #{_lambda_.4} parent=11 // pred_fallthru
        _
      // Predicated region
      $region17: #{_lambda_.4} parent=11 // pred_check
        %p212 = pneg %p93
      $region18: #{_lambda_.4} parent=11 // pred_check_branch
        %214 = sbr.rel (%p212) target = $region20
      $region19: #{_lambda_.4} parent=11 // pred_region
        _
      $region20: #{_lambda_.4} parent=11 // pred_fallthru
        _
      // Predicated region
      $region21: #{_lambda_.4} parent=11 // pred_check
        %p215 = pneg %p114
      $region22: #{_lambda_.4} parent=11 // pred_check_branch
        %217 = sbr.rel (%p215) target = $region24
      $region23: #{_lambda_.4} parent=11 // pred_region
        _
      $region24: #{_lambda_.4} parent=11 // pred_fallthru
        _
    $region12: #{_lambda_.4} parent=5 // pred_fallthru
      _
    %p218 = scmp.lt.s32.totalorder %s13, 4
    // Predicated region
    $region25: #{_lambda_.4} parent=5 // pred_check
      %p219 = pneg %p218
    $region26: #{_lambda_.4} parent=5 // pred_check_branch
      %221 = sbr.rel (%p219) target = $region28
    $region27: #{_lambda_.4} parent=5 // pred_region
      // Predicated region
      $region29: #{_lambda_.4} parent=27 // pred_check
        %p222 = pneg %p45
      $region30: #{_lambda_.4} parent=27 // pred_check_branch
        %224 = sbr.rel (%p222) target = $region32
      $region31: #{_lambda_.4} parent=27 // pred_region
        %p225 = scmp.lt.s32.totalorder %s20, 1
        %s226 = scalar_select %p225, %s20, 1
        %s227 = smul.addr %s226, 54
        %s228 = smul.addr %s227, 4
        %s229 = scalar_lea.vmem %s0, %s228
      $region32: #{_lambda_.4} parent=27 // pred_fallthru
        _
    $region28: #{_lambda_.4} parent=5 // pred_fallthru
      _
    %p230 = scmp.le.s32.totalorder 1, %s13
    %p231 = scmp.lt.s32.totalorder %s13, 5
    %p232 = pnand %p230, %p231
    %p233 = pneg %p232
    // Predicated region
    $region33: #{_lambda_.4} parent=5 // pred_check
      _
    $region34: #{_lambda_.4} parent=5 // pred_check_branch
      %235 = sbr.rel (%p232) target = $region36
    $region35: #{_lambda_.4} parent=5 // pred_region
      %s236 = ssub.s32 %s13, 1
      %p237 = scmp.lt.s32.totalorder %s22, 1
      %s238 = scalar_select %p237, %s22, 1
      %s239 = smul.addr %s238, 54
      %s240 = smul.addr %s239, 4
      %s241 = scalar_lea.vmem %s0, %s240
      %p242 = pneg %p51
      %p243 = pneg %p48
      %p244 = pneg %p72
      %p245 = pneg %p69
      %p246 = pneg %p93
      %p247 = pneg %p90
      %p248 = pneg %p114
      %p249 = pneg %p111
      %p250 = pneg %p142
      %p251 = pneg %p139
      %s252 = smul.u32 8, %s23
      %p253 = scmp.lt.s32.totalorder %s22, 1
      %s254 = scalar_select %p253, %s22, 1
      %p255 = scmp.lt.s32.totalorder %s252, 15
      %s256 = scalar_select %p255, %s252, 15
      %s257 = smul.addr %s256, 2
      %s258 = smul.addr %s254, 32
      %s259 = sadd.s32 %s257, %s258
      %s260 = smul.addr %s259, 4
      %s261 = scalar_lea.vmem %s4, %s260
      %p262 = pneg %p168
      %p263 = pneg %p165
      %p264 = scmp.lt.s32.totalorder %s22, 1
      %s265 = scalar_select %p264, %s22, 1
      %s266 = scalar_lea.vmem %s5, %s265
      %p267 = pneg %p194
      %p268 = pneg %p191
      %p269 = scmp.lt.s32.totalorder %s22, 1
      %s270 = scalar_select %p269, %s22, 1
      %s271 = scalar_lea.vmem %s6, %s270
      %p272 = scmp.lt.s32.totalorder %s22, 1
      %s273 = scalar_select %p272, %s22, 1
      %s274 = smul.addr %s273, 54
      %s275 = smul.addr %s274, 4
      %s276 = scalar_lea.vmem %s0, %s275
      %s277 = smul.u32 8, %s23
      %p278 = scmp.lt.s32.totalorder %s22, 1
      %s279 = scalar_select %p278, %s22, 1
      %p280 = scmp.lt.s32.totalorder %s277, 15
      %s281 = scalar_select %p280, %s277, 15
      %s282 = smul.addr %s281, 2
      %s283 = smul.addr %s279, 32
      %s284 = sadd.s32 %s282, %s283
      %s285 = smul.addr %s284, 4
      %s286 = scalar_lea.vmem %s4, %s285
      %s287 = smul.u32 8, %s23
      %p288 = scmp.lt.s32.totalorder %s22, 1
      %s289 = scalar_select %p288, %s22, 1
      %s290 = scalar_lea.vmem %s5, %s289
      %p291 = scmp.lt.s32.totalorder %s22, 1
      %s292 = scalar_select %p291, %s22, 1
      %s293 = scalar_lea.vmem %s6, %s292
      %s295 = smul.u32 %s23, 8
      %s296 = smul.u32 %s295, 3
      %s297 = smul.addr %s296, 4
      %s298 = scalar_lea.vmem %s276, %s297
      %v299 = vld [vmem:[%s298] sm:$0xf]
      %v300 = vld [vmem:[%s298 + $0x4] sm:$0xf]
      %v301 = vld [vmem:[%s298 + $0x8] sm:$0x1]
      %v302 = vld [vmem:[%s298 + $0xc] sm:$0xf]
      %v303 = vld [vmem:[%s298 + $0x10] sm:$0xf]
      %v304 = vld [vmem:[%s298 + $0x14] sm:$0x1]
      %v305 = vld [vmem:[%s298 + $0x18] sm:$0xf]
      %v306 = vld [vmem:[%s298 + $0x1c] sm:$0xf]
      %v307 = vld [vmem:[%s298 + $0x20] sm:$0x1]
      %v308 = vld [vmem:[%s298 + $0x24] sm:$0xf]
      %v309 = vld [vmem:[%s298 + $0x28] sm:$0xf]
      %v310 = vld [vmem:[%s298 + $0x2c] sm:$0x1]
      %v311 = vld [vmem:[%s298 + $0x30] sm:$0xf]
      %v312 = vld [vmem:[%s298 + $0x34] sm:$0xf]
      %v313 = vld [vmem:[%s298 + $0x38] sm:$0x1]
      %v314 = vld [vmem:[%s298 + $0x3c] sm:$0xf]
      %v315 = vld [vmem:[%s298 + $0x40] sm:$0xf]
      %v316 = vld [vmem:[%s298 + $0x44] sm:$0x1]
      %v317 = vld [vmem:[%s298 + $0x48] sm:$0xf]
      %v318 = vld [vmem:[%s298 + $0x4c] sm:$0xf]
      %v319 = vld [vmem:[%s298 + $0x50] sm:$0x1]
      %v320 = vld [vmem:[%s298 + $0x54] sm:$0xf]
      %v321 = vld [vmem:[%s298 + $0x58] sm:$0xf]
      %v322 = vld [vmem:[%s298 + $0x5c] sm:$0x1]
      %v323 = vld [vmem:[%s298 + $0x60] sm:$0xf]
      %v324 = vld [vmem:[%s298 + $0x64] sm:$0xf]
      %v325 = vld [vmem:[%s298 + $0x68] sm:$0x1]
      %v326 = vld [vmem:[%s298 + $0x6c] sm:$0xf]
      %v327 = vld [vmem:[%s298 + $0x70] sm:$0xf]
      %v328 = vld [vmem:[%s298 + $0x74] sm:$0x1]
      %v329 = vunpack.c.l.bf16 %v299
      %v330 = vunpack.c.l.bf16 %v300
      %v331 = vunpack.c.l.bf16 %v301
      %v332 = vunpack.c.l.bf16 %v302
      %v333 = vunpack.c.l.bf16 %v303
      %v334 = vunpack.c.l.bf16 %v304
      %v335 = vunpack.c.l.bf16 %v305
      %v336 = vunpack.c.l.bf16 %v306
      %v337 = vunpack.c.l.bf16 %v307
      %v338 = vunpack.c.l.bf16 %v308
      %v339 = vunpack.c.l.bf16 %v309
      %v340 = vunpack.c.l.bf16 %v310
      %v341 = vunpack.c.l.bf16 %v311
      %v342 = vunpack.c.l.bf16 %v312
      %v343 = vunpack.c.l.bf16 %v313
      %v344 = vunpack.c.l.bf16 %v314
      %v345 = vunpack.c.l.bf16 %v315
      %v346 = vunpack.c.l.bf16 %v316
      %v347 = vunpack.c.l.bf16 %v317
      %v348 = vunpack.c.l.bf16 %v318
      %v349 = vunpack.c.l.bf16 %v319
      %v350 = vunpack.c.l.bf16 %v320
      %v351 = vunpack.c.l.bf16 %v321
      %v352 = vunpack.c.l.bf16 %v322
      %v353 = vunpack.c.l.bf16 %v323
      %v354 = vunpack.c.l.bf16 %v324
      %v355 = vunpack.c.l.bf16 %v325
      %v356 = vunpack.c.l.bf16 %v326
      %v357 = vunpack.c.l.bf16 %v327
      %v358 = vunpack.c.l.bf16 %v328
      %v359 = vld [vmem:[%s1] sm:$0x1]
      %v361 = vlaneseq
      %v362 = vshrl.u32 %v361, 7
      %v363 = vsub.s32 0, %v362
      %v364 = vrot.slane %v359, %v363
      %v366 = vmul.f32 %v329, %v364
      %v367 = vmul.f32 %v330, %v364
      %v368 = vmul.f32 %v331, %v364
      %v369 = vmul.f32 %v332, %v364
      %v370 = vmul.f32 %v333, %v364
      %v371 = vmul.f32 %v334, %v364
      %v372 = vmul.f32 %v335, %v364
      %v373 = vmul.f32 %v336, %v364
      %v374 = vmul.f32 %v337, %v364
      %v375 = vmul.f32 %v338, %v364
      %v376 = vmul.f32 %v339, %v364
      %v377 = vmul.f32 %v340, %v364
      %v378 = vmul.f32 %v341, %v364
      %v379 = vmul.f32 %v342, %v364
      %v380 = vmul.f32 %v343, %v364
      %v381 = vmul.f32 %v344, %v364
      %v382 = vmul.f32 %v345, %v364
      %v383 = vmul.f32 %v346, %v364
      %v384 = vmul.f32 %v347, %v364
      %v385 = vmul.f32 %v348, %v364
      %v386 = vmul.f32 %v349, %v364
      %v387 = vmul.f32 %v350, %v364
      %v388 = vmul.f32 %v351, %v364
      %v389 = vmul.f32 %v352, %v364
      %v390 = vmul.f32 %v353, %v364
      %v391 = vmul.f32 %v354, %v364
      %v392 = vmul.f32 %v355, %v364
      %v393 = vmul.f32 %v356, %v364
      %v394 = vmul.f32 %v357, %v364
      %v395 = vmul.f32 %v358, %v364
      %v396 = vld [vmem:[%s2] sm:$0x1]
      %v398 = vlaneseq
      %v399 = vshrl.u32 %v398, 7
      %v400 = vsub.s32 0, %v399
      %v401 = vrot.slane %v396, %v400
      %v403 = vadd.f32 %v366, %v401
      %v404 = vadd.f32 %v367, %v401
      %v405 = vadd.f32 %v368, %v401
      %v406 = vadd.f32 %v369, %v401
      %v407 = vadd.f32 %v370, %v401
      %v408 = vadd.f32 %v371, %v401
      %v409 = vadd.f32 %v372, %v401
      %v410 = vadd.f32 %v373, %v401
      %v411 = vadd.f32 %v374, %v401
      %v412 = vadd.f32 %v375, %v401
      %v413 = vadd.f32 %v376, %v401
      %v414 = vadd.f32 %v377, %v401
      %v415 = vadd.f32 %v378, %v401
      %v416 = vadd.f32 %v379, %v401
      %v417 = vadd.f32 %v380, %v401
      %v418 = vadd.f32 %v381, %v401
      %v419 = vadd.f32 %v382, %v401
      %v420 = vadd.f32 %v383, %v401
      %v421 = vadd.f32 %v384, %v401
      %v422 = vadd.f32 %v385, %v401
      %v423 = vadd.f32 %v386, %v401
      %v424 = vadd.f32 %v387, %v401
      %v425 = vadd.f32 %v388, %v401
      %v426 = vadd.f32 %v389, %v401
      %v427 = vadd.f32 %v390, %v401
      %v428 = vadd.f32 %v391, %v401
      %v429 = vadd.f32 %v392, %v401
      %v430 = vadd.f32 %v393, %v401
      %v431 = vadd.f32 %v394, %v401
      %v432 = vadd.f32 %v395, %v401
      %v433 = vmax.f32 %v403, 0.0
      %v434 = vmax.f32 %v404, 0.0
      %v435 = vmax.f32 %v405, 0.0
      %v436 = vmax.f32 %v406, 0.0
      %v437 = vmax.f32 %v407, 0.0
      %v438 = vmax.f32 %v408, 0.0
      %v439 = vmax.f32 %v409, 0.0
      %v440 = vmax.f32 %v410, 0.0
      %v441 = vmax.f32 %v411, 0.0
      %v442 = vmax.f32 %v412, 0.0
      %v443 = vmax.f32 %v413, 0.0
      %v444 = vmax.f32 %v414, 0.0
      %v445 = vmax.f32 %v415, 0.0
      %v446 = vmax.f32 %v416, 0.0
      %v447 = vmax.f32 %v417, 0.0
      %v448 = vmax.f32 %v418, 0.0
      %v449 = vmax.f32 %v419, 0.0
      %v450 = vmax.f32 %v420, 0.0
      %v451 = vmax.f32 %v421, 0.0
      %v452 = vmax.f32 %v422, 0.0
      %v453 = vmax.f32 %v423, 0.0
      %v454 = vmax.f32 %v424, 0.0
      %v455 = vmax.f32 %v425, 0.0
      %v456 = vmax.f32 %v426, 0.0
      %v457 = vmax.f32 %v427, 0.0
      %v458 = vmax.f32 %v428, 0.0
      %v459 = vmax.f32 %v429, 0.0
      %v460 = vmax.f32 %v430, 0.0
      %v461 = vmax.f32 %v431, 0.0
      %v462 = vmax.f32 %v432, 0.0
      %v463 = vstv %s295
      %v464 = vadd.s32 %v463, 1
      %v465 = vadd.s32 %v463, 2
      %v466 = vadd.s32 %v463, 3
      %v467 = vadd.s32 %v463, 4
      %v468 = vadd.s32 %v463, 5
      %v469 = vadd.s32 %v463, 6
      %v470 = vadd.s32 %v463, 7
      %v471 = vadd.s32 %v463, 8
      %v472 = vadd.s32 %v463, 9
      %vm473 = vcmp.ge.s32.totalorder %v463, 1
      %vm474 = vcmp.ge.s32.totalorder %v464, 1
      %vm475 = vcmp.ge.s32.totalorder %v465, 1
      %vm476 = vcmp.ge.s32.totalorder %v466, 1
      %vm477 = vcmp.ge.s32.totalorder %v467, 1
      %vm478 = vcmp.ge.s32.totalorder %v468, 1
      %vm479 = vcmp.ge.s32.totalorder %v469, 1
      %vm480 = vcmp.ge.s32.totalorder %v470, 1
      %vm481 = vcmp.ge.s32.totalorder %v471, 1
      %vm482 = vcmp.ge.s32.totalorder %v472, 1
      %vm483 = vcmp.le.s32.totalorder %v463, 16
      %vm484 = vcmp.le.s32.totalorder %v464, 16
      %vm485 = vcmp.le.s32.totalorder %v465, 16
      %vm486 = vcmp.le.s32.totalorder %v466, 16
      %vm487 = vcmp.le.s32.totalorder %v467, 16
      %vm488 = vcmp.le.s32.totalorder %v468, 16
      %vm489 = vcmp.le.s32.totalorder %v469, 16
      %vm490 = vcmp.le.s32.totalorder %v470, 16
      %vm491 = vcmp.le.s32.totalorder %v471, 16
      %vm492 = vcmp.le.s32.totalorder %v472, 16
      %vm493 = vmand %vm473, %vm483
      %vm494 = vmand %vm474, %vm484
      %vm495 = vmand %vm475, %vm485
      %vm496 = vmand %vm476, %vm486
      %vm497 = vmand %vm477, %vm487
      %vm498 = vmand %vm478, %vm488
      %vm499 = vmand %vm479, %vm489
      %vm500 = vmand %vm480, %vm490
      %vm501 = vmand %vm481, %vm491
      %vm502 = vmand %vm482, %vm492
      %v503 = vlaneseq
      %v504 = vshrl.u32 %v503, 7
      %v505 = vadd.s32 %v504, 8
      %v506 = vadd.s32 %v504, 16
      %vm507 = vcmp.ge.s32.totalorder %v504, 1
      %vm508 = vcmp.ge.s32.totalorder %v505, 1
      %vm509 = vcmp.ge.s32.totalorder %v506, 1
      %vm510 = vcmp.le.s32.totalorder %v504, 16
      %vm511 = vcmp.le.s32.totalorder %v505, 16
      %vm512 = vcmp.le.s32.totalorder %v506, 16
      %vm513 = vmand %vm507, %vm510
      %vm514 = vmand %vm508, %vm511
      %vm515 = vmand %vm509, %vm512
      %v516 = vsel %vm493, 1, 0
      %v517 = vsel %vm494, 1, 0
      %v518 = vsel %vm495, 1, 0
      %v519 = vsel %vm496, 1, 0
      %v520 = vsel %vm497, 1, 0
      %v521 = vsel %vm498, 1, 0
      %v522 = vsel %vm499, 1, 0
      %v523 = vsel %vm500, 1, 0
      %v524 = vsel %vm501, 1, 0
      %v525 = vsel %vm502, 1, 0
      %vm526 = vcmp.eq.s32.totalorder %v516, 1
      %vm527 = vcmp.eq.s32.totalorder %v517, 1
      %vm528 = vcmp.eq.s32.totalorder %v518, 1
      %vm529 = vcmp.eq.s32.totalorder %v519, 1
      %vm530 = vcmp.eq.s32.totalorder %v520, 1
      %vm531 = vcmp.eq.s32.totalorder %v521, 1
      %vm532 = vcmp.eq.s32.totalorder %v522, 1
      %vm533 = vcmp.eq.s32.totalorder %v523, 1
      %vm534 = vcmp.eq.s32.totalorder %v524, 1
      %vm535 = vcmp.eq.s32.totalorder %v525, 1
      %v536 = vsel %vm513, 1, 0
      %v537 = vsel %vm514, 1, 0
      %v538 = vsel %vm515, 1, 0
      %vm539 = vcmp.eq.s32.totalorder %v536, 1
      %vm540 = vcmp.eq.s32.totalorder %v537, 1
      %vm541 = vcmp.eq.s32.totalorder %v538, 1
      %vm542 = vmand %vm526, %vm539
      %vm543 = vmand %vm526, %vm540
      %vm544 = vmand %vm526, %vm541
      %vm545 = vmand %vm527, %vm539
      %vm546 = vmand %vm527, %vm540
      %vm547 = vmand %vm527, %vm541
      %vm548 = vmand %vm528, %vm539
      %vm549 = vmand %vm528, %vm540
      %vm550 = vmand %vm528, %vm541
      %vm551 = vmand %vm529, %vm539
      %vm552 = vmand %vm529, %vm540
      %vm553 = vmand %vm529, %vm541
      %vm554 = vmand %vm530, %vm539
      %vm555 = vmand %vm530, %vm540
      %vm556 = vmand %vm530, %vm541
      %vm557 = vmand %vm531, %vm539
      %vm558 = vmand %vm531, %vm540
      %vm559 = vmand %vm531, %vm541
      %vm560 = vmand %vm532, %vm539
      %vm561 = vmand %vm532, %vm540
      %vm562 = vmand %vm532, %vm541
      %vm563 = vmand %vm533, %vm539
      %vm564 = vmand %vm533, %vm540
      %vm565 = vmand %vm533, %vm541
      %vm566 = vmand %vm534, %vm539
      %vm567 = vmand %vm534, %vm540
      %vm568 = vmand %vm534, %vm541
      %vm569 = vmand %vm535, %vm539
      %vm570 = vmand %vm535, %vm540
      %vm571 = vmand %vm535, %vm541
      %v572 = vsel %vm542, 1, 0
      %v573 = vsel %vm543, 1, 0
      %v574 = vsel %vm544, 1, 0
      %v575 = vsel %vm545, 1, 0
      %v576 = vsel %vm546, 1, 0
      %v577 = vsel %vm547, 1, 0
      %v578 = vsel %vm548, 1, 0
      %v579 = vsel %vm549, 1, 0
      %v580 = vsel %vm550, 1, 0
      %v581 = vsel %vm551, 1, 0
      %v582 = vsel %vm552, 1, 0
      %v583 = vsel %vm553, 1, 0
      %v584 = vsel %vm554, 1, 0
      %v585 = vsel %vm555, 1, 0
      %v586 = vsel %vm556, 1, 0
      %v587 = vsel %vm557, 1, 0
      %v588 = vsel %vm558, 1, 0
      %v589 = vsel %vm559, 1, 0
      %v590 = vsel %vm560, 1, 0
      %v591 = vsel %vm561, 1, 0
      %v592 = vsel %vm562, 1, 0
      %v593 = vsel %vm563, 1, 0
      %v594 = vsel %vm564, 1, 0
      %v595 = vsel %vm565, 1, 0
      %v596 = vsel %vm566, 1, 0
      %v597 = vsel %vm567, 1, 0
      %v598 = vsel %vm568, 1, 0
      %v599 = vsel %vm569, 1, 0
      %v600 = vsel %vm570, 1, 0
      %v601 = vsel %vm571, 1, 0
      %vm602 = vcmp.eq.s32.totalorder %v572, 1
      %vm603 = vcmp.eq.s32.totalorder %v573, 1
      %vm604 = vcmp.eq.s32.totalorder %v574, 1
      %vm605 = vcmp.eq.s32.totalorder %v575, 1
      %vm606 = vcmp.eq.s32.totalorder %v576, 1
      %vm607 = vcmp.eq.s32.totalorder %v577, 1
      %vm608 = vcmp.eq.s32.totalorder %v578, 1
      %vm609 = vcmp.eq.s32.totalorder %v579, 1
      %vm610 = vcmp.eq.s32.totalorder %v580, 1
      %vm611 = vcmp.eq.s32.totalorder %v581, 1
      %vm612 = vcmp.eq.s32.totalorder %v582, 1
      %vm613 = vcmp.eq.s32.totalorder %v583, 1
      %vm614 = vcmp.eq.s32.totalorder %v584, 1
      %vm615 = vcmp.eq.s32.totalorder %v585, 1
      %vm616 = vcmp.eq.s32.totalorder %v586, 1
      %vm617 = vcmp.eq.s32.totalorder %v587, 1
      %vm618 = vcmp.eq.s32.totalorder %v588, 1
      %vm619 = vcmp.eq.s32.totalorder %v589, 1
      %vm620 = vcmp.eq.s32.totalorder %v590, 1
      %vm621 = vcmp.eq.s32.totalorder %v591, 1
      %vm622 = vcmp.eq.s32.totalorder %v592, 1
      %vm623 = vcmp.eq.s32.totalorder %v593, 1
      %vm624 = vcmp.eq.s32.totalorder %v594, 1
      %vm625 = vcmp.eq.s32.totalorder %v595, 1
      %vm626 = vcmp.eq.s32.totalorder %v596, 1
      %vm627 = vcmp.eq.s32.totalorder %v597, 1
      %vm628 = vcmp.eq.s32.totalorder %v598, 1
      %vm629 = vcmp.eq.s32.totalorder %v599, 1
      %vm630 = vcmp.eq.s32.totalorder %v600, 1
      %vm631 = vcmp.eq.s32.totalorder %v601, 1
      %v632 = vsel %vm602, %v433, 0.0
      %v633 = vsel %vm603, %v434, 0.0
      %v634 = vsel %vm604, %v435, 0.0
      %v635 = vsel %vm605, %v436, 0.0
      %v636 = vsel %vm606, %v437, 0.0
      %v637 = vsel %vm607, %v438, 0.0
      %v638 = vsel %vm608, %v439, 0.0
      %v639 = vsel %vm609, %v440, 0.0
      %v640 = vsel %vm610, %v441, 0.0
      %v641 = vsel %vm611, %v442, 0.0
      %v642 = vsel %vm612, %v443, 0.0
      %v643 = vsel %vm613, %v444, 0.0
      %v644 = vsel %vm614, %v445, 0.0
      %v645 = vsel %vm615, %v446, 0.0
      %v646 = vsel %vm616, %v447, 0.0
      %v647 = vsel %vm617, %v448, 0.0
      %v648 = vsel %vm618, %v449, 0.0
      %v649 = vsel %vm619, %v450, 0.0
      %v650 = vsel %vm620, %v451, 0.0
      %v651 = vsel %vm621, %v452, 0.0
      %v652 = vsel %vm622, %v453, 0.0
      %v653 = vsel %vm623, %v454, 0.0
      %v654 = vsel %vm624, %v455, 0.0
      %v655 = vsel %vm625, %v456, 0.0
      %v656 = vsel %vm626, %v457, 0.0
      %v657 = vsel %vm627, %v458, 0.0
      %v658 = vsel %vm628, %v459, 0.0
      %v659 = vsel %vm629, %v460, 0.0
      %v660 = vsel %vm630, %v461, 0.0
      %v661 = vsel %vm631, %v462, 0.0
      %v662 = vpack.c.bf16 %v633, %v632
      %v663 = vpack.c.bf16 %v636, %v635
      %v664 = vpack.c.bf16 %v639, %v638
      %v665 = vpack.c.bf16 %v642, %v641
      %v666 = vpack.c.bf16 %v645, %v644
      %v667 = vpack.c.bf16 %v648, %v647
      %v668 = vpack.c.bf16 %v651, %v650
      %v669 = vpack.c.bf16 %v654, %v653
      %v670 = vld [vmem:[%s3] sm:$0xf]
      %vm695 = vcmask 1046528
      %v696 = vrot.slane %v632, 1
      %v697 = vrot.slane %v633, 1
      %v698 = vsel %vm695, %v696, %v697
      %v699 = vrot.slane %v634, 1
      %v700 = vsel %vm695, %v697, %v699
      %v701 = vrot.slane %v635, 1
      %v702 = vrot.slane %v636, 1
      %v703 = vsel %vm695, %v701, %v702
      %v704 = vrot.slane %v637, 1
      %v705 = vsel %vm695, %v702, %v704
      %v706 = vrot.slane %v638, 1
      %v707 = vrot.slane %v639, 1
      %v708 = vsel %vm695, %v706, %v707
      %v709 = vrot.slane %v640, 1
      %v710 = vsel %vm695, %v707, %v709
      %v711 = vrot.slane %v641, 1
      %v712 = vrot.slane %v642, 1
      %v713 = vsel %vm695, %v711, %v712
      %v714 = vrot.slane %v643, 1
      %v715 = vsel %vm695, %v712, %v714
      %v716 = vrot.slane %v644, 1
      %v717 = vrot.slane %v645, 1
      %v718 = vsel %vm695, %v716, %v717
      %v719 = vrot.slane %v646, 1
      %v720 = vsel %vm695, %v717, %v719
      %v721 = vrot.slane %v647, 1
      %v722 = vrot.slane %v648, 1
      %v723 = vsel %vm695, %v721, %v722
      %v724 = vrot.slane %v649, 1
      %v725 = vsel %vm695, %v722, %v724
      %v726 = vrot.slane %v650, 1
      %v727 = vrot.slane %v651, 1
      %v728 = vsel %vm695, %v726, %v727
      %v729 = vrot.slane %v652, 1
      %v730 = vsel %vm695, %v727, %v729
      %v731 = vrot.slane %v653, 1
      %v732 = vrot.slane %v654, 1
      %v733 = vsel %vm695, %v731, %v732
      %v734 = vrot.slane %v655, 1
      %v735 = vsel %vm695, %v732, %v734
      %v752 = vpack.c.bf16 %v700, %v698
      %v753 = vpack.c.bf16 %v705, %v703
      %v754 = vpack.c.bf16 %v710, %v708
      %v755 = vpack.c.bf16 %v715, %v713
      %v756 = vpack.c.bf16 %v720, %v718
      %v757 = vpack.c.bf16 %v725, %v723
      %v758 = vpack.c.bf16 %v730, %v728
      %v759 = vpack.c.bf16 %v735, %v733
      %s760 = scalar_lea.vmem %s3, 4
      %v761 = vld [vmem:[%s760] sm:$0xf]
      %vm762 = vcmask 64512
      %v764 = vsel %vm762, %v752, 0
      %v767 = vsel %vm762, %v753, 0
      %v770 = vsel %vm762, %v754, 0
      %v773 = vsel %vm762, %v755, 0
      %v776 = vsel %vm762, %v756, 0
      %v779 = vsel %vm762, %v757, 0
      %v782 = vsel %vm762, %v758, 0
      %v785 = vsel %vm762, %v759, 0
      %vm787 = vcmask 1043456
      %v789 = vsel %vm787, %v761, 0
      %791 = vmatprep.subr.bf16.mxu0 0
      %792 = vmatpush1.bf16.msra.mxu0 %v789
      %793 = vmatprep.subr.bf16.mxu0 0
      %794 = vmatpush1.bf16.msra.mxu0 0
      %795 = vmatprep.subr.bf16.mxu0 0
      %796 = vmatpush1.bf16.msra.mxu0 0
      %797 = vmatprep.subr.bf16.mxu0 0
      %798 = vmatpush1.bf16.msra.mxu0 0
      %799 = vmatprep.subr.bf16.mxu0 0
      %800 = vmatpush1.bf16.msra.mxu0 0
      %801 = vmatprep.subr.bf16.mxu0 0
      %802 = vmatpush1.bf16.msra.mxu0 0
      %803 = vmatprep.subr.bf16.mxu0 0
      %804 = vmatpush1.bf16.msra.mxu0 0
      %805 = vmatprep.subr.bf16.mxu0 0
      %806 = vmatpush1.bf16.msra.mxu0 0
      %807 = vmatprep.subr.bf16.mxu0 0
      %808 = vmatpush1.bf16.msra.mxu0 0
      %809 = vmatprep.subr.bf16.mxu0 0
      %810 = vmatpush1.bf16.msra.mxu0 0
      %811 = vmatprep.subr.bf16.mxu0 0
      %812 = vmatpush1.bf16.msra.mxu0 0
      %813 = vmatprep.subr.bf16.mxu0 0
      %814 = vmatpush1.bf16.msra.mxu0 0
      %815 = vmatprep.subr.bf16.mxu0 0
      %816 = vmatpush1.bf16.msra.mxu0 0
      %817 = vmatprep.subr.bf16.mxu0 0
      %818 = vmatpush1.bf16.msra.mxu0 0
      %819 = vmatprep.subr.bf16.mxu0 0
      %820 = vmatpush1.bf16.msra.mxu0 0
      %821 = vmatprep.subr.bf16.mxu0 0
      %822 = vmatpush1.bf16.msra.mxu0 0
      %823 = vmatprep.mubr.bf16.mxu0 0
      %824 = vmatmul.mubr.bf16.gmra.mrb[0].mxu0 %v764
      %v825 = vpop.f32.mrb[0].mxu0
      %v826 = vadd.f32 0.0, %v825
      %v827 = vpop.f32.mrb[0].mxu0
      %v828 = vpop.f32.mrb[0].mxu0
      %v829 = vadd.f32 0.0, %v828
      %v830 = vpop.f32.mrb[0].mxu0
      %831 = vmatprep.mubr.bf16.mxu0 0
      %832 = vmatmul.mubr.bf16.gmra.mrb[0].mxu0 %v767
      %v833 = vpop.f32.mrb[0].mxu0
      %v834 = vadd.f32 0.0, %v833
      %v835 = vpop.f32.mrb[0].mxu0
      %v836 = vpop.f32.mrb[0].mxu0
      %v837 = vadd.f32 0.0, %v836
      %v838 = vpop.f32.mrb[0].mxu0
      %839 = vmatprep.mubr.bf16.mxu0 0
      %840 = vmatmul.mubr.bf16.gmra.mrb[0].mxu0 %v770
      %v841 = vpop.f32.mrb[0].mxu0
      %v842 = vadd.f32 0.0, %v841
      %v843 = vpop.f32.mrb[0].mxu0
      %v844 = vpop.f32.mrb[0].mxu0
      %v845 = vadd.f32 0.0, %v844
      %v846 = vpop.f32.mrb[0].mxu0
      %847 = vmatprep.mubr.bf16.mxu0 0
      %848 = vmatmul.mubr.bf16.gmra.mrb[0].mxu0 %v773
      %v849 = vpop.f32.mrb[0].mxu0
      %v850 = vadd.f32 0.0, %v849
      %v851 = vpop.f32.mrb[0].mxu0
      %v852 = vpop.f32.mrb[0].mxu0
      %v853 = vadd.f32 0.0, %v852
      %v854 = vpop.f32.mrb[0].mxu0
      %855 = vmatprep.mubr.bf16.mxu0 0
      %856 = vmatmul.mubr.bf16.gmra.mrb[0].mxu0 %v776
      %v857 = vpop.f32.mrb[0].mxu0
      %v858 = vadd.f32 0.0, %v857
      %v859 = vpop.f32.mrb[0].mxu0
      %v860 = vpop.f32.mrb[0].mxu0
      %v861 = vadd.f32 0.0, %v860
      %v862 = vpop.f32.mrb[0].mxu0
      %863 = vmatprep.mubr.bf16.mxu0 0
      %864 = vmatmul.mubr.bf16.gmra.mrb[0].mxu0 %v779
      %v865 = vpop.f32.mrb[0].mxu0
      %v866 = vadd.f32 0.0, %v865
      %v867 = vpop.f32.mrb[0].mxu0
      %v868 = vpop.f32.mrb[0].mxu0
      %v869 = vadd.f32 0.0, %v868
      %v870 = vpop.f32.mrb[0].mxu0
      %871 = vmatprep.mubr.bf16.mxu0 0
      %872 = vmatmul.mubr.bf16.gmra.mrb[0].mxu0 %v782
      %v873 = vpop.f32.mrb[0].mxu0
      %v874 = vadd.f32 0.0, %v873
      %v875 = vpop.f32.mrb[0].mxu0
      %v876 = vpop.f32.mrb[0].mxu0
      %v877 = vadd.f32 0.0, %v876
      %v878 = vpop.f32.mrb[0].mxu0
      %879 = vmatprep.mubr.bf16.mxu0 0
      %880 = vmatmul.mubr.bf16.gmra.mrb[0].mxu0 %v785
      %v881 = vpop.f32.mrb[0].mxu0
      %v882 = vadd.f32 0.0, %v881
      %v883 = vpop.f32.mrb[0].mxu0
      %v884 = vpop.f32.mrb[0].mxu0
      %v885 = vadd.f32 0.0, %v884
      %v886 = vpop.f32.mrb[0].mxu0
      %887 = vdwg.mxu0
      %v889 = vsel %vm762, %v662, 0
      %v892 = vsel %vm762, %v663, 0
      %v895 = vsel %vm762, %v664, 0
      %v898 = vsel %vm762, %v665, 0
      %v901 = vsel %vm762, %v666, 0
      %v904 = vsel %vm762, %v667, 0
      %v907 = vsel %vm762, %v668, 0
      %v910 = vsel %vm762, %v669, 0
      %v913 = vsel %vm787, %v670, 0
      %915 = vmatprep.subr.bf16.mxu0 0
      %916 = vmatpush1.bf16.msra.mxu0 %v913
      %917 = vmatprep.subr.bf16.mxu0 0
      %918 = vmatpush1.bf16.msra.mxu0 0
      %919 = vmatprep.subr.bf16.mxu0 0
      %920 = vmatpush1.bf16.msra.mxu0 0
      %921 = vmatprep.subr.bf16.mxu0 0
      %922 = vmatpush1.bf16.msra.mxu0 0
      %923 = vmatprep.subr.bf16.mxu0 0
      %924 = vmatpush1.bf16.msra.mxu0 0
      %925 = vmatprep.subr.bf16.mxu0 0
      %926 = vmatpush1.bf16.msra.mxu0 0
      %927 = vmatprep.subr.bf16.mxu0 0
      %928 = vmatpush1.bf16.msra.mxu0 0
      %929 = vmatprep.subr.bf16.mxu0 0
      %930 = vmatpush1.bf16.msra.mxu0 0
      %931 = vmatprep.subr.bf16.mxu0 0
      %932 = vmatpush1.bf16.msra.mxu0 0
      %933 = vmatprep.subr.bf16.mxu0 0
      %934 = vmatpush1.bf16.msra.mxu0 0
      %935 = vmatprep.subr.bf16.mxu0 0
      %936 = vmatpush1.bf16.msra.mxu0 0
      %937 = vmatprep.subr.bf16.mxu0 0
      %938 = vmatpush1.bf16.msra.mxu0 0
      %939 = vmatprep.subr.bf16.mxu0 0
      %940 = vmatpush1.bf16.msra.mxu0 0
      %941 = vmatprep.subr.bf16.mxu0 0
      %942 = vmatpush1.bf16.msra.mxu0 0
      %943 = vmatprep.subr.bf16.mxu0 0
      %944 = vmatpush1.bf16.msra.mxu0 0
      %945 = vmatprep.subr.bf16.mxu0 0
      %946 = vmatpush1.bf16.msra.mxu0 0
      %947 = vmatprep.mubr.bf16.mxu0 0
      %948 = vmatmul.mubr.bf16.gmra.mrb[0].mxu0 %v889
      %v949 = vpop.f32.mrb[0].mxu0
      %v950 = vadd.f32 %v826, %v949
      %v951 = vpop.f32.mrb[0].mxu0
      %v952 = vpop.f32.mrb[0].mxu0
      %v953 = vadd.f32 %v829, %v952
      %v954 = vpop.f32.mrb[0].mxu0
      %955 = vmatprep.mubr.bf16.mxu0 0
      %956 = vmatmul.mubr.bf16.gmra.mrb[0].mxu0 %v892
      %v957 = vpop.f32.mrb[0].mxu0
      %v958 = vadd.f32 %v834, %v957
      %v959 = vpop.f32.mrb[0].mxu0
      %v960 = vpop.f32.mrb[0].mxu0
      %v961 = vadd.f32 %v837, %v960
      %v962 = vpop.f32.mrb[0].mxu0
      %963 = vmatprep.mubr.bf16.mxu0 0
      %964 = vmatmul.mubr.bf16.gmra.mrb[0].mxu0 %v895
      %v965 = vpop.f32.mrb[0].mxu0
      %v966 = vadd.f32 %v842, %v965
      %v967 = vpop.f32.mrb[0].mxu0
      %v968 = vpop.f32.mrb[0].mxu0
      %v969 = vadd.f32 %v845, %v968
      %v970 = vpop.f32.mrb[0].mxu0
      %971 = vmatprep.mubr.bf16.mxu0 0
      %972 = vmatmul.mubr.bf16.gmra.mrb[0].mxu0 %v898
      %v973 = vpop.f32.mrb[0].mxu0
      %v974 = vadd.f32 %v850, %v973
      %v975 = vpop.f32.mrb[0].mxu0
      %v976 = vpop.f32.mrb[0].mxu0
      %v977 = vadd.f32 %v853, %v976
      %v978 = vpop.f32.mrb[0].mxu0
      %979 = vmatprep.mubr.bf16.mxu0 0
      %980 = vmatmul.mubr.bf16.gmra.mrb[0].mxu0 %v901
      %v981 = vpop.f32.mrb[0].mxu0
      %v982 = vadd.f32 %v858, %v981
      %v983 = vpop.f32.mrb[0].mxu0
      %v984 = vpop.f32.mrb[0].mxu0
      %v985 = vadd.f32 %v861, %v984
      %v986 = vpop.f32.mrb[0].mxu0
      %987 = vmatprep.mubr.bf16.mxu0 0
      %988 = vmatmul.mubr.bf16.gmra.mrb[0].mxu0 %v904
      %v989 = vpop.f32.mrb[0].mxu0
      %v990 = vadd.f32 %v866, %v989
      %v991 = vpop.f32.mrb[0].mxu0
      %v992 = vpop.f32.mrb[0].mxu0
      %v993 = vadd.f32 %v869, %v992
      %v994 = vpop.f32.mrb[0].mxu0
      %995 = vmatprep.mubr.bf16.mxu0 0
      %996 = vmatmul.mubr.bf16.gmra.mrb[0].mxu0 %v907
      %v997 = vpop.f32.mrb[0].mxu0
      %v998 = vadd.f32 %v874, %v997
      %v999 = vpop.f32.mrb[0].mxu0
      %v1000 = vpop.f32.mrb[0].mxu0
      %v1001 = vadd.f32 %v877, %v1000
      %v1002 = vpop.f32.mrb[0].mxu0
      %1003 = vmatprep.mubr.bf16.mxu0 0
      %1004 = vmatmul.mubr.bf16.gmra.mrb[0].mxu0 %v910
      %v1005 = vpop.f32.mrb[0].mxu0
      %v1006 = vadd.f32 %v882, %v1005
      %v1007 = vpop.f32.mrb[0].mxu0
      %v1008 = vpop.f32.mrb[0].mxu0
      %v1009 = vadd.f32 %v885, %v1008
      %v1010 = vpop.f32.mrb[0].mxu0
      %1011 = vdwg.mxu0
      %vm1012 = vcmask 1045504
      %v1013 = vrot.slane %v632, 2
      %v1014 = vrot.slane %v633, 2
      %v1015 = vsel %vm1012, %v1013, %v1014
      %v1016 = vrot.slane %v634, 2
      %v1017 = vsel %vm1012, %v1014, %v1016
      %v1018 = vrot.slane %v635, 2
      %v1019 = vrot.slane %v636, 2
      %v1020 = vsel %vm1012, %v1018, %v1019
      %v1021 = vrot.slane %v637, 2
      %v1022 = vsel %vm1012, %v1019, %v1021
      %v1023 = vrot.slane %v638, 2
      %v1024 = vrot.slane %v639, 2
      %v1025 = vsel %vm1012, %v1023, %v1024
      %v1026 = vrot.slane %v640, 2
      %v1027 = vsel %vm1012, %v1024, %v1026
      %v1028 = vrot.slane %v641, 2
      %v1029 = vrot.slane %v642, 2
      %v1030 = vsel %vm1012, %v1028, %v1029
      %v1031 = vrot.slane %v643, 2
      %v1032 = vsel %vm1012, %v1029, %v1031
      %v1033 = vrot.slane %v644, 2
      %v1034 = vrot.slane %v645, 2
      %v1035 = vsel %vm1012, %v1033, %v1034
      %v1036 = vrot.slane %v646, 2
      %v1037 = vsel %vm1012, %v1034, %v1036
      %v1038 = vrot.slane %v647, 2
      %v1039 = vrot.slane %v648, 2
      %v1040 = vsel %vm1012, %v1038, %v1039
      %v1041 = vrot.slane %v649, 2
      %v1042 = vsel %vm1012, %v1039, %v1041
      %v1043 = vrot.slane %v650, 2
      %v1044 = vrot.slane %v651, 2
      %v1045 = vsel %vm1012, %v1043, %v1044
      %v1046 = vrot.slane %v652, 2
      %v1047 = vsel %vm1012, %v1044, %v1046
      %v1048 = vrot.slane %v653, 2
      %v1049 = vrot.slane %v654, 2
      %v1050 = vsel %vm1012, %v1048, %v1049
      %v1051 = vrot.slane %v655, 2
      %v1052 = vsel %vm1012, %v1049, %v1051
      %v1069 = vpack.c.bf16 %v1017, %v1015
      %v1070 = vpack.c.bf16 %v1022, %v1020
      %v1071 = vpack.c.bf16 %v1027, %v1025
      %v1072 = vpack.c.bf16 %v1032, %v1030
      %v1073 = vpack.c.bf16 %v1037, %v1035
      %v1074 = vpack.c.bf16 %v1042, %v1040
      %v1075 = vpack.c.bf16 %v1047, %v1045
      %v1076 = vpack.c.bf16 %v1052, %v1050
      %s1077 = scalar_lea.vmem %s3, 8
      %v1078 = vld [vmem:[%s1077] sm:$0xf]
      %v1080 = vsel %vm762, %v1069, 0
      %v1083 = vsel %vm762, %v1070, 0
      %v1086 = vsel %vm762, %v1071, 0
      %v1089 = vsel %vm762, %v1072, 0
      %v1092 = vsel %vm762, %v1073, 0
      %v1095 = vsel %vm762, %v1074, 0
      %v1098 = vsel %vm762, %v1075, 0
      %v1101 = vsel %vm762, %v1076, 0
      %v1104 = vsel %vm787, %v1078, 0
      %1106 = vmatprep.subr.bf16.mxu0 0
      %1107 = vmatpush1.bf16.msra.mxu0 %v1104
      %1108 = vmatprep.subr.bf16.mxu0 0
      %1109 = vmatpush1.bf16.msra.mxu0 0
      %1110 = vmatprep.subr.bf16.mxu0 0
      %1111 = vmatpush1.bf16.msra.mxu0 0
      %1112 = vmatprep.subr.bf16.mxu0 0
      %1113 = vmatpush1.bf16.msra.mxu0 0
      %1114 = vmatprep.subr.bf16.mxu0 0
      %1115 = vmatpush1.bf16.msra.mxu0 0
      %1116 = vmatprep.subr.bf16.mxu0 0
      %1117 = vmatpush1.bf16.msra.mxu0 0
      %1118 = vmatprep.subr.bf16.mxu0 0
      %1119 = vmatpush1.bf16.msra.mxu0 0
      %1120 = vmatprep.subr.bf16.mxu0 0
      %1121 = vmatpush1.bf16.msra.mxu0 0
      %1122 = vmatprep.subr.bf16.mxu0 0
      %1123 = vmatpush1.bf16.msra.mxu0 0
      %1124 = vmatprep.subr.bf16.mxu0 0
      %1125 = vmatpush1.bf16.msra.mxu0 0
      %1126 = vmatprep.subr.bf16.mxu0 0
      %1127 = vmatpush1.bf16.msra.mxu0 0
      %1128 = vmatprep.subr.bf16.mxu0 0
      %1129 = vmatpush1.bf16.msra.mxu0 0
      %1130 = vmatprep.subr.bf16.mxu0 0
      %1131 = vmatpush1.bf16.msra.mxu0 0
      %1132 = vmatprep.subr.bf16.mxu0 0
      %1133 = vmatpush1.bf16.msra.mxu0 0
      %1134 = vmatprep.subr.bf16.mxu0 0
      %1135 = vmatpush1.bf16.msra.mxu0 0
      %1136 = vmatprep.subr.bf16.mxu0 0
      %1137 = vmatpush1.bf16.msra.mxu0 0
      %1138 = vmatprep.mubr.bf16.mxu0 0
      %1139 = vmatmul.mubr.bf16.gmra.mrb[0].mxu0 %v1080
      %v1140 = vpop.f32.mrb[0].mxu0
      %v1141 = vadd.f32 0.0, %v1140
      %v1142 = vpop.f32.mrb[0].mxu0
      %v1143 = vpop.f32.mrb[0].mxu0
      %v1144 = vadd.f32 0.0, %v1143
      %v1145 = vpop.f32.mrb[0].mxu0
      %1146 = vmatprep.mubr.bf16.mxu0 0
      %1147 = vmatmul.mubr.bf16.gmra.mrb[0].mxu0 %v1083
      %v1148 = vpop.f32.mrb[0].mxu0
      %v1149 = vadd.f32 0.0, %v1148
      %v1150 = vpop.f32.mrb[0].mxu0
      %v1151 = vpop.f32.mrb[0].mxu0
      %v1152 = vadd.f32 0.0, %v1151
      %v1153 = vpop.f32.mrb[0].mxu0
      %1154 = vmatprep.mubr.bf16.mxu0 0
      %1155 = vmatmul.mubr.bf16.gmra.mrb[0].mxu0 %v1086
      %v1156 = vpop.f32.mrb[0].mxu0
      %v1157 = vadd.f32 0.0, %v1156
      %v1158 = vpop.f32.mrb[0].mxu0
      %v1159 = vpop.f32.mrb[0].mxu0
      %v1160 = vadd.f32 0.0, %v1159
      %v1161 = vpop.f32.mrb[0].mxu0
      %1162 = vmatprep.mubr.bf16.mxu0 0
      %1163 = vmatmul.mubr.bf16.gmra.mrb[0].mxu0 %v1089
      %v1164 = vpop.f32.mrb[0].mxu0
      %v1165 = vadd.f32 0.0, %v1164
      %v1166 = vpop.f32.mrb[0].mxu0
      %v1167 = vpop.f32.mrb[0].mxu0
      %v1168 = vadd.f32 0.0, %v1167
      %v1169 = vpop.f32.mrb[0].mxu0
      %1170 = vmatprep.mubr.bf16.mxu0 0
      %1171 = vmatmul.mubr.bf16.gmra.mrb[0].mxu0 %v1092
      %v1172 = vpop.f32.mrb[0].mxu0
      %v1173 = vadd.f32 0.0, %v1172
      %v1174 = vpop.f32.mrb[0].mxu0
      %v1175 = vpop.f32.mrb[0].mxu0
      %v1176 = vadd.f32 0.0, %v1175
      %v1177 = vpop.f32.mrb[0].mxu0
      %1178 = vmatprep.mubr.bf16.mxu0 0
      %1179 = vmatmul.mubr.bf16.gmra.mrb[0].mxu0 %v1095
      %v1180 = vpop.f32.mrb[0].mxu0
      %v1181 = vadd.f32 0.0, %v1180
      %v1182 = vpop.f32.mrb[0].mxu0
      %v1183 = vpop.f32.mrb[0].mxu0
      %v1184 = vadd.f32 0.0, %v1183
      %v1185 = vpop.f32.mrb[0].mxu0
      %1186 = vmatprep.mubr.bf16.mxu0 0
      %1187 = vmatmul.mubr.bf16.gmra.mrb[0].mxu0 %v1098
      %v1188 = vpop.f32.mrb[0].mxu0
      %v1189 = vadd.f32 0.0, %v1188
      %v1190 = vpop.f32.mrb[0].mxu0
      %v1191 = vpop.f32.mrb[0].mxu0
      %v1192 = vadd.f32 0.0, %v1191
      %v1193 = vpop.f32.mrb[0].mxu0
      %1194 = vmatprep.mubr.bf16.mxu0 0
      %1195 = vmatmul.mubr.bf16.gmra.mrb[0].mxu0 %v1101
      %v1196 = vpop.f32.mrb[0].mxu0
      %v1197 = vadd.f32 0.0, %v1196
      %v1198 = vpop.f32.mrb[0].mxu0
      %v1199 = vpop.f32.mrb[0].mxu0
      %v1200 = vadd.f32 0.0, %v1199
      %v1201 = vpop.f32.mrb[0].mxu0
      %1202 = vdwg.mxu0
      %v1203 = vadd.f32 %v950, %v1141
      %v1204 = vadd.f32 %v953, %v1144
      %v1205 = vadd.f32 %v958, %v1149
      %v1206 = vadd.f32 %v961, %v1152
      %v1207 = vadd.f32 %v966, %v1157
      %v1208 = vadd.f32 %v969, %v1160
      %v1209 = vadd.f32 %v974, %v1165
      %v1210 = vadd.f32 %v977, %v1168
      %v1211 = vadd.f32 %v982, %v1173
      %v1212 = vadd.f32 %v985, %v1176
      %v1213 = vadd.f32 %v990, %v1181
      %v1214 = vadd.f32 %v993, %v1184
      %v1215 = vadd.f32 %v998, %v1189
      %v1216 = vadd.f32 %v1001, %v1192
      %v1217 = vadd.f32 %v1006, %v1197
      %v1218 = vadd.f32 %v1009, %v1200
      %v1219 = vpack.c.bf16 %v657, %v656
      %s1220 = scalar_lea.vmem %s3, 12
      %v1221 = vld [vmem:[%s1220] sm:$0xf]
      %v1223 = vsel %vm762, %v1219, 0
      %v1226 = vsel %vm787, %v1221, 0
      %1228 = vmatprep.subr.bf16.mxu0 0
      %1229 = vmatpush1.bf16.msra.mxu0 %v1226
      %1230 = vmatprep.subr.bf16.mxu0 0
      %1231 = vmatpush1.bf16.msra.mxu0 0
      %1232 = vmatprep.subr.bf16.mxu0 0
      %1233 = vmatpush1.bf16.msra.mxu0 0
      %1234 = vmatprep.subr.bf16.mxu0 0
      %1235 = vmatpush1.bf16.msra.mxu0 0
      %1236 = vmatprep.subr.bf16.mxu0 0
      %1237 = vmatpush1.bf16.msra.mxu0 0
      %1238 = vmatprep.subr.bf16.mxu0 0
      %1239 = vmatpush1.bf16.msra.mxu0 0
      %1240 = vmatprep.subr.bf16.mxu0 0
      %1241 = vmatpush1.bf16.msra.mxu0 0
      %1242 = vmatprep.subr.bf16.mxu0 0
      %1243 = vmatpush1.bf16.msra.mxu0 0
      %1244 = vmatprep.subr.bf16.mxu0 0
      %1245 = vmatpush1.bf16.msra.mxu0 0
      %1246 = vmatprep.subr.bf16.mxu0 0
      %1247 = vmatpush1.bf16.msra.mxu0 0
      %1248 = vmatprep.subr.bf16.mxu0 0
      %1249 = vmatpush1.bf16.msra.mxu0 0
      %1250 = vmatprep.subr.bf16.mxu0 0
      %1251 = vmatpush1.bf16.msra.mxu0 0
      %1252 = vmatprep.subr.bf16.mxu0 0
      %1253 = vmatpush1.bf16.msra.mxu0 0
      %1254 = vmatprep.subr.bf16.mxu0 0
      %1255 = vmatpush1.bf16.msra.mxu0 0
      %1256 = vmatprep.subr.bf16.mxu0 0
      %1257 = vmatpush1.bf16.msra.mxu0 0
      %1258 = vmatprep.subr.bf16.mxu0 0
      %1259 = vmatpush1.bf16.msra.mxu0 0
      %1260 = vmatprep.mubr.bf16.mxu0 0
      %1261 = vmatmul.mubr.bf16.gmra.mrb[0].mxu0 %v892
      %v1262 = vpop.f32.mrb[0].mxu0
      %v1263 = vadd.f32 0.0, %v1262
      %v1264 = vpop.f32.mrb[0].mxu0
      %v1265 = vpop.f32.mrb[0].mxu0
      %v1266 = vadd.f32 0.0, %v1265
      %v1267 = vpop.f32.mrb[0].mxu0
      %1268 = vmatprep.mubr.bf16.mxu0 0
      %1269 = vmatmul.mubr.bf16.gmra.mrb[0].mxu0 %v895
      %v1270 = vpop.f32.mrb[0].mxu0
      %v1271 = vadd.f32 0.0, %v1270
      %v1272 = vpop.f32.mrb[0].mxu0
      %v1273 = vpop.f32.mrb[0].mxu0
      %v1274 = vadd.f32 0.0, %v1273
      %v1275 = vpop.f32.mrb[0].mxu0
      %1276 = vmatprep.mubr.bf16.mxu0 0
      %1277 = vmatmul.mubr.bf16.gmra.mrb[0].mxu0 %v898
      %v1278 = vpop.f32.mrb[0].mxu0
      %v1279 = vadd.f32 0.0, %v1278
      %v1280 = vpop.f32.mrb[0].mxu0
      %v1281 = vpop.f32.mrb[0].mxu0
      %v1282 = vadd.f32 0.0, %v1281
      %v1283 = vpop.f32.mrb[0].mxu0
      %1284 = vmatprep.mubr.bf16.mxu0 0
      %1285 = vmatmul.mubr.bf16.gmra.mrb[0].mxu0 %v901
      %v1286 = vpop.f32.mrb[0].mxu0
      %v1287 = vadd.f32 0.0, %v1286
      %v1288 = vpop.f32.mrb[0].mxu0
      %v1289 = vpop.f32.mrb[0].mxu0
      %v1290 = vadd.f32 0.0, %v1289
      %v1291 = vpop.f32.mrb[0].mxu0
      %1292 = vmatprep.mubr.bf16.mxu0 0
      %1293 = vmatmul.mubr.bf16.gmra.mrb[0].mxu0 %v904
      %v1294 = vpop.f32.mrb[0].mxu0
      %v1295 = vadd.f32 0.0, %v1294
      %v1296 = vpop.f32.mrb[0].mxu0
      %v1297 = vpop.f32.mrb[0].mxu0
      %v1298 = vadd.f32 0.0, %v1297
      %v1299 = vpop.f32.mrb[0].mxu0
      %1300 = vmatprep.mubr.bf16.mxu0 0
      %1301 = vmatmul.mubr.bf16.gmra.mrb[0].mxu0 %v907
      %v1302 = vpop.f32.mrb[0].mxu0
      %v1303 = vadd.f32 0.0, %v1302
      %v1304 = vpop.f32.mrb[0].mxu0
      %v1305 = vpop.f32.mrb[0].mxu0
      %v1306 = vadd.f32 0.0, %v1305
      %v1307 = vpop.f32.mrb[0].mxu0
      %1308 = vmatprep.mubr.bf16.mxu0 0
      %1309 = vmatmul.mubr.bf16.gmra.mrb[0].mxu0 %v910
      %v1310 = vpop.f32.mrb[0].mxu0
      %v1311 = vadd.f32 0.0, %v1310
      %v1312 = vpop.f32.mrb[0].mxu0
      %v1313 = vpop.f32.mrb[0].mxu0
      %v1314 = vadd.f32 0.0, %v1313
      %v1315 = vpop.f32.mrb[0].mxu0
      %1316 = vmatprep.mubr.bf16.mxu0 0
      %1317 = vmatmul.mubr.bf16.gmra.mrb[0].mxu0 %v1223
      %v1318 = vpop.f32.mrb[0].mxu0
      %v1319 = vadd.f32 0.0, %v1318
      %v1320 = vpop.f32.mrb[0].mxu0
      %v1321 = vpop.f32.mrb[0].mxu0
      %v1322 = vadd.f32 0.0, %v1321
      %v1323 = vpop.f32.mrb[0].mxu0
      %1324 = vdwg.mxu0
      %v1325 = vadd.f32 %v1203, %v1263
      %v1326 = vadd.f32 %v1204, %v1266
      %v1327 = vadd.f32 %v1205, %v1271
      %v1328 = vadd.f32 %v1206, %v1274
      %v1329 = vadd.f32 %v1207, %v1279
      %v1330 = vadd.f32 %v1208, %v1282
      %v1331 = vadd.f32 %v1209, %v1287
      %v1332 = vadd.f32 %v1210, %v1290
      %v1333 = vadd.f32 %v1211, %v1295
      %v1334 = vadd.f32 %v1212, %v1298
      %v1335 = vadd.f32 %v1213, %v1303
      %v1336 = vadd.f32 %v1214, %v1306
      %v1337 = vadd.f32 %v1215, %v1311
      %v1338 = vadd.f32 %v1216, %v1314
      %v1339 = vadd.f32 %v1217, %v1319
      %v1340 = vadd.f32 %v1218, %v1322
      %v1344 = vrot.slane %v656, 1
      %v1345 = vrot.slane %v657, 1
      %v1346 = vsel %vm695, %v1344, %v1345
      %v1347 = vrot.slane %v658, 1
      %v1348 = vsel %vm695, %v1345, %v1347
      %v1351 = vpack.c.bf16 %v1348, %v1346
      %s1352 = scalar_lea.vmem %s3, 16
      %v1353 = vld [vmem:[%s1352] sm:$0xf]
      %v1355 = vsel %vm762, %v1351, 0
      %v1358 = vsel %vm787, %v1353, 0
      %1360 = vmatprep.subr.bf16.mxu0 0
      %1361 = vmatpush1.bf16.msra.mxu0 %v1358
      %1362 = vmatprep.subr.bf16.mxu0 0
      %1363 = vmatpush1.bf16.msra.mxu0 0
      %1364 = vmatprep.subr.bf16.mxu0 0
      %1365 = vmatpush1.bf16.msra.mxu0 0
      %1366 = vmatprep.subr.bf16.mxu0 0
      %1367 = vmatpush1.bf16.msra.mxu0 0
      %1368 = vmatprep.subr.bf16.mxu0 0
      %1369 = vmatpush1.bf16.msra.mxu0 0
      %1370 = vmatprep.subr.bf16.mxu0 0
      %1371 = vmatpush1.bf16.msra.mxu0 0
      %1372 = vmatprep.subr.bf16.mxu0 0
      %1373 = vmatpush1.bf16.msra.mxu0 0
      %1374 = vmatprep.subr.bf16.mxu0 0
      %1375 = vmatpush1.bf16.msra.mxu0 0
      %1376 = vmatprep.subr.bf16.mxu0 0
      %1377 = vmatpush1.bf16.msra.mxu0 0
      %1378 = vmatprep.subr.bf16.mxu0 0
      %1379 = vmatpush1.bf16.msra.mxu0 0
      %1380 = vmatprep.subr.bf16.mxu0 0
      %1381 = vmatpush1.bf16.msra.mxu0 0
      %1382 = vmatprep.subr.bf16.mxu0 0
      %1383 = vmatpush1.bf16.msra.mxu0 0
      %1384 = vmatprep.subr.bf16.mxu0 0
      %1385 = vmatpush1.bf16.msra.mxu0 0
      %1386 = vmatprep.subr.bf16.mxu0 0
      %1387 = vmatpush1.bf16.msra.mxu0 0
      %1388 = vmatprep.subr.bf16.mxu0 0
      %1389 = vmatpush1.bf16.msra.mxu0 0
      %1390 = vmatprep.subr.bf16.mxu0 0
      %1391 = vmatpush1.bf16.msra.mxu0 0
      %1392 = vmatprep.mubr.bf16.mxu0 0
      %1393 = vmatmul.mubr.bf16.gmra.mrb[0].mxu0 %v767
      %v1394 = vpop.f32.mrb[0].mxu0
      %v1395 = vadd.f32 0.0, %v1394
      %v1396 = vpop.f32.mrb[0].mxu0
      %v1397 = vpop.f32.mrb[0].mxu0
      %v1398 = vadd.f32 0.0, %v1397
      %v1399 = vpop.f32.mrb[0].mxu0
      %1400 = vmatprep.mubr.bf16.mxu0 0
      %1401 = vmatmul.mubr.bf16.gmra.mrb[0].mxu0 %v770
      %v1402 = vpop.f32.mrb[0].mxu0
      %v1403 = vadd.f32 0.0, %v1402
      %v1404 = vpop.f32.mrb[0].mxu0
      %v1405 = vpop.f32.mrb[0].mxu0
      %v1406 = vadd.f32 0.0, %v1405
      %v1407 = vpop.f32.mrb[0].mxu0
      %1408 = vmatprep.mubr.bf16.mxu0 0
      %1409 = vmatmul.mubr.bf16.gmra.mrb[0].mxu0 %v773
      %v1410 = vpop.f32.mrb[0].mxu0
      %v1411 = vadd.f32 0.0, %v1410
      %v1412 = vpop.f32.mrb[0].mxu0
      %v1413 = vpop.f32.mrb[0].mxu0
      %v1414 = vadd.f32 0.0, %v1413
      %v1415 = vpop.f32.mrb[0].mxu0
      %1416 = vmatprep.mubr.bf16.mxu0 0
      %1417 = vmatmul.mubr.bf16.gmra.mrb[0].mxu0 %v776
      %v1418 = vpop.f32.mrb[0].mxu0
      %v1419 = vadd.f32 0.0, %v1418
      %v1420 = vpop.f32.mrb[0].mxu0
      %v1421 = vpop.f32.mrb[0].mxu0
      %v1422 = vadd.f32 0.0, %v1421
      %v1423 = vpop.f32.mrb[0].mxu0
      %1424 = vmatprep.mubr.bf16.mxu0 0
      %1425 = vmatmul.mubr.bf16.gmra.mrb[0].mxu0 %v779
      %v1426 = vpop.f32.mrb[0].mxu0
      %v1427 = vadd.f32 0.0, %v1426
      %v1428 = vpop.f32.mrb[0].mxu0
      %v1429 = vpop.f32.mrb[0].mxu0
      %v1430 = vadd.f32 0.0, %v1429
      %v1431 = vpop.f32.mrb[0].mxu0
      %1432 = vmatprep.mubr.bf16.mxu0 0
      %1433 = vmatmul.mubr.bf16.gmra.mrb[0].mxu0 %v782
      %v1434 = vpop.f32.mrb[0].mxu0
      %v1435 = vadd.f32 0.0, %v1434
      %v1436 = vpop.f32.mrb[0].mxu0
      %v1437 = vpop.f32.mrb[0].mxu0
      %v1438 = vadd.f32 0.0, %v1437
      %v1439 = vpop.f32.mrb[0].mxu0
      %1440 = vmatprep.mubr.bf16.mxu0 0
      %1441 = vmatmul.mubr.bf16.gmra.mrb[0].mxu0 %v785
      %v1442 = vpop.f32.mrb[0].mxu0
      %v1443 = vadd.f32 0.0, %v1442
      %v1444 = vpop.f32.mrb[0].mxu0
      %v1445 = vpop.f32.mrb[0].mxu0
      %v1446 = vadd.f32 0.0, %v1445
      %v1447 = vpop.f32.mrb[0].mxu0
      %1448 = vmatprep.mubr.bf16.mxu0 0
      %1449 = vmatmul.mubr.bf16.gmra.mrb[0].mxu0 %v1355
      %v1450 = vpop.f32.mrb[0].mxu0
      %v1451 = vadd.f32 0.0, %v1450
      %v1452 = vpop.f32.mrb[0].mxu0
      %v1453 = vpop.f32.mrb[0].mxu0
      %v1454 = vadd.f32 0.0, %v1453
      %v1455 = vpop.f32.mrb[0].mxu0
      %1456 = vdwg.mxu0
      %v1457 = vadd.f32 %v1325, %v1395
      %v1458 = vadd.f32 %v1326, %v1398
      %v1459 = vadd.f32 %v1327, %v1403
      %v1460 = vadd.f32 %v1328, %v1406
      %v1461 = vadd.f32 %v1329, %v1411
      %v1462 = vadd.f32 %v1330, %v1414
      %v1463 = vadd.f32 %v1331, %v1419
      %v1464 = vadd.f32 %v1332, %v1422
      %v1465 = vadd.f32 %v1333, %v1427
      %v1466 = vadd.f32 %v1334, %v1430
      %v1467 = vadd.f32 %v1335, %v1435
      %v1468 = vadd.f32 %v1336, %v1438
      %v1469 = vadd.f32 %v1337, %v1443
      %v1470 = vadd.f32 %v1338, %v1446
      %v1471 = vadd.f32 %v1339, %v1451
      %v1472 = vadd.f32 %v1340, %v1454
      %v1473 = vrot.slane %v656, 2
      %v1474 = vrot.slane %v657, 2
      %v1475 = vsel %vm1012, %v1473, %v1474
      %v1476 = vrot.slane %v658, 2
      %v1477 = vsel %vm1012, %v1474, %v1476
      %v1480 = vpack.c.bf16 %v1477, %v1475
      %s1481 = scalar_lea.vmem %s3, 20
      %v1482 = vld [vmem:[%s1481] sm:$0xf]
      %v1484 = vsel %vm762, %v1480, 0
      %v1487 = vsel %vm787, %v1482, 0
      %1489 = vmatprep.subr.bf16.mxu0 0
      %1490 = vmatpush1.bf16.msra.mxu0 %v1487
      %1491 = vmatprep.subr.bf16.mxu0 0
      %1492 = vmatpush1.bf16.msra.mxu0 0
      %1493 = vmatprep.subr.bf16.mxu0 0
      %1494 = vmatpush1.bf16.msra.mxu0 0
      %1495 = vmatprep.subr.bf16.mxu0 0
      %1496 = vmatpush1.bf16.msra.mxu0 0
      %1497 = vmatprep.subr.bf16.mxu0 0
      %1498 = vmatpush1.bf16.msra.mxu0 0
      %1499 = vmatprep.subr.bf16.mxu0 0
      %1500 = vmatpush1.bf16.msra.mxu0 0
      %1501 = vmatprep.subr.bf16.mxu0 0
      %1502 = vmatpush1.bf16.msra.mxu0 0
      %1503 = vmatprep.subr.bf16.mxu0 0
      %1504 = vmatpush1.bf16.msra.mxu0 0
      %1505 = vmatprep.subr.bf16.mxu0 0
      %1506 = vmatpush1.bf16.msra.mxu0 0
      %1507 = vmatprep.subr.bf16.mxu0 0
      %1508 = vmatpush1.bf16.msra.mxu0 0
      %1509 = vmatprep.subr.bf16.mxu0 0
      %1510 = vmatpush1.bf16.msra.mxu0 0
      %1511 = vmatprep.subr.bf16.mxu0 0
      %1512 = vmatpush1.bf16.msra.mxu0 0
      %1513 = vmatprep.subr.bf16.mxu0 0
      %1514 = vmatpush1.bf16.msra.mxu0 0
      %1515 = vmatprep.subr.bf16.mxu0 0
      %1516 = vmatpush1.bf16.msra.mxu0 0
      %1517 = vmatprep.subr.bf16.mxu0 0
      %1518 = vmatpush1.bf16.msra.mxu0 0
      %1519 = vmatprep.subr.bf16.mxu0 0
      %1520 = vmatpush1.bf16.msra.mxu0 0
      %1521 = vmatprep.mubr.bf16.mxu0 0
      %1522 = vmatmul.mubr.bf16.gmra.mrb[0].mxu0 %v1083
      %v1523 = vpop.f32.mrb[0].mxu0
      %v1524 = vadd.f32 0.0, %v1523
      %v1525 = vpop.f32.mrb[0].mxu0
      %v1526 = vpop.f32.mrb[0].mxu0
      %v1527 = vadd.f32 0.0, %v1526
      %v1528 = vpop.f32.mrb[0].mxu0
      %1529 = vmatprep.mubr.bf16.mxu0 0
      %1530 = vmatmul.mubr.bf16.gmra.mrb[0].mxu0 %v1086
      %v1531 = vpop.f32.mrb[0].mxu0
      %v1532 = vadd.f32 0.0, %v1531
      %v1533 = vpop.f32.mrb[0].mxu0
      %v1534 = vpop.f32.mrb[0].mxu0
      %v1535 = vadd.f32 0.0, %v1534
      %v1536 = vpop.f32.mrb[0].mxu0
      %1537 = vmatprep.mubr.bf16.mxu0 0
      %1538 = vmatmul.mubr.bf16.gmra.mrb[0].mxu0 %v1089
      %v1539 = vpop.f32.mrb[0].mxu0
      %v1540 = vadd.f32 0.0, %v1539
      %v1541 = vpop.f32.mrb[0].mxu0
      %v1542 = vpop.f32.mrb[0].mxu0
      %v1543 = vadd.f32 0.0, %v1542
      %v1544 = vpop.f32.mrb[0].mxu0
      %1545 = vmatprep.mubr.bf16.mxu0 0
      %1546 = vmatmul.mubr.bf16.gmra.mrb[0].mxu0 %v1092
      %v1547 = vpop.f32.mrb[0].mxu0
      %v1548 = vadd.f32 0.0, %v1547
      %v1549 = vpop.f32.mrb[0].mxu0
      %v1550 = vpop.f32.mrb[0].mxu0
      %v1551 = vadd.f32 0.0, %v1550
      %v1552 = vpop.f32.mrb[0].mxu0
      %1553 = vmatprep.mubr.bf16.mxu0 0
      %1554 = vmatmul.mubr.bf16.gmra.mrb[0].mxu0 %v1095
      %v1555 = vpop.f32.mrb[0].mxu0
      %v1556 = vadd.f32 0.0, %v1555
      %v1557 = vpop.f32.mrb[0].mxu0
      %v1558 = vpop.f32.mrb[0].mxu0
      %v1559 = vadd.f32 0.0, %v1558
      %v1560 = vpop.f32.mrb[0].mxu0
      %1561 = vmatprep.mubr.bf16.mxu0 0
      %1562 = vmatmul.mubr.bf16.gmra.mrb[0].mxu0 %v1098
      %v1563 = vpop.f32.mrb[0].mxu0
      %v1564 = vadd.f32 0.0, %v1563
      %v1565 = vpop.f32.mrb[0].mxu0
      %v1566 = vpop.f32.mrb[0].mxu0
      %v1567 = vadd.f32 0.0, %v1566
      %v1568 = vpop.f32.mrb[0].mxu0
      %1569 = vmatprep.mubr.bf16.mxu0 0
      %1570 = vmatmul.mubr.bf16.gmra.mrb[0].mxu0 %v1101
      %v1571 = vpop.f32.mrb[0].mxu0
      %v1572 = vadd.f32 0.0, %v1571
      %v1573 = vpop.f32.mrb[0].mxu0
      %v1574 = vpop.f32.mrb[0].mxu0
      %v1575 = vadd.f32 0.0, %v1574
      %v1576 = vpop.f32.mrb[0].mxu0
      %1577 = vmatprep.mubr.bf16.mxu0 0
      %1578 = vmatmul.mubr.bf16.gmra.mrb[0].mxu0 %v1484
      %v1579 = vpop.f32.mrb[0].mxu0
      %v1580 = vadd.f32 0.0, %v1579
      %v1581 = vpop.f32.mrb[0].mxu0
      %v1582 = vpop.f32.mrb[0].mxu0
      %v1583 = vadd.f32 0.0, %v1582
      %v1584 = vpop.f32.mrb[0].mxu0
      %1585 = vdwg.mxu0
      %v1586 = vadd.f32 %v1457, %v1524
      %v1587 = vadd.f32 %v1458, %v1527
      %v1588 = vadd.f32 %v1459, %v1532
      %v1589 = vadd.f32 %v1460, %v1535
      %v1590 = vadd.f32 %v1461, %v1540
      %v1591 = vadd.f32 %v1462, %v1543
      %v1592 = vadd.f32 %v1463, %v1548
      %v1593 = vadd.f32 %v1464, %v1551
      %v1594 = vadd.f32 %v1465, %v1556
      %v1595 = vadd.f32 %v1466, %v1559
      %v1596 = vadd.f32 %v1467, %v1564
      %v1597 = vadd.f32 %v1468, %v1567
      %v1598 = vadd.f32 %v1469, %v1572
      %v1599 = vadd.f32 %v1470, %v1575
      %v1600 = vadd.f32 %v1471, %v1580
      %v1601 = vadd.f32 %v1472, %v1583
      %v1602 = vpack.c.bf16 %v660, %v659
      %s1603 = scalar_lea.vmem %s3, 24
      %v1604 = vld [vmem:[%s1603] sm:$0xf]
      %v1606 = vsel %vm762, %v1602, 0
      %v1609 = vsel %vm787, %v1604, 0
      %1611 = vmatprep.subr.bf16.mxu0 0
      %1612 = vmatpush1.bf16.msra.mxu0 %v1609
      %1613 = vmatprep.subr.bf16.mxu0 0
      %1614 = vmatpush1.bf16.msra.mxu0 0
      %1615 = vmatprep.subr.bf16.mxu0 0
      %1616 = vmatpush1.bf16.msra.mxu0 0
      %1617 = vmatprep.subr.bf16.mxu0 0
      %1618 = vmatpush1.bf16.msra.mxu0 0
      %1619 = vmatprep.subr.bf16.mxu0 0
      %1620 = vmatpush1.bf16.msra.mxu0 0
      %1621 = vmatprep.subr.bf16.mxu0 0
      %1622 = vmatpush1.bf16.msra.mxu0 0
      %1623 = vmatprep.subr.bf16.mxu0 0
      %1624 = vmatpush1.bf16.msra.mxu0 0
      %1625 = vmatprep.subr.bf16.mxu0 0
      %1626 = vmatpush1.bf16.msra.mxu0 0
      %1627 = vmatprep.subr.bf16.mxu0 0
      %1628 = vmatpush1.bf16.msra.mxu0 0
      %1629 = vmatprep.subr.bf16.mxu0 0
      %1630 = vmatpush1.bf16.msra.mxu0 0
      %1631 = vmatprep.subr.bf16.mxu0 0
      %1632 = vmatpush1.bf16.msra.mxu0 0
      %1633 = vmatprep.subr.bf16.mxu0 0
      %1634 = vmatpush1.bf16.msra.mxu0 0
      %1635 = vmatprep.subr.bf16.mxu0 0
      %1636 = vmatpush1.bf16.msra.mxu0 0
      %1637 = vmatprep.subr.bf16.mxu0 0
      %1638 = vmatpush1.bf16.msra.mxu0 0
      %1639 = vmatprep.subr.bf16.mxu0 0
      %1640 = vmatpush1.bf16.msra.mxu0 0
      %1641 = vmatprep.subr.bf16.mxu0 0
      %1642 = vmatpush1.bf16.msra.mxu0 0
      %1643 = vmatprep.mubr.bf16.mxu0 0
      %1644 = vmatmul.mubr.bf16.gmra.mrb[0].mxu0 %v895
      %v1645 = vpop.f32.mrb[0].mxu0
      %v1646 = vadd.f32 0.0, %v1645
      %v1647 = vpop.f32.mrb[0].mxu0
      %v1648 = vpop.f32.mrb[0].mxu0
      %v1649 = vadd.f32 0.0, %v1648
      %v1650 = vpop.f32.mrb[0].mxu0
      %1651 = vmatprep.mubr.bf16.mxu0 0
      %1652 = vmatmul.mubr.bf16.gmra.mrb[0].mxu0 %v898
      %v1653 = vpop.f32.mrb[0].mxu0
      %v1654 = vadd.f32 0.0, %v1653
      %v1655 = vpop.f32.mrb[0].mxu0
      %v1656 = vpop.f32.mrb[0].mxu0
      %v1657 = vadd.f32 0.0, %v1656
      %v1658 = vpop.f32.mrb[0].mxu0
      %1659 = vmatprep.mubr.bf16.mxu0 0
      %1660 = vmatmul.mubr.bf16.gmra.mrb[0].mxu0 %v901
      %v1661 = vpop.f32.mrb[0].mxu0
      %v1662 = vadd.f32 0.0, %v1661
      %v1663 = vpop.f32.mrb[0].mxu0
      %v1664 = vpop.f32.mrb[0].mxu0
      %v1665 = vadd.f32 0.0, %v1664
      %v1666 = vpop.f32.mrb[0].mxu0
      %1667 = vmatprep.mubr.bf16.mxu0 0
      %1668 = vmatmul.mubr.bf16.gmra.mrb[0].mxu0 %v904
      %v1669 = vpop.f32.mrb[0].mxu0
      %v1670 = vadd.f32 0.0, %v1669
      %v1671 = vpop.f32.mrb[0].mxu0
      %v1672 = vpop.f32.mrb[0].mxu0
      %v1673 = vadd.f32 0.0, %v1672
      %v1674 = vpop.f32.mrb[0].mxu0
      %1675 = vmatprep.mubr.bf16.mxu0 0
      %1676 = vmatmul.mubr.bf16.gmra.mrb[0].mxu0 %v907
      %v1677 = vpop.f32.mrb[0].mxu0
      %v1678 = vadd.f32 0.0, %v1677
      %v1679 = vpop.f32.mrb[0].mxu0
      %v1680 = vpop.f32.mrb[0].mxu0
      %v1681 = vadd.f32 0.0, %v1680
      %v1682 = vpop.f32.mrb[0].mxu0
      %1683 = vmatprep.mubr.bf16.mxu0 0
      %1684 = vmatmul.mubr.bf16.gmra.mrb[0].mxu0 %v910
      %v1685 = vpop.f32.mrb[0].mxu0
      %v1686 = vadd.f32 0.0, %v1685
      %v1687 = vpop.f32.mrb[0].mxu0
      %v1688 = vpop.f32.mrb[0].mxu0
      %v1689 = vadd.f32 0.0, %v1688
      %v1690 = vpop.f32.mrb[0].mxu0
      %1691 = vmatprep.mubr.bf16.mxu0 0
      %1692 = vmatmul.mubr.bf16.gmra.mrb[0].mxu0 %v1223
      %v1693 = vpop.f32.mrb[0].mxu0
      %v1694 = vadd.f32 0.0, %v1693
      %v1695 = vpop.f32.mrb[0].mxu0
      %v1696 = vpop.f32.mrb[0].mxu0
      %v1697 = vadd.f32 0.0, %v1696
      %v1698 = vpop.f32.mrb[0].mxu0
      %1699 = vmatprep.mubr.bf16.mxu0 0
      %1700 = vmatmul.mubr.bf16.gmra.mrb[0].mxu0 %v1606
      %v1701 = vpop.f32.mrb[0].mxu0
      %v1702 = vadd.f32 0.0, %v1701
      %v1703 = vpop.f32.mrb[0].mxu0
      %v1704 = vpop.f32.mrb[0].mxu0
      %v1705 = vadd.f32 0.0, %v1704
      %v1706 = vpop.f32.mrb[0].mxu0
      %1707 = vdwg.mxu0
      %v1708 = vadd.f32 %v1586, %v1646
      %v1709 = vadd.f32 %v1587, %v1649
      %v1710 = vadd.f32 %v1588, %v1654
      %v1711 = vadd.f32 %v1589, %v1657
      %v1712 = vadd.f32 %v1590, %v1662
      %v1713 = vadd.f32 %v1591, %v1665
      %v1714 = vadd.f32 %v1592, %v1670
      %v1715 = vadd.f32 %v1593, %v1673
      %v1716 = vadd.f32 %v1594, %v1678
      %v1717 = vadd.f32 %v1595, %v1681
      %v1718 = vadd.f32 %v1596, %v1686
      %v1719 = vadd.f32 %v1597, %v1689
      %v1720 = vadd.f32 %v1598, %v1694
      %v1721 = vadd.f32 %v1599, %v1697
      %v1722 = vadd.f32 %v1600, %v1702
      %v1723 = vadd.f32 %v1601, %v1705
      %v1727 = vrot.slane %v659, 1
      %v1728 = vrot.slane %v660, 1
      %v1729 = vsel %vm695, %v1727, %v1728
      %v1730 = vrot.slane %v661, 1
      %v1731 = vsel %vm695, %v1728, %v1730
      %v1734 = vpack.c.bf16 %v1731, %v1729
      %s1735 = scalar_lea.vmem %s3, 28
      %v1736 = vld [vmem:[%s1735] sm:$0xf]
      %v1738 = vsel %vm762, %v1734, 0
      %v1741 = vsel %vm787, %v1736, 0
      %1743 = vmatprep.subr.bf16.mxu0 0
      %1744 = vmatpush1.bf16.msra.mxu0 %v1741
      %1745 = vmatprep.subr.bf16.mxu0 0
      %1746 = vmatpush1.bf16.msra.mxu0 0
      %1747 = vmatprep.subr.bf16.mxu0 0
      %1748 = vmatpush1.bf16.msra.mxu0 0
      %1749 = vmatprep.subr.bf16.mxu0 0
      %1750 = vmatpush1.bf16.msra.mxu0 0
      %1751 = vmatprep.subr.bf16.mxu0 0
      %1752 = vmatpush1.bf16.msra.mxu0 0
      %1753 = vmatprep.subr.bf16.mxu0 0
      %1754 = vmatpush1.bf16.msra.mxu0 0
      %1755 = vmatprep.subr.bf16.mxu0 0
      %1756 = vmatpush1.bf16.msra.mxu0 0
      %1757 = vmatprep.subr.bf16.mxu0 0
      %1758 = vmatpush1.bf16.msra.mxu0 0
      %1759 = vmatprep.subr.bf16.mxu0 0
      %1760 = vmatpush1.bf16.msra.mxu0 0
      %1761 = vmatprep.subr.bf16.mxu0 0
      %1762 = vmatpush1.bf16.msra.mxu0 0
      %1763 = vmatprep.subr.bf16.mxu0 0
      %1764 = vmatpush1.bf16.msra.mxu0 0
      %1765 = vmatprep.subr.bf16.mxu0 0
      %1766 = vmatpush1.bf16.msra.mxu0 0
      %1767 = vmatprep.subr.bf16.mxu0 0
      %1768 = vmatpush1.bf16.msra.mxu0 0
      %1769 = vmatprep.subr.bf16.mxu0 0
      %1770 = vmatpush1.bf16.msra.mxu0 0
      %1771 = vmatprep.subr.bf16.mxu0 0
      %1772 = vmatpush1.bf16.msra.mxu0 0
      %1773 = vmatprep.subr.bf16.mxu0 0
      %1774 = vmatpush1.bf16.msra.mxu0 0
      %1775 = vmatprep.mubr.bf16.mxu0 0
      %1776 = vmatmul.mubr.bf16.gmra.mrb[0].mxu0 %v770
      %v1777 = vpop.f32.mrb[0].mxu0
      %v1778 = vadd.f32 0.0, %v1777
      %v1779 = vpop.f32.mrb[0].mxu0
      %v1780 = vpop.f32.mrb[0].mxu0
      %v1781 = vadd.f32 0.0, %v1780
      %v1782 = vpop.f32.mrb[0].mxu0
      %1783 = vmatprep.mubr.bf16.mxu0 0
      %1784 = vmatmul.mubr.bf16.gmra.mrb[0].mxu0 %v773
      %v1785 = vpop.f32.mrb[0].mxu0
      %v1786 = vadd.f32 0.0, %v1785
      %v1787 = vpop.f32.mrb[0].mxu0
      %v1788 = vpop.f32.mrb[0].mxu0
      %v1789 = vadd.f32 0.0, %v1788
      %v1790 = vpop.f32.mrb[0].mxu0
      %1791 = vmatprep.mubr.bf16.mxu0 0
      %1792 = vmatmul.mubr.bf16.gmra.mrb[0].mxu0 %v776
      %v1793 = vpop.f32.mrb[0].mxu0
      %v1794 = vadd.f32 0.0, %v1793
      %v1795 = vpop.f32.mrb[0].mxu0
      %v1796 = vpop.f32.mrb[0].mxu0
      %v1797 = vadd.f32 0.0, %v1796
      %v1798 = vpop.f32.mrb[0].mxu0
      %1799 = vmatprep.mubr.bf16.mxu0 0
      %1800 = vmatmul.mubr.bf16.gmra.mrb[0].mxu0 %v779
      %v1801 = vpop.f32.mrb[0].mxu0
      %v1802 = vadd.f32 0.0, %v1801
      %v1803 = vpop.f32.mrb[0].mxu0
      %v1804 = vpop.f32.mrb[0].mxu0
      %v1805 = vadd.f32 0.0, %v1804
      %v1806 = vpop.f32.mrb[0].mxu0
      %1807 = vmatprep.mubr.bf16.mxu0 0
      %1808 = vmatmul.mubr.bf16.gmra.mrb[0].mxu0 %v782
      %v1809 = vpop.f32.mrb[0].mxu0
      %v1810 = vadd.f32 0.0, %v1809
      %v1811 = vpop.f32.mrb[0].mxu0
      %v1812 = vpop.f32.mrb[0].mxu0
      %v1813 = vadd.f32 0.0, %v1812
      %v1814 = vpop.f32.mrb[0].mxu0
      %1815 = vmatprep.mubr.bf16.mxu0 0
      %1816 = vmatmul.mubr.bf16.gmra.mrb[0].mxu0 %v785
      %v1817 = vpop.f32.mrb[0].mxu0
      %v1818 = vadd.f32 0.0, %v1817
      %v1819 = vpop.f32.mrb[0].mxu0
      %v1820 = vpop.f32.mrb[0].mxu0
      %v1821 = vadd.f32 0.0, %v1820
      %v1822 = vpop.f32.mrb[0].mxu0
      %1823 = vmatprep.mubr.bf16.mxu0 0
      %1824 = vmatmul.mubr.bf16.gmra.mrb[0].mxu0 %v1355
      %v1825 = vpop.f32.mrb[0].mxu0
      %v1826 = vadd.f32 0.0, %v1825
      %v1827 = vpop.f32.mrb[0].mxu0
      %v1828 = vpop.f32.mrb[0].mxu0
      %v1829 = vadd.f32 0.0, %v1828
      %v1830 = vpop.f32.mrb[0].mxu0
      %1831 = vmatprep.mubr.bf16.mxu0 0
      %1832 = vmatmul.mubr.bf16.gmra.mrb[0].mxu0 %v1738
      %v1833 = vpop.f32.mrb[0].mxu0
      %v1834 = vadd.f32 0.0, %v1833
      %v1835 = vpop.f32.mrb[0].mxu0
      %v1836 = vpop.f32.mrb[0].mxu0
      %v1837 = vadd.f32 0.0, %v1836
      %v1838 = vpop.f32.mrb[0].mxu0
      %1839 = vdwg.mxu0
      %v1840 = vadd.f32 %v1708, %v1778
      %v1841 = vadd.f32 %v1709, %v1781
      %v1842 = vadd.f32 %v1710, %v1786
      %v1843 = vadd.f32 %v1711, %v1789
      %v1844 = vadd.f32 %v1712, %v1794
      %v1845 = vadd.f32 %v1713, %v1797
      %v1846 = vadd.f32 %v1714, %v1802
      %v1847 = vadd.f32 %v1715, %v1805
      %v1848 = vadd.f32 %v1716, %v1810
      %v1849 = vadd.f32 %v1717, %v1813
      %v1850 = vadd.f32 %v1718, %v1818
      %v1851 = vadd.f32 %v1719, %v1821
      %v1852 = vadd.f32 %v1720, %v1826
      %v1853 = vadd.f32 %v1721, %v1829
      %v1854 = vadd.f32 %v1722, %v1834
      %v1855 = vadd.f32 %v1723, %v1837
      %v1856 = vrot.slane %v659, 2
      %v1857 = vrot.slane %v660, 2
      %v1858 = vsel %vm1012, %v1856, %v1857
      %v1859 = vrot.slane %v661, 2
      %v1860 = vsel %vm1012, %v1857, %v1859
      %v1863 = vpack.c.bf16 %v1860, %v1858
      %s1864 = scalar_lea.vmem %s3, 32
      %v1865 = vld [vmem:[%s1864] sm:$0xf]
      %v1867 = vsel %vm762, %v1863, 0
      %v1870 = vsel %vm787, %v1865, 0
      %1872 = vmatprep.subr.bf16.mxu0 0
      %1873 = vmatpush1.bf16.msra.mxu0 %v1870
      %1874 = vmatprep.subr.bf16.mxu0 0
      %1875 = vmatpush1.bf16.msra.mxu0 0
      %1876 = vmatprep.subr.bf16.mxu0 0
      %1877 = vmatpush1.bf16.msra.mxu0 0
      %1878 = vmatprep.subr.bf16.mxu0 0
      %1879 = vmatpush1.bf16.msra.mxu0 0
      %1880 = vmatprep.subr.bf16.mxu0 0
      %1881 = vmatpush1.bf16.msra.mxu0 0
      %1882 = vmatprep.subr.bf16.mxu0 0
      %1883 = vmatpush1.bf16.msra.mxu0 0
      %1884 = vmatprep.subr.bf16.mxu0 0
      %1885 = vmatpush1.bf16.msra.mxu0 0
      %1886 = vmatprep.subr.bf16.mxu0 0
      %1887 = vmatpush1.bf16.msra.mxu0 0
      %1888 = vmatprep.subr.bf16.mxu0 0
      %1889 = vmatpush1.bf16.msra.mxu0 0
      %1890 = vmatprep.subr.bf16.mxu0 0
      %1891 = vmatpush1.bf16.msra.mxu0 0
      %1892 = vmatprep.subr.bf16.mxu0 0
      %1893 = vmatpush1.bf16.msra.mxu0 0
      %1894 = vmatprep.subr.bf16.mxu0 0
      %1895 = vmatpush1.bf16.msra.mxu0 0
      %1896 = vmatprep.subr.bf16.mxu0 0
      %1897 = vmatpush1.bf16.msra.mxu0 0
      %1898 = vmatprep.subr.bf16.mxu0 0
      %1899 = vmatpush1.bf16.msra.mxu0 0
      %1900 = vmatprep.subr.bf16.mxu0 0
      %1901 = vmatpush1.bf16.msra.mxu0 0
      %1902 = vmatprep.subr.bf16.mxu0 0
      %1903 = vmatpush1.bf16.msra.mxu0 0
      %1904 = vmatprep.mubr.bf16.mxu0 0
      %1905 = vmatmul.mubr.bf16.gmra.mrb[0].mxu0 %v1086
      %v1906 = vpop.f32.mrb[0].mxu0
      %v1907 = vadd.f32 0.0, %v1906
      %v1908 = vpop.f32.mrb[0].mxu0
      %v1909 = vpop.f32.mrb[0].mxu0
      %v1910 = vadd.f32 0.0, %v1909
      %v1911 = vpop.f32.mrb[0].mxu0
      %1912 = vmatprep.mubr.bf16.mxu0 0
      %1913 = vmatmul.mubr.bf16.gmra.mrb[0].mxu0 %v1089
      %v1914 = vpop.f32.mrb[0].mxu0
      %v1915 = vadd.f32 0.0, %v1914
      %v1916 = vpop.f32.mrb[0].mxu0
      %v1917 = vpop.f32.mrb[0].mxu0
      %v1918 = vadd.f32 0.0, %v1917
      %v1919 = vpop.f32.mrb[0].mxu0
      %1920 = vmatprep.mubr.bf16.mxu0 0
      %1921 = vmatmul.mubr.bf16.gmra.mrb[0].mxu0 %v1092
      %v1922 = vpop.f32.mrb[0].mxu0
      %v1923 = vadd.f32 0.0, %v1922
      %v1924 = vpop.f32.mrb[0].mxu0
      %v1925 = vpop.f32.mrb[0].mxu0
      %v1926 = vadd.f32 0.0, %v1925
      %v1927 = vpop.f32.mrb[0].mxu0
      %1928 = vmatprep.mubr.bf16.mxu0 0
      %1929 = vmatmul.mubr.bf16.gmra.mrb[0].mxu0 %v1095
      %v1930 = vpop.f32.mrb[0].mxu0
      %v1931 = vadd.f32 0.0, %v1930
      %v1932 = vpop.f32.mrb[0].mxu0
      %v1933 = vpop.f32.mrb[0].mxu0
      %v1934 = vadd.f32 0.0, %v1933
      %v1935 = vpop.f32.mrb[0].mxu0
      %1936 = vmatprep.mubr.bf16.mxu0 0
      %1937 = vmatmul.mubr.bf16.gmra.mrb[0].mxu0 %v1098
      %v1938 = vpop.f32.mrb[0].mxu0
      %v1939 = vadd.f32 0.0, %v1938
      %v1940 = vpop.f32.mrb[0].mxu0
      %v1941 = vpop.f32.mrb[0].mxu0
      %v1942 = vadd.f32 0.0, %v1941
      %v1943 = vpop.f32.mrb[0].mxu0
      %1944 = vmatprep.mubr.bf16.mxu0 0
      %1945 = vmatmul.mubr.bf16.gmra.mrb[0].mxu0 %v1101
      %v1946 = vpop.f32.mrb[0].mxu0
      %v1947 = vadd.f32 0.0, %v1946
      %v1948 = vpop.f32.mrb[0].mxu0
      %v1949 = vpop.f32.mrb[0].mxu0
      %v1950 = vadd.f32 0.0, %v1949
      %v1951 = vpop.f32.mrb[0].mxu0
      %1952 = vmatprep.mubr.bf16.mxu0 0
      %1953 = vmatmul.mubr.bf16.gmra.mrb[0].mxu0 %v1484
      %v1954 = vpop.f32.mrb[0].mxu0
      %v1955 = vadd.f32 0.0, %v1954
      %v1956 = vpop.f32.mrb[0].mxu0
      %v1957 = vpop.f32.mrb[0].mxu0
      %v1958 = vadd.f32 0.0, %v1957
      %v1959 = vpop.f32.mrb[0].mxu0
      %1960 = vmatprep.mubr.bf16.mxu0 0
      %1961 = vmatmul.mubr.bf16.gmra.mrb[0].mxu0 %v1867
      %v1962 = vpop.f32.mrb[0].mxu0
      %v1963 = vadd.f32 0.0, %v1962
      %v1964 = vpop.f32.mrb[0].mxu0
      %v1965 = vpop.f32.mrb[0].mxu0
      %v1966 = vadd.f32 0.0, %v1965
      %v1967 = vpop.f32.mrb[0].mxu0
      %1968 = vdwg.mxu0
      %v1969 = vadd.f32 %v1840, %v1907
      %v1970 = vadd.f32 %v1841, %v1910
      %v1971 = vadd.f32 %v1842, %v1915
      %v1972 = vadd.f32 %v1843, %v1918
      %v1973 = vadd.f32 %v1844, %v1923
      %v1974 = vadd.f32 %v1845, %v1926
      %v1975 = vadd.f32 %v1846, %v1931
      %v1976 = vadd.f32 %v1847, %v1934
      %v1977 = vadd.f32 %v1848, %v1939
      %v1978 = vadd.f32 %v1849, %v1942
      %v1979 = vadd.f32 %v1850, %v1947
      %v1980 = vadd.f32 %v1851, %v1950
      %v1981 = vadd.f32 %v1852, %v1955
      %v1982 = vadd.f32 %v1853, %v1958
      %v1983 = vadd.f32 %v1854, %v1963
      %v1984 = vadd.f32 %v1855, %v1966
      %v1985 = vpack.c.bf16 %v1970, %v1969
      %v1986 = vpack.c.bf16 %v1972, %v1971
      %v1987 = vpack.c.bf16 %v1974, %v1973
      %v1988 = vpack.c.bf16 %v1976, %v1975
      %v1989 = vpack.c.bf16 %v1978, %v1977
      %v1990 = vpack.c.bf16 %v1980, %v1979
      %v1991 = vpack.c.bf16 %v1982, %v1981
      %v1992 = vpack.c.bf16 %v1984, %v1983
      %v2001 = vunpack.c.l.b16 %v1985
      %v2002 = vunpack.c.h.b16 %v1985
      %v2003 = vunpack.c.l.b16 %v1986
      %v2004 = vunpack.c.h.b16 %v1986
      %v2005 = vunpack.c.l.b16 %v1987
      %v2006 = vunpack.c.h.b16 %v1987
      %v2007 = vunpack.c.l.b16 %v1988
      %v2008 = vunpack.c.h.b16 %v1988
      %v2009 = vunpack.c.l.b16 %v1989
      %v2010 = vunpack.c.h.b16 %v1989
      %v2011 = vunpack.c.l.b16 %v1990
      %v2012 = vunpack.c.h.b16 %v1990
      %v2013 = vunpack.c.l.b16 %v1991
      %v2014 = vunpack.c.h.b16 %v1991
      %v2015 = vunpack.c.l.b16 %v1992
      %v2016 = vunpack.c.h.b16 %v1992
      %v2017 = vpack.c.b16 %v2001, %v2001
      %v2018 = vpack.c.b16 %v2002, %v2002
      %v2019 = vpack.c.b16 %v2003, %v2003
      %v2020 = vpack.c.b16 %v2004, %v2004
      %v2021 = vpack.c.b16 %v2005, %v2005
      %v2022 = vpack.c.b16 %v2006, %v2006
      %v2023 = vpack.c.b16 %v2007, %v2007
      %v2024 = vpack.c.b16 %v2008, %v2008
      %v2025 = vpack.c.b16 %v2009, %v2009
      %v2026 = vpack.c.b16 %v2010, %v2010
      %v2027 = vpack.c.b16 %v2011, %v2011
      %v2028 = vpack.c.b16 %v2012, %v2012
      %v2029 = vpack.c.b16 %v2013, %v2013
      %v2030 = vpack.c.b16 %v2014, %v2014
      %v2031 = vpack.c.b16 %v2015, %v2015
      %v2032 = vpack.c.b16 %v2016, %v2016
      %vm2049 = vcmask 60416
      %2050 = vst.msk [vmem:[%s286] sm:$0xf] %vm2049, %v2017
      %2051 = vst.msk [vmem:[%s286 + $0x4] sm:$0xf] %vm2049, %v2018
      %2052 = vst.msk [vmem:[%s286 + $0x8] sm:$0xf] %vm2049, %v2019
      %2053 = vst.msk [vmem:[%s286 + $0xc] sm:$0xf] %vm2049, %v2020
      %2054 = vst.msk [vmem:[%s286 + $0x10] sm:$0xf] %vm2049, %v2021
      %2055 = vst.msk [vmem:[%s286 + $0x14] sm:$0xf] %vm2049, %v2022
      %2056 = vst.msk [vmem:[%s286 + $0x18] sm:$0xf] %vm2049, %v2023
      %2057 = vst.msk [vmem:[%s286 + $0x1c] sm:$0xf] %vm2049, %v2024
      %2058 = vst.msk [vmem:[%s286 + $0x20] sm:$0xf] %vm2049, %v2025
      %2059 = vst.msk [vmem:[%s286 + $0x24] sm:$0xf] %vm2049, %v2026
      %2060 = vst.msk [vmem:[%s286 + $0x28] sm:$0xf] %vm2049, %v2027
      %2061 = vst.msk [vmem:[%s286 + $0x2c] sm:$0xf] %vm2049, %v2028
      %2062 = vst.msk [vmem:[%s286 + $0x30] sm:$0xf] %vm2049, %v2029
      %2063 = vst.msk [vmem:[%s286 + $0x34] sm:$0xf] %vm2049, %v2030
      %2064 = vst.msk [vmem:[%s286 + $0x38] sm:$0xf] %vm2049, %v2031
      %2065 = vst.msk [vmem:[%s286 + $0x3c] sm:$0xf] %vm2049, %v2032
      %p2066 = scmp.eq.s32.totalorder %s23, 0
      // Predicated region
      $region37: #{_lambda_.4} parent=35 // pred_check
        %p2067 = pneg %p2066
      $region38: #{_lambda_.4} parent=35 // pred_check_branch
        %2069 = sbr.rel (%p2067) target = $region40
      $region39: #{_lambda_.4} parent=35 // pred_region
        %vm2070 = vcmask 57344
        %2071 = vst.msk [vmem:[%s290] sm:$0x1] %vm2070, 0.0
        %2072 = vst.msk [vmem:[%s293] sm:$0x1] %vm2070, 0.0
      $region40: #{_lambda_.4} parent=35 // pred_fallthru
        _
      %v2073 = vld [vmem:[%s290] sm:$0x1]
      %v2074 = vsel %vm762, %v1969, 0.0
      %v2075 = vsel %vm762, %v1970, 0.0
      %v2076 = vadd.f32 %v2074, %v2075
      %v2077 = vsel %vm762, %v1971, 0.0
      %v2078 = vadd.f32 %v2076, %v2077
      %v2079 = vsel %vm762, %v1972, 0.0
      %v2080 = vadd.f32 %v2078, %v2079
      %v2081 = vsel %vm762, %v1973, 0.0
      %v2082 = vadd.f32 %v2080, %v2081
      %v2083 = vsel %vm762, %v1974, 0.0
      %v2084 = vadd.f32 %v2082, %v2083
      %v2085 = vsel %vm762, %v1975, 0.0
      %v2086 = vadd.f32 %v2084, %v2085
      %v2087 = vsel %vm762, %v1976, 0.0
      %v2088 = vadd.f32 %v2086, %v2087
      %v2089 = vsel %vm762, %v1977, 0.0
      %v2090 = vadd.f32 %v2088, %v2089
      %v2091 = vsel %vm762, %v1978, 0.0
      %v2092 = vadd.f32 %v2090, %v2091
      %v2093 = vsel %vm762, %v1979, 0.0
      %v2094 = vadd.f32 %v2092, %v2093
      %v2095 = vsel %vm762, %v1980, 0.0
      %v2096 = vadd.f32 %v2094, %v2095
      %v2097 = vsel %vm762, %v1981, 0.0
      %v2098 = vadd.f32 %v2096, %v2097
      %v2099 = vsel %vm762, %v1982, 0.0
      %v2100 = vadd.f32 %v2098, %v2099
      %v2101 = vsel %vm762, %v1983, 0.0
      %v2102 = vadd.f32 %v2100, %v2101
      %v2103 = vsel %vm762, %v1984, 0.0
      %v2104 = vadd.f32 %v2102, %v2103
      %v2105 = vrot.slane %v2104, 4
      %v2106 = vadd.f32 %v2104, %v2105
      %v2107 = vrot.slane %v2106, 2
      %v2108 = vadd.f32 %v2106, %v2107
      %v2109 = vrot.slane %v2108, 1
      %v2110 = vadd.f32 %v2108, %v2109
      %v2111 = vadd.f32 %v2073, %v2110
      %vm2112 = vcmask 57344
      %2113 = vst.msk [vmem:[%s290] sm:$0x1] %vm2112, %v2111
      %v2114 = vld [vmem:[%s293] sm:$0x1]
      %v2115 = vmul.f32 %v1969, %v1969
      %v2116 = vmul.f32 %v1970, %v1970
      %v2117 = vmul.f32 %v1971, %v1971
      %v2118 = vmul.f32 %v1972, %v1972
      %v2119 = vmul.f32 %v1973, %v1973
      %v2120 = vmul.f32 %v1974, %v1974
      %v2121 = vmul.f32 %v1975, %v1975
      %v2122 = vmul.f32 %v1976, %v1976
      %v2123 = vmul.f32 %v1977, %v1977
      %v2124 = vmul.f32 %v1978, %v1978
      %v2125 = vmul.f32 %v1979, %v1979
      %v2126 = vmul.f32 %v1980, %v1980
      %v2127 = vmul.f32 %v1981, %v1981
      %v2128 = vmul.f32 %v1982, %v1982
      %v2129 = vmul.f32 %v1983, %v1983
      %v2130 = vmul.f32 %v1984, %v1984
      %v2131 = vsel %vm762, %v2115, 0.0
      %v2132 = vsel %vm762, %v2116, 0.0
      %v2133 = vadd.f32 %v2131, %v2132
      %v2134 = vsel %vm762, %v2117, 0.0
      %v2135 = vadd.f32 %v2133, %v2134
      %v2136 = vsel %vm762, %v2118, 0.0
      %v2137 = vadd.f32 %v2135, %v2136
      %v2138 = vsel %vm762, %v2119, 0.0
      %v2139 = vadd.f32 %v2137, %v2138
      %v2140 = vsel %vm762, %v2120, 0.0
      %v2141 = vadd.f32 %v2139, %v2140
      %v2142 = vsel %vm762, %v2121, 0.0
      %v2143 = vadd.f32 %v2141, %v2142
      %v2144 = vsel %vm762, %v2122, 0.0
      %v2145 = vadd.f32 %v2143, %v2144
      %v2146 = vsel %vm762, %v2123, 0.0
      %v2147 = vadd.f32 %v2145, %v2146
      %v2148 = vsel %vm762, %v2124, 0.0
      %v2149 = vadd.f32 %v2147, %v2148
      %v2150 = vsel %vm762, %v2125, 0.0
      %v2151 = vadd.f32 %v2149, %v2150
      %v2152 = vsel %vm762, %v2126, 0.0
      %v2153 = vadd.f32 %v2151, %v2152
      %v2154 = vsel %vm762, %v2127, 0.0
      %v2155 = vadd.f32 %v2153, %v2154
      %v2156 = vsel %vm762, %v2128, 0.0
      %v2157 = vadd.f32 %v2155, %v2156
      %v2158 = vsel %vm762, %v2129, 0.0
      %v2159 = vadd.f32 %v2157, %v2158
      %v2160 = vsel %vm762, %v2130, 0.0
      %v2161 = vadd.f32 %v2159, %v2160
      %v2162 = vrot.slane %v2161, 4
      %v2163 = vadd.f32 %v2161, %v2162
      %v2164 = vrot.slane %v2163, 2
      %v2165 = vadd.f32 %v2163, %v2164
      %v2166 = vrot.slane %v2165, 1
      %v2167 = vadd.f32 %v2165, %v2166
      %v2168 = vadd.f32 %v2114, %v2167
      %2169 = vst.msk [vmem:[%s293] sm:$0x1] %vm2112, %v2168
      %s2170 = smul.u32 8, %s23
      %p2171 = scmp.lt.s32.totalorder %s22, 1
      %s2172 = scalar_select %p2171, %s22, 1
      %p2173 = scmp.lt.s32.totalorder %s2170, 15
      %s2174 = scalar_select %p2173, %s2170, 15
      %s2175 = smul.addr %s2174, 2
      %s2176 = smul.addr %s2172, 32
      %s2177 = sadd.s32 %s2175, %s2176
      %s2178 = smul.addr %s2177, 4
      %s2179 = scalar_lea.vmem %s4, %s2178
      %p2180 = scmp.lt.s32.totalorder %s22, 1
      %s2181 = scalar_select %p2180, %s22, 1
      %s2182 = scalar_lea.vmem %s5, %s2181
      %p2183 = scmp.lt.s32.totalorder %s22, 1
      %s2184 = scalar_select %p2183, %s22, 1
      %s2185 = scalar_lea.vmem %s6, %s2184
      // Predicated region
      $region41: #{_lambda_.4} parent=35 // pred_check
        %p2186 = pneg %p139
      $region42: #{_lambda_.4} parent=35 // pred_check_branch
        %2188 = sbr.rel (%p2186) target = $region44
      $region43: #{_lambda_.4} parent=35 // pred_region
        %s2189 = smul.u32 8, %s23
      $region44: #{_lambda_.4} parent=35 // pred_fallthru
        _
      // Predicated region
      $region45: #{_lambda_.4} parent=35 // pred_check
        %p2190 = pneg %p165
      $region46: #{_lambda_.4} parent=35 // pred_check_branch
        %2192 = sbr.rel (%p2190) target = $region48
      $region47: #{_lambda_.4} parent=35 // pred_region
        _
      $region48: #{_lambda_.4} parent=35 // pred_fallthru
        _
      // Predicated region
      $region49: #{_lambda_.4} parent=35 // pred_check
        %p2193 = pneg %p191
      $region50: #{_lambda_.4} parent=35 // pred_check_branch
        %2195 = sbr.rel (%p2193) target = $region52
      $region51: #{_lambda_.4} parent=35 // pred_region
        _
      $region52: #{_lambda_.4} parent=35 // pred_fallthru
        _
    $region36: #{_lambda_.4} parent=5 // pred_fallthru
      _
    %p2196 = scmp.le.s32.totalorder 2, %s13
    // Predicated region
    $region53: #{_lambda_.4} parent=5 // pred_check
      %p2197 = pneg %p2196
    $region54: #{_lambda_.4} parent=5 // pred_check_branch
      %2199 = sbr.rel (%p2197) target = $region56
    $region55: #{_lambda_.4} parent=5 // pred_region
      %s2200 = ssub.s32 %s13, 2
      // Predicated region
      $region57: #{_lambda_.4} parent=55 // pred_check
        %p2201 = pneg %p145
      $region58: #{_lambda_.4} parent=55 // pred_check_branch
        %2203 = sbr.rel (%p2201) target = $region60
      $region59: #{_lambda_.4} parent=55 // pred_region
        %s2204 = smul.u32 8, %s25
        %p2205 = scmp.lt.s32.totalorder %s24, 1
        %s2206 = scalar_select %p2205, %s24, 1
        %p2207 = scmp.lt.s32.totalorder %s2204, 15
        %s2208 = scalar_select %p2207, %s2204, 15
        %s2209 = smul.addr %s2208, 2
        %s2210 = smul.addr %s2206, 32
        %s2211 = sadd.s32 %s2209, %s2210
        %s2212 = smul.addr %s2211, 4
        %s2213 = scalar_lea.vmem %s4, %s2212
      $region60: #{_lambda_.4} parent=55 // pred_fallthru
        _
      // Predicated region
      $region61: #{_lambda_.4} parent=55 // pred_check
        %p2214 = pneg %p171
      $region62: #{_lambda_.4} parent=55 // pred_check_branch
        %2216 = sbr.rel (%p2214) target = $region64
      $region63: #{_lambda_.4} parent=55 // pred_region
        %p2217 = scmp.lt.s32.totalorder %s24, 1
        %s2218 = scalar_select %p2217, %s24, 1
        %s2219 = scalar_lea.vmem %s5, %s2218
      $region64: #{_lambda_.4} parent=55 // pred_fallthru
        _
      // Predicated region
      $region65: #{_lambda_.4} parent=55 // pred_check
        %p2220 = pneg %p197
      $region66: #{_lambda_.4} parent=55 // pred_check_branch
        %2222 = sbr.rel (%p2220) target = $region68
      $region67: #{_lambda_.4} parent=55 // pred_region
        %p2223 = scmp.lt.s32.totalorder %s24, 1
        %s2224 = scalar_select %p2223, %s24, 1
        %s2225 = scalar_lea.vmem %s6, %s2224
      $region68: #{_lambda_.4} parent=55 // pred_fallthru
        _
    $region56: #{_lambda_.4} parent=5 // pred_fallthru
      _
  $region6: #{_lambda_.4} parent=0 // loop_footer
    %s17 = sadd.s32 1, %s13
  $region7: #{_lambda_.4} parent=0 // loop_footer_branch
    %12 = sbr.rel target = $region3
  $region8: #{_lambda_.4} parent=0 // loop_exit
    _

</llo_original>
